<compile_context>
chip_gen: v5e
topology: v5e:2x2
jax: 0.10.0
libtpu: 0.0.40
codegen_flags: <defaults>
</compile_context>

<pallas_src>
import jax
import jax.numpy as jnp
from jax.experimental import pallas as pl
from jax.experimental.pallas import tpu as pltpu

DIM = 32      # channels expected by the heads (module's `dim`)
KSIZE = 5     # conv kernel size
PAD = 2       # "same" padding


def _round_up(x, m):
    return ((x + m - 1) // m) * m


def _make_heads_kernel(out_cols, wp):
    """Both conv heads + softplus for the whole batch in ONE grid step.

    The padded input arrives flattened as (C, cols) with
    col = n*Hp*Wp + hp*Wp + wp, so conv tap (kh, kw) is simply a static
    lane-offset window of length `out_cols` starting at kh*Wp + kw (valid
    output columns never read across a sample boundary).  The 25 taps are
    accumulated as shallow (2, C) x (C, out_cols) MXU dots.
    """
    def kernel(x_ref, w_ref, b_ref, o_ref):
        # x_ref : (C, XCOLS)     padded, flattened features         [VMEM]
        # w_ref : (25, 2, C)     per-tap stacked [alpha, beta] w    [VMEM]
        # b_ref : (2,)           stacked biases                     [SMEM]
        # o_ref : (2, out_cols)  lane-dense [alpha, beta] output    [VMEM]
        acc = jnp.zeros((2, out_cols), jnp.float32)
        for kh in range(KSIZE):
            for kw in range(KSIZE):
                tap = kh * KSIZE + kw
                shift = kh * wp + kw
                xs = x_ref[:, shift:shift + out_cols]        # (C, out_cols)
                wt = w_ref[tap]                               # (2, C)
                acc = acc + jnp.dot(wt, xs,
                                    preferred_element_type=jnp.float32)

        # Bias from SMEM scalars folded with a row select (row 0=alpha, 1=beta).
        row = jax.lax.broadcasted_iota(jnp.int32, acc.shape, 0)
        z = acc + jnp.where(row == 0, b_ref[0], b_ref[1])

        # Softplus matching torch.nn.Softplus (beta=1, threshold=20).
        o_ref[...] = jnp.where(z > 20.0, z,
                               jnp.log1p(jnp.exp(jnp.minimum(z, 20.0))))
    return kernel


@jax.jit
def simplenet_forward(x_nchw, w_alpha, b_alpha, w_beta, b_beta):
    """x_nchw: (N, C, H, W) float32, C == DIM. Returns (alpha, beta) in NCHW."""
    N, C, H, W = x_nchw.shape
    Hp, Wp = H + 2 * PAD, W + 2 * PAD
    out_cols = N * Hp * Wp                              # valid + padded columns
    max_shift = (KSIZE - 1) * Wp + (KSIZE - 1)
    xcols = _round_up(out_cols + max_shift, 128)        # lane-dense input width

    # TODO(synk): UNet backbone (`model_proper`) is not defined in the provided
    # source; with prediction_head = Identity it is treated as a passthrough.
    feat = x_nchw

    # ---- tiny layout plumbing (no 25x im2col expansion in HBM) -------------
    xp = jnp.pad(feat, ((0, 0), (0, 0), (PAD, PAD), (PAD, PAD)))    # (N,C,Hp,Wp)
    x_flat = jnp.transpose(xp, (1, 0, 2, 3)).reshape(C, out_cols)   # (C, N*Hp*Wp)
    x_flat = jnp.pad(x_flat, ((0, 0), (0, xcols - out_cols)))       # (C, xcols)

    # (25, 2, C): per-tap stacked [alpha, beta] weights, tap = kh*KSIZE + kw.
    # PyTorch conv weight is (out=1, in=C, kh, kw).
    w_taps = jnp.transpose(
        jnp.stack([w_alpha[0], w_beta[0]], axis=0), (2, 3, 0, 1)
    ).reshape(KSIZE * KSIZE, 2, C)
    b_vec = jnp.concatenate([b_alpha, b_beta]).astype(jnp.float32)  # (2,)

    out = pl.pallas_call(
        _make_heads_kernel(out_cols, Wp),
        out_shape=jax.ShapeDtypeStruct((2, out_cols), jnp.float32),
        grid=(1,),
        in_specs=[
            pl.BlockSpec((C, xcols), lambda i: (0, 0)),
            pl.BlockSpec((KSIZE * KSIZE, 2, C), lambda i: (0, 0, 0)),
            pl.BlockSpec(memory_space=pltpu.MemorySpace.SMEM),
        ],
        out_specs=pl.BlockSpec((2, out_cols), lambda i: (0, 0)),
    )(x_flat, w_taps, b_vec)

    # Columns index the padded grid (n, hp, wp); keep only the valid outputs.
    out = out.reshape(2, N, Hp, Wp)[:, :, :H, :W]       # (2, N, H, W)
    alpha = out[0][:, None]                             # (N, 1, H, W)
    beta = out[1][:, None]                              # (N, 1, H, W)
    return alpha, beta


def _reference_forward(x, w_a, b_a, w_b, b_b):
    """Pure-JAX reference (lax conv + softplus) for a correctness check."""
    dn = jax.lax.conv_dimension_numbers(x.shape, w_a.shape,
                                        ("NCHW", "OIHW", "NCHW"))

    def head(w, b):
        y = jax.lax.conv_general_dilated(
            x, w, window_strides=(1, 1),
            padding=[(PAD, PAD), (PAD, PAD)], dimension_numbers=dn)
        return jax.nn.softplus(y + b.reshape(1, -1, 1, 1))

    return head(w_a, b_a), head(w_b, b_b)


def _init_params(key, c_in):
    """Deterministic conv params: weight (1, c_in, 5, 5), bias (1,), per head."""
    k1, k2, k3, k4 = jax.random.split(key, 4)
    fan_in = c_in * KSIZE * KSIZE
    bound = 1.0 / (fan_in ** 0.5)   # same scale rule as PyTorch Conv2d default
    w_a = jax.random.uniform(k1, (1, c_in, KSIZE, KSIZE), jnp.float32, -bound, bound)
    b_a = jax.random.uniform(k2, (1,), jnp.float32, -bound, bound)
    w_b = jax.random.uniform(k3, (1, c_in, KSIZE, KSIZE), jnp.float32, -bound, bound)
    b_b = jax.random.uniform(k4, (1,), jnp.float32, -bound, bound)
    return w_a, b_a, w_b, b_b


if __name__ == "__main__":
    key = jax.random.PRNGKey(0)
    kx, kp = jax.random.split(key)

    # Small shapes consistent with the module: batch=2, channels=dim=32, 16x16.
    x = jax.random.normal(kx, (2, DIM, 16, 16), jnp.float32)
    w_a, b_a, w_b, b_b = _init_params(kp, DIM)

    alpha, beta = simplenet_forward(x, w_a, b_a, w_b, b_b)
    jax.block_until_ready((alpha, beta))

    assert alpha.shape == (2, 1, 16, 16) and beta.shape == (2, 1, 16, 16)
    assert bool(jnp.all(alpha >= 0)) and bool(jnp.all(beta >= 0))  # softplus > 0

    ref_a, ref_b = _reference_forward(x, w_a, b_a, w_b, b_b)
    assert bool(jnp.allclose(alpha, ref_a, atol=2e-3, rtol=2e-3))
    assert bool(jnp.allclose(beta, ref_b, atol=2e-3, rtol=2e-3))
    print("KERNEL_OK")
</pallas_src>

<mosaic_0001>
module attributes {stable_mosaic.version = 11 : i64} {
  func.func @kernel(%arg0: i32, %arg1: memref<32x896xf32, #tpu.memory_space<vmem>>, %arg2: memref<25x2x32xf32, #tpu.memory_space<vmem>>, %arg3: memref<2xf32, #tpu.memory_space<smem>>, %arg4: memref<2x800xf32, #tpu.memory_space<vmem>>) attributes {dimension_semantics = [#tpu.dimension_semantics<arbitrary>], iteration_bounds = array<i64: 1>, scalar_prefetch = 0 : i64, scratch_operands = 0 : i64, tpu.core_type = #tpu.core_type<tc>, window_params = [{pipeline_mode = #tpu.pipeline_mode<synchronous>, transform_indices = @transform_0, window_bounds = array<i64: 32, 896>}, {pipeline_mode = #tpu.pipeline_mode<synchronous>, transform_indices = @transform_1, window_bounds = array<i64: 25, 2, 32>}, {transform_indices = @transform_2, window_bounds = array<i64: 2>}, {pipeline_mode = #tpu.pipeline_mode<synchronous>, transform_indices = @transform_3, window_bounds = array<i64: 2, 800>}]} {
    %cst = arith.constant 0.000000e+00 : f32
    %0 = vector.broadcast %cst : f32 to vector<2x800xf32>
    %c0 = arith.constant 0 : index
    %c0_0 = arith.constant 0 : index
    %1 = vector.load %arg1[%c0, %c0_0] : memref<32x896xf32, #tpu.memory_space<vmem>>, vector<32x800xf32>
    %c0_1 = arith.constant 0 : index
    %c0_2 = arith.constant 0 : index
    %c0_3 = arith.constant 0 : index
    %2 = vector.load %arg2[%c0_1, %c0_2, %c0_3] : memref<25x2x32xf32, #tpu.memory_space<vmem>>, vector<1x2x32xf32>
    %3 = vector.shape_cast %2 : vector<1x2x32xf32> to vector<2x32xf32>
    %cst_4 = arith.constant dense<0.000000e+00> : vector<2x800xf32>
    %4 = tpu.matmul %3, %1, %cst_4 {dimension_numbers = #tpu.dot_dimension_numbers<[1], [0], [0], [1], [0, 0, 1, 1], [], []>} : vector<2x32xf32>, vector<32x800xf32>, vector<2x800xf32> -> vector<2x800xf32>
    %5 = arith.addf %0, %4 : vector<2x800xf32>
    %c0_5 = arith.constant 0 : index
    %c1 = arith.constant 1 : index
    %6 = vector.load %arg1[%c0_5, %c1] : memref<32x896xf32, #tpu.memory_space<vmem>>, vector<32x800xf32>
    %c1_6 = arith.constant 1 : index
    %c0_7 = arith.constant 0 : index
    %c0_8 = arith.constant 0 : index
    %7 = vector.load %arg2[%c1_6, %c0_7, %c0_8] : memref<25x2x32xf32, #tpu.memory_space<vmem>>, vector<1x2x32xf32>
    %8 = vector.shape_cast %7 : vector<1x2x32xf32> to vector<2x32xf32>
    %cst_9 = arith.constant dense<0.000000e+00> : vector<2x800xf32>
    %9 = tpu.matmul %8, %6, %cst_9 {dimension_numbers = #tpu.dot_dimension_numbers<[1], [0], [0], [1], [0, 0, 1, 1], [], []>} : vector<2x32xf32>, vector<32x800xf32>, vector<2x800xf32> -> vector<2x800xf32>
    %10 = arith.addf %5, %9 : vector<2x800xf32>
    %c0_10 = arith.constant 0 : index
    %c2 = arith.constant 2 : index
    %11 = vector.load %arg1[%c0_10, %c2] : memref<32x896xf32, #tpu.memory_space<vmem>>, vector<32x800xf32>
    %c2_11 = arith.constant 2 : index
    %c0_12 = arith.constant 0 : index
    %c0_13 = arith.constant 0 : index
    %12 = vector.load %arg2[%c2_11, %c0_12, %c0_13] : memref<25x2x32xf32, #tpu.memory_space<vmem>>, vector<1x2x32xf32>
    %13 = vector.shape_cast %12 : vector<1x2x32xf32> to vector<2x32xf32>
    %cst_14 = arith.constant dense<0.000000e+00> : vector<2x800xf32>
    %14 = tpu.matmul %13, %11, %cst_14 {dimension_numbers = #tpu.dot_dimension_numbers<[1], [0], [0], [1], [0, 0, 1, 1], [], []>} : vector<2x32xf32>, vector<32x800xf32>, vector<2x800xf32> -> vector<2x800xf32>
    %15 = arith.addf %10, %14 : vector<2x800xf32>
    %c0_15 = arith.constant 0 : index
    %c3 = arith.constant 3 : index
    %16 = vector.load %arg1[%c0_15, %c3] : memref<32x896xf32, #tpu.memory_space<vmem>>, vector<32x800xf32>
    %c3_16 = arith.constant 3 : index
    %c0_17 = arith.constant 0 : index
    %c0_18 = arith.constant 0 : index
    %17 = vector.load %arg2[%c3_16, %c0_17, %c0_18] : memref<25x2x32xf32, #tpu.memory_space<vmem>>, vector<1x2x32xf32>
    %18 = vector.shape_cast %17 : vector<1x2x32xf32> to vector<2x32xf32>
    %cst_19 = arith.constant dense<0.000000e+00> : vector<2x800xf32>
    %19 = tpu.matmul %18, %16, %cst_19 {dimension_numbers = #tpu.dot_dimension_numbers<[1], [0], [0], [1], [0, 0, 1, 1], [], []>} : vector<2x32xf32>, vector<32x800xf32>, vector<2x800xf32> -> vector<2x800xf32>
    %20 = arith.addf %15, %19 : vector<2x800xf32>
    %c0_20 = arith.constant 0 : index
    %c4 = arith.constant 4 : index
    %21 = vector.load %arg1[%c0_20, %c4] : memref<32x896xf32, #tpu.memory_space<vmem>>, vector<32x800xf32>
    %c4_21 = arith.constant 4 : index
    %c0_22 = arith.constant 0 : index
    %c0_23 = arith.constant 0 : index
    %22 = vector.load %arg2[%c4_21, %c0_22, %c0_23] : memref<25x2x32xf32, #tpu.memory_space<vmem>>, vector<1x2x32xf32>
    %23 = vector.shape_cast %22 : vector<1x2x32xf32> to vector<2x32xf32>
    %cst_24 = arith.constant dense<0.000000e+00> : vector<2x800xf32>
    %24 = tpu.matmul %23, %21, %cst_24 {dimension_numbers = #tpu.dot_dimension_numbers<[1], [0], [0], [1], [0, 0, 1, 1], [], []>} : vector<2x32xf32>, vector<32x800xf32>, vector<2x800xf32> -> vector<2x800xf32>
    %25 = arith.addf %20, %24 : vector<2x800xf32>
    %c0_25 = arith.constant 0 : index
    %c20 = arith.constant 20 : index
    %26 = vector.load %arg1[%c0_25, %c20] : memref<32x896xf32, #tpu.memory_space<vmem>>, vector<32x800xf32>
    %c5 = arith.constant 5 : index
    %c0_26 = arith.constant 0 : index
    %c0_27 = arith.constant 0 : index
    %27 = vector.load %arg2[%c5, %c0_26, %c0_27] : memref<25x2x32xf32, #tpu.memory_space<vmem>>, vector<1x2x32xf32>
    %28 = vector.shape_cast %27 : vector<1x2x32xf32> to vector<2x32xf32>
    %cst_28 = arith.constant dense<0.000000e+00> : vector<2x800xf32>
    %29 = tpu.matmul %28, %26, %cst_28 {dimension_numbers = #tpu.dot_dimension_numbers<[1], [0], [0], [1], [0, 0, 1, 1], [], []>} : vector<2x32xf32>, vector<32x800xf32>, vector<2x800xf32> -> vector<2x800xf32>
    %30 = arith.addf %25, %29 : vector<2x800xf32>
    %c0_29 = arith.constant 0 : index
    %c21 = arith.constant 21 : index
    %31 = vector.load %arg1[%c0_29, %c21] : memref<32x896xf32, #tpu.memory_space<vmem>>, vector<32x800xf32>
    %c6 = arith.constant 6 : index
    %c0_30 = arith.constant 0 : index
    %c0_31 = arith.constant 0 : index
    %32 = vector.load %arg2[%c6, %c0_30, %c0_31] : memref<25x2x32xf32, #tpu.memory_space<vmem>>, vector<1x2x32xf32>
    %33 = vector.shape_cast %32 : vector<1x2x32xf32> to vector<2x32xf32>
    %cst_32 = arith.constant dense<0.000000e+00> : vector<2x800xf32>
    %34 = tpu.matmul %33, %31, %cst_32 {dimension_numbers = #tpu.dot_dimension_numbers<[1], [0], [0], [1], [0, 0, 1, 1], [], []>} : vector<2x32xf32>, vector<32x800xf32>, vector<2x800xf32> -> vector<2x800xf32>
    %35 = arith.addf %30, %34 : vector<2x800xf32>
    %c0_33 = arith.constant 0 : index
    %c22 = arith.constant 22 : index
    %36 = vector.load %arg1[%c0_33, %c22] : memref<32x896xf32, #tpu.memory_space<vmem>>, vector<32x800xf32>
    %c7 = arith.constant 7 : index
    %c0_34 = arith.constant 0 : index
    %c0_35 = arith.constant 0 : index
    %37 = vector.load %arg2[%c7, %c0_34, %c0_35] : memref<25x2x32xf32, #tpu.memory_space<vmem>>, vector<1x2x32xf32>
    %38 = vector.shape_cast %37 : vector<1x2x32xf32> to vector<2x32xf32>
    %cst_36 = arith.constant dense<0.000000e+00> : vector<2x800xf32>
    %39 = tpu.matmul %38, %36, %cst_36 {dimension_numbers = #tpu.dot_dimension_numbers<[1], [0], [0], [1], [0, 0, 1, 1], [], []>} : vector<2x32xf32>, vector<32x800xf32>, vector<2x800xf32> -> vector<2x800xf32>
    %40 = arith.addf %35, %39 : vector<2x800xf32>
    %c0_37 = arith.constant 0 : index
    %c23 = arith.constant 23 : index
    %41 = vector.load %arg1[%c0_37, %c23] : memref<32x896xf32, #tpu.memory_space<vmem>>, vector<32x800xf32>
    %c8 = arith.constant 8 : index
    %c0_38 = arith.constant 0 : index
    %c0_39 = arith.constant 0 : index
    %42 = vector.load %arg2[%c8, %c0_38, %c0_39] : memref<25x2x32xf32, #tpu.memory_space<vmem>>, vector<1x2x32xf32>
    %43 = vector.shape_cast %42 : vector<1x2x32xf32> to vector<2x32xf32>
    %cst_40 = arith.constant dense<0.000000e+00> : vector<2x800xf32>
    %44 = tpu.matmul %43, %41, %cst_40 {dimension_numbers = #tpu.dot_dimension_numbers<[1], [0], [0], [1], [0, 0, 1, 1], [], []>} : vector<2x32xf32>, vector<32x800xf32>, vector<2x800xf32> -> vector<2x800xf32>
    %45 = arith.addf %40, %44 : vector<2x800xf32>
    %c0_41 = arith.constant 0 : index
    %c24 = arith.constant 24 : index
    %46 = vector.load %arg1[%c0_41, %c24] : memref<32x896xf32, #tpu.memory_space<vmem>>, vector<32x800xf32>
    %c9 = arith.constant 9 : index
    %c0_42 = arith.constant 0 : index
    %c0_43 = arith.constant 0 : index
    %47 = vector.load %arg2[%c9, %c0_42, %c0_43] : memref<25x2x32xf32, #tpu.memory_space<vmem>>, vector<1x2x32xf32>
    %48 = vector.shape_cast %47 : vector<1x2x32xf32> to vector<2x32xf32>
    %cst_44 = arith.constant dense<0.000000e+00> : vector<2x800xf32>
    %49 = tpu.matmul %48, %46, %cst_44 {dimension_numbers = #tpu.dot_dimension_numbers<[1], [0], [0], [1], [0, 0, 1, 1], [], []>} : vector<2x32xf32>, vector<32x800xf32>, vector<2x800xf32> -> vector<2x800xf32>
    %50 = arith.addf %45, %49 : vector<2x800xf32>
    %c0_45 = arith.constant 0 : index
    %c40 = arith.constant 40 : index
    %51 = vector.load %arg1[%c0_45, %c40] : memref<32x896xf32, #tpu.memory_space<vmem>>, vector<32x800xf32>
    %c10 = arith.constant 10 : index
    %c0_46 = arith.constant 0 : index
    %c0_47 = arith.constant 0 : index
    %52 = vector.load %arg2[%c10, %c0_46, %c0_47] : memref<25x2x32xf32, #tpu.memory_space<vmem>>, vector<1x2x32xf32>
    %53 = vector.shape_cast %52 : vector<1x2x32xf32> to vector<2x32xf32>
    %cst_48 = arith.constant dense<0.000000e+00> : vector<2x800xf32>
    %54 = tpu.matmul %53, %51, %cst_48 {dimension_numbers = #tpu.dot_dimension_numbers<[1], [0], [0], [1], [0, 0, 1, 1], [], []>} : vector<2x32xf32>, vector<32x800xf32>, vector<2x800xf32> -> vector<2x800xf32>
    %55 = arith.addf %50, %54 : vector<2x800xf32>
    %c0_49 = arith.constant 0 : index
    %c41 = arith.constant 41 : index
    %56 = vector.load %arg1[%c0_49, %c41] : memref<32x896xf32, #tpu.memory_space<vmem>>, vector<32x800xf32>
    %c11 = arith.constant 11 : index
    %c0_50 = arith.constant 0 : index
    %c0_51 = arith.constant 0 : index
    %57 = vector.load %arg2[%c11, %c0_50, %c0_51] : memref<25x2x32xf32, #tpu.memory_space<vmem>>, vector<1x2x32xf32>
    %58 = vector.shape_cast %57 : vector<1x2x32xf32> to vector<2x32xf32>
    %cst_52 = arith.constant dense<0.000000e+00> : vector<2x800xf32>
    %59 = tpu.matmul %58, %56, %cst_52 {dimension_numbers = #tpu.dot_dimension_numbers<[1], [0], [0], [1], [0, 0, 1, 1], [], []>} : vector<2x32xf32>, vector<32x800xf32>, vector<2x800xf32> -> vector<2x800xf32>
    %60 = arith.addf %55, %59 : vector<2x800xf32>
    %c0_53 = arith.constant 0 : index
    %c42 = arith.constant 42 : index
    %61 = vector.load %arg1[%c0_53, %c42] : memref<32x896xf32, #tpu.memory_space<vmem>>, vector<32x800xf32>
    %c12 = arith.constant 12 : index
    %c0_54 = arith.constant 0 : index
    %c0_55 = arith.constant 0 : index
    %62 = vector.load %arg2[%c12, %c0_54, %c0_55] : memref<25x2x32xf32, #tpu.memory_space<vmem>>, vector<1x2x32xf32>
    %63 = vector.shape_cast %62 : vector<1x2x32xf32> to vector<2x32xf32>
    %cst_56 = arith.constant dense<0.000000e+00> : vector<2x800xf32>
    %64 = tpu.matmul %63, %61, %cst_56 {dimension_numbers = #tpu.dot_dimension_numbers<[1], [0], [0], [1], [0, 0, 1, 1], [], []>} : vector<2x32xf32>, vector<32x800xf32>, vector<2x800xf32> -> vector<2x800xf32>
    %65 = arith.addf %60, %64 : vector<2x800xf32>
    %c0_57 = arith.constant 0 : index
    %c43 = arith.constant 43 : index
    %66 = vector.load %arg1[%c0_57, %c43] : memref<32x896xf32, #tpu.memory_space<vmem>>, vector<32x800xf32>
    %c13 = arith.constant 13 : index
    %c0_58 = arith.constant 0 : index
    %c0_59 = arith.constant 0 : index
    %67 = vector.load %arg2[%c13, %c0_58, %c0_59] : memref<25x2x32xf32, #tpu.memory_space<vmem>>, vector<1x2x32xf32>
    %68 = vector.shape_cast %67 : vector<1x2x32xf32> to vector<2x32xf32>
    %cst_60 = arith.constant dense<0.000000e+00> : vector<2x800xf32>
    %69 = tpu.matmul %68, %66, %cst_60 {dimension_numbers = #tpu.dot_dimension_numbers<[1], [0], [0], [1], [0, 0, 1, 1], [], []>} : vector<2x32xf32>, vector<32x800xf32>, vector<2x800xf32> -> vector<2x800xf32>
    %70 = arith.addf %65, %69 : vector<2x800xf32>
    %c0_61 = arith.constant 0 : index
    %c44 = arith.constant 44 : index
    %71 = vector.load %arg1[%c0_61, %c44] : memref<32x896xf32, #tpu.memory_space<vmem>>, vector<32x800xf32>
    %c14 = arith.constant 14 : index
    %c0_62 = arith.constant 0 : index
    %c0_63 = arith.constant 0 : index
    %72 = vector.load %arg2[%c14, %c0_62, %c0_63] : memref<25x2x32xf32, #tpu.memory_space<vmem>>, vector<1x2x32xf32>
    %73 = vector.shape_cast %72 : vector<1x2x32xf32> to vector<2x32xf32>
    %cst_64 = arith.constant dense<0.000000e+00> : vector<2x800xf32>
    %74 = tpu.matmul %73, %71, %cst_64 {dimension_numbers = #tpu.dot_dimension_numbers<[1], [0], [0], [1], [0, 0, 1, 1], [], []>} : vector<2x32xf32>, vector<32x800xf32>, vector<2x800xf32> -> vector<2x800xf32>
    %75 = arith.addf %70, %74 : vector<2x800xf32>
    %c0_65 = arith.constant 0 : index
    %c60 = arith.constant 60 : index
    %76 = vector.load %arg1[%c0_65, %c60] : memref<32x896xf32, #tpu.memory_space<vmem>>, vector<32x800xf32>
    %c15 = arith.constant 15 : index
    %c0_66 = arith.constant 0 : index
    %c0_67 = arith.constant 0 : index
    %77 = vector.load %arg2[%c15, %c0_66, %c0_67] : memref<25x2x32xf32, #tpu.memory_space<vmem>>, vector<1x2x32xf32>
    %78 = vector.shape_cast %77 : vector<1x2x32xf32> to vector<2x32xf32>
    %cst_68 = arith.constant dense<0.000000e+00> : vector<2x800xf32>
    %79 = tpu.matmul %78, %76, %cst_68 {dimension_numbers = #tpu.dot_dimension_numbers<[1], [0], [0], [1], [0, 0, 1, 1], [], []>} : vector<2x32xf32>, vector<32x800xf32>, vector<2x800xf32> -> vector<2x800xf32>
    %80 = arith.addf %75, %79 : vector<2x800xf32>
    %c0_69 = arith.constant 0 : index
    %c61 = arith.constant 61 : index
    %81 = vector.load %arg1[%c0_69, %c61] : memref<32x896xf32, #tpu.memory_space<vmem>>, vector<32x800xf32>
    %c16 = arith.constant 16 : index
    %c0_70 = arith.constant 0 : index
    %c0_71 = arith.constant 0 : index
    %82 = vector.load %arg2[%c16, %c0_70, %c0_71] : memref<25x2x32xf32, #tpu.memory_space<vmem>>, vector<1x2x32xf32>
    %83 = vector.shape_cast %82 : vector<1x2x32xf32> to vector<2x32xf32>
    %cst_72 = arith.constant dense<0.000000e+00> : vector<2x800xf32>
    %84 = tpu.matmul %83, %81, %cst_72 {dimension_numbers = #tpu.dot_dimension_numbers<[1], [0], [0], [1], [0, 0, 1, 1], [], []>} : vector<2x32xf32>, vector<32x800xf32>, vector<2x800xf32> -> vector<2x800xf32>
    %85 = arith.addf %80, %84 : vector<2x800xf32>
    %c0_73 = arith.constant 0 : index
    %c62 = arith.constant 62 : index
    %86 = vector.load %arg1[%c0_73, %c62] : memref<32x896xf32, #tpu.memory_space<vmem>>, vector<32x800xf32>
    %c17 = arith.constant 17 : index
    %c0_74 = arith.constant 0 : index
    %c0_75 = arith.constant 0 : index
    %87 = vector.load %arg2[%c17, %c0_74, %c0_75] : memref<25x2x32xf32, #tpu.memory_space<vmem>>, vector<1x2x32xf32>
    %88 = vector.shape_cast %87 : vector<1x2x32xf32> to vector<2x32xf32>
    %cst_76 = arith.constant dense<0.000000e+00> : vector<2x800xf32>
    %89 = tpu.matmul %88, %86, %cst_76 {dimension_numbers = #tpu.dot_dimension_numbers<[1], [0], [0], [1], [0, 0, 1, 1], [], []>} : vector<2x32xf32>, vector<32x800xf32>, vector<2x800xf32> -> vector<2x800xf32>
    %90 = arith.addf %85, %89 : vector<2x800xf32>
    %c0_77 = arith.constant 0 : index
    %c63 = arith.constant 63 : index
    %91 = vector.load %arg1[%c0_77, %c63] : memref<32x896xf32, #tpu.memory_space<vmem>>, vector<32x800xf32>
    %c18 = arith.constant 18 : index
    %c0_78 = arith.constant 0 : index
    %c0_79 = arith.constant 0 : index
    %92 = vector.load %arg2[%c18, %c0_78, %c0_79] : memref<25x2x32xf32, #tpu.memory_space<vmem>>, vector<1x2x32xf32>
    %93 = vector.shape_cast %92 : vector<1x2x32xf32> to vector<2x32xf32>
    %cst_80 = arith.constant dense<0.000000e+00> : vector<2x800xf32>
    %94 = tpu.matmul %93, %91, %cst_80 {dimension_numbers = #tpu.dot_dimension_numbers<[1], [0], [0], [1], [0, 0, 1, 1], [], []>} : vector<2x32xf32>, vector<32x800xf32>, vector<2x800xf32> -> vector<2x800xf32>
    %95 = arith.addf %90, %94 : vector<2x800xf32>
    %c0_81 = arith.constant 0 : index
    %c64 = arith.constant 64 : index
    %96 = vector.load %arg1[%c0_81, %c64] : memref<32x896xf32, #tpu.memory_space<vmem>>, vector<32x800xf32>
    %c19 = arith.constant 19 : index
    %c0_82 = arith.constant 0 : index
    %c0_83 = arith.constant 0 : index
    %97 = vector.load %arg2[%c19, %c0_82, %c0_83] : memref<25x2x32xf32, #tpu.memory_space<vmem>>, vector<1x2x32xf32>
    %98 = vector.shape_cast %97 : vector<1x2x32xf32> to vector<2x32xf32>
    %cst_84 = arith.constant dense<0.000000e+00> : vector<2x800xf32>
    %99 = tpu.matmul %98, %96, %cst_84 {dimension_numbers = #tpu.dot_dimension_numbers<[1], [0], [0], [1], [0, 0, 1, 1], [], []>} : vector<2x32xf32>, vector<32x800xf32>, vector<2x800xf32> -> vector<2x800xf32>
    %100 = arith.addf %95, %99 : vector<2x800xf32>
    %c0_85 = arith.constant 0 : index
    %c80 = arith.constant 80 : index
    %101 = vector.load %arg1[%c0_85, %c80] : memref<32x896xf32, #tpu.memory_space<vmem>>, vector<32x800xf32>
    %c20_86 = arith.constant 20 : index
    %c0_87 = arith.constant 0 : index
    %c0_88 = arith.constant 0 : index
    %102 = vector.load %arg2[%c20_86, %c0_87, %c0_88] : memref<25x2x32xf32, #tpu.memory_space<vmem>>, vector<1x2x32xf32>
    %103 = vector.shape_cast %102 : vector<1x2x32xf32> to vector<2x32xf32>
    %cst_89 = arith.constant dense<0.000000e+00> : vector<2x800xf32>
    %104 = tpu.matmul %103, %101, %cst_89 {dimension_numbers = #tpu.dot_dimension_numbers<[1], [0], [0], [1], [0, 0, 1, 1], [], []>} : vector<2x32xf32>, vector<32x800xf32>, vector<2x800xf32> -> vector<2x800xf32>
    %105 = arith.addf %100, %104 : vector<2x800xf32>
    %c0_90 = arith.constant 0 : index
    %c81 = arith.constant 81 : index
    %106 = vector.load %arg1[%c0_90, %c81] : memref<32x896xf32, #tpu.memory_space<vmem>>, vector<32x800xf32>
    %c21_91 = arith.constant 21 : index
    %c0_92 = arith.constant 0 : index
    %c0_93 = arith.constant 0 : index
    %107 = vector.load %arg2[%c21_91, %c0_92, %c0_93] : memref<25x2x32xf32, #tpu.memory_space<vmem>>, vector<1x2x32xf32>
    %108 = vector.shape_cast %107 : vector<1x2x32xf32> to vector<2x32xf32>
    %cst_94 = arith.constant dense<0.000000e+00> : vector<2x800xf32>
    %109 = tpu.matmul %108, %106, %cst_94 {dimension_numbers = #tpu.dot_dimension_numbers<[1], [0], [0], [1], [0, 0, 1, 1], [], []>} : vector<2x32xf32>, vector<32x800xf32>, vector<2x800xf32> -> vector<2x800xf32>
    %110 = arith.addf %105, %109 : vector<2x800xf32>
    %c0_95 = arith.constant 0 : index
    %c82 = arith.constant 82 : index
    %111 = vector.load %arg1[%c0_95, %c82] : memref<32x896xf32, #tpu.memory_space<vmem>>, vector<32x800xf32>
    %c22_96 = arith.constant 22 : index
    %c0_97 = arith.constant 0 : index
    %c0_98 = arith.constant 0 : index
    %112 = vector.load %arg2[%c22_96, %c0_97, %c0_98] : memref<25x2x32xf32, #tpu.memory_space<vmem>>, vector<1x2x32xf32>
    %113 = vector.shape_cast %112 : vector<1x2x32xf32> to vector<2x32xf32>
    %cst_99 = arith.constant dense<0.000000e+00> : vector<2x800xf32>
    %114 = tpu.matmul %113, %111, %cst_99 {dimension_numbers = #tpu.dot_dimension_numbers<[1], [0], [0], [1], [0, 0, 1, 1], [], []>} : vector<2x32xf32>, vector<32x800xf32>, vector<2x800xf32> -> vector<2x800xf32>
    %115 = arith.addf %110, %114 : vector<2x800xf32>
    %c0_100 = arith.constant 0 : index
    %c83 = arith.constant 83 : index
    %116 = vector.load %arg1[%c0_100, %c83] : memref<32x896xf32, #tpu.memory_space<vmem>>, vector<32x800xf32>
    %c23_101 = arith.constant 23 : index
    %c0_102 = arith.constant 0 : index
    %c0_103 = arith.constant 0 : index
    %117 = vector.load %arg2[%c23_101, %c0_102, %c0_103] : memref<25x2x32xf32, #tpu.memory_space<vmem>>, vector<1x2x32xf32>
    %118 = vector.shape_cast %117 : vector<1x2x32xf32> to vector<2x32xf32>
    %cst_104 = arith.constant dense<0.000000e+00> : vector<2x800xf32>
    %119 = tpu.matmul %118, %116, %cst_104 {dimension_numbers = #tpu.dot_dimension_numbers<[1], [0], [0], [1], [0, 0, 1, 1], [], []>} : vector<2x32xf32>, vector<32x800xf32>, vector<2x800xf32> -> vector<2x800xf32>
    %120 = arith.addf %115, %119 : vector<2x800xf32>
    %c0_105 = arith.constant 0 : index
    %c84 = arith.constant 84 : index
    %121 = vector.load %arg1[%c0_105, %c84] : memref<32x896xf32, #tpu.memory_space<vmem>>, vector<32x800xf32>
    %c24_106 = arith.constant 24 : index
    %c0_107 = arith.constant 0 : index
    %c0_108 = arith.constant 0 : index
    %122 = vector.load %arg2[%c24_106, %c0_107, %c0_108] : memref<25x2x32xf32, #tpu.memory_space<vmem>>, vector<1x2x32xf32>
    %123 = vector.shape_cast %122 : vector<1x2x32xf32> to vector<2x32xf32>
    %cst_109 = arith.constant dense<0.000000e+00> : vector<2x800xf32>
    %124 = tpu.matmul %123, %121, %cst_109 {dimension_numbers = #tpu.dot_dimension_numbers<[1], [0], [0], [1], [0, 0, 1, 1], [], []>} : vector<2x32xf32>, vector<32x800xf32>, vector<2x800xf32> -> vector<2x800xf32>
    %125 = arith.addf %120, %124 : vector<2x800xf32>
    %126 = tpu.iota {dimensions = array<i32: 0>} : vector<2x800xi32>
    %c0_i32 = arith.constant 0 : i32
    %127 = vector.broadcast %c0_i32 : i32 to vector<2x800xi32>
    %128 = arith.cmpi eq, %126, %127 : vector<2x800xi32>
    %c0_110 = arith.constant 0 : index
    %129 = memref.load %arg3[%c0_110] : memref<2xf32, #tpu.memory_space<smem>>
    %c1_111 = arith.constant 1 : index
    %130 = memref.load %arg3[%c1_111] : memref<2xf32, #tpu.memory_space<smem>>
    %131 = vector.broadcast %129 : f32 to vector<2x800xf32>
    %132 = vector.broadcast %130 : f32 to vector<2x800xf32>
    %133 = arith.select %128, %131, %132 : vector<2x800xi1>, vector<2x800xf32>
    %134 = arith.addf %125, %133 : vector<2x800xf32>
    %cst_112 = arith.constant 2.000000e+01 : f32
    %135 = vector.broadcast %cst_112 : f32 to vector<2x800xf32>
    %136 = arith.cmpf ogt, %134, %135 : vector<2x800xf32>
    %cst_113 = arith.constant 2.000000e+01 : f32
    %137 = vector.broadcast %cst_113 : f32 to vector<2x800xf32>
    %138 = arith.minimumf %134, %137 : vector<2x800xf32>
    %139 = math.exp %138 : vector<2x800xf32>
    %140 = math.log1p %139 : vector<2x800xf32>
    %141 = arith.select %136, %134, %140 : vector<2x800xi1>, vector<2x800xf32>
    %c0_114 = arith.constant 0 : index
    %c0_115 = arith.constant 0 : index
    %142 = vector.load %arg4[%c0_114, %c0_115] : memref<2x800xf32, #tpu.memory_space<vmem>>, vector<2x800xf32>
    tpu.vector_store %arg4[%c0_114, %c0_115], %141 {strides = array<i32>} : memref<2x800xf32, #tpu.memory_space<vmem>>, vector<2x800xf32>,
    return
  }
  func.func @transform_0(%arg0: i32) -> (i32, i32) {
    %c0_i32 = arith.constant 0 : i32
    %c0_i32_0 = arith.constant 0 : i32
    %c0_i32_1 = arith.constant 0 : i32
    return %c0_i32, %c0_i32_0 : i32, i32
  }
  func.func @transform_1(%arg0: i32) -> (i32, i32, i32) {
    %c0_i32 = arith.constant 0 : i32
    %c0_i32_0 = arith.constant 0 : i32
    %c0_i32_1 = arith.constant 0 : i32
    %c0_i32_2 = arith.constant 0 : i32
    return %c0_i32, %c0_i32_0, %c0_i32_1 : i32, i32, i32
  }
  func.func @transform_2(%arg0: i32) -> i32 {
    %c0_i32 = arith.constant 0 : i32
    %c0_i32_0 = arith.constant 0 : i32
    return %c0_i32 : i32
  }
  func.func @transform_3(%arg0: i32) -> (i32, i32) {
    %c0_i32 = arith.constant 0 : i32
    %c0_i32_0 = arith.constant 0 : i32
    %c0_i32_1 = arith.constant 0 : i32
    return %c0_i32, %c0_i32_0 : i32, i32
  }
}

</mosaic_0001>

<llo_original>
// kernel: simplenet_forward.1
$region0: #{simplenet_forward.1}
  #allocation0 [shape = 'u32[]', space=smem, size = 0x4, offset = 0x4, fixed_abs, tag = 'smem constant byte address 0x4 - core index']
  #allocation1 [shape = 'u32[72,128]{1,0:T(1,128)}', space=vmem, size = 0x9000, scoped, tag = 'internal scratch']
  %s0 = inlined_call_operand.vmem [shape: f32[32,896], index: 0, kind: input, shape index: {}]
  %s1 = inlined_call_operand.vmem [shape: f32[25,2,32], index: 1, kind: input, shape index: {}]
  %s2 = inlined_call_operand.vmem [shape: f32[2], index: 2, kind: input, shape index: {}]
  %s3 = inlined_call_operand.vmem [shape: f32[2,800], index: 3, kind: output, shape index: {}]
  %s4 = sld [smem:[#allocation0]]
  $region26: #{simplenet_forward.1} parent=0
    _
  %s6 = ssub.s32 1, %s4
  %s7 = scalar_select 0, %s6, %s4
  $region1: #{simplenet_forward.1} parent=0
    #allocation2 [shape = 'u8[512]{0}', space=smem, size = 0x200, scoped, tag = 'input window, operand 2, single buffered']
    #allocation3 [shape = 's32[1]{0}', space=sflag, size = 0x4, scoped, tag = 'scoped memory for simplenet_forward.1']
    %8 = vsyncpa [#allocation3], 0
    // Predicated region
    $region2: #{simplenet_forward.1} parent=1 // pred_check
      _
    $region3: #{simplenet_forward.1} parent=1 // pred_check_branch
      %10 = sbr.rel (0) target = $region5
    $region4: #{simplenet_forward.1} parent=1 // pred_region
      _
    $region5: #{simplenet_forward.1} parent=1 // pred_fallthru
      _
    // Predicated region
    $region6: #{simplenet_forward.1} parent=1 // pred_check
      _
    $region7: #{simplenet_forward.1} parent=1 // pred_check_branch
      %12 = sbr.rel (0) target = $region9
    $region8: #{simplenet_forward.1} parent=1 // pred_region
      _
    $region9: #{simplenet_forward.1} parent=1 // pred_fallthru
      _
    // Predicated region
    $region10: #{simplenet_forward.1} parent=1 // pred_check
      _
    $region11: #{simplenet_forward.1} parent=1 // pred_check_branch
      %14 = sbr.rel (0) target = $region13
    $region12: #{simplenet_forward.1} parent=1 // pred_region
      %16 = vsyncadd [#allocation3], 0
      %s18 = sshll.u32 %s2, 4
      %s19 = int_to_ptr.vmem [resolvable:$true] %s18
      %21 = dma.vmem_to_smem %s19, 16, [#allocation2], [#allocation3]
    $region13: #{simplenet_forward.1} parent=1 // pred_fallthru
      _
    // Predicated region
    $region14: #{simplenet_forward.1} parent=1 // pred_check
      _
    $region15: #{simplenet_forward.1} parent=1 // pred_check_branch
      %23 = sbr.rel (0) target = $region17
    $region16: #{simplenet_forward.1} parent=1 // pred_region
      %25 = dma.done [#allocation3], 16
    $region17: #{simplenet_forward.1} parent=1 // pred_fallthru
      _
    %26 = sfence
    %v27 = vld [vmem:[%s0] sm:$0xff]
    %v28 = vld [vmem:[%s0 + $0x8] sm:$0xff]
    %v29 = vld [vmem:[%s0 + $0x10] sm:$0xff]
    %v30 = vld [vmem:[%s0 + $0x18] sm:$0xff]
    %v31 = vld [vmem:[%s0 + $0x20] sm:$0xff]
    %v32 = vld [vmem:[%s0 + $0x28] sm:$0xff]
    %v33 = vld [vmem:[%s0 + $0x30] sm:$0xff]
    %v34 = vld [vmem:[%s0 + $0x38] sm:$0xff]
    %v35 = vld [vmem:[%s0 + $0x40] sm:$0xff]
    %v36 = vld [vmem:[%s0 + $0x48] sm:$0xff]
    %v37 = vld [vmem:[%s0 + $0x50] sm:$0xff]
    %v38 = vld [vmem:[%s0 + $0x58] sm:$0xff]
    %v39 = vld [vmem:[%s0 + $0x60] sm:$0xff]
    %v40 = vld [vmem:[%s0 + $0x68] sm:$0xff]
    %v41 = vld [vmem:[%s0 + $0x70] sm:$0xff]
    %v42 = vld [vmem:[%s0 + $0x78] sm:$0xff]
    %v43 = vld [vmem:[%s0 + $0x80] sm:$0xff]
    %v44 = vld [vmem:[%s0 + $0x88] sm:$0xff]
    %v45 = vld [vmem:[%s0 + $0x90] sm:$0xff]
    %v46 = vld [vmem:[%s0 + $0x98] sm:$0xff]
    %v47 = vld [vmem:[%s0 + $0xa0] sm:$0xff]
    %v48 = vld [vmem:[%s0 + $0xa8] sm:$0xff]
    %v49 = vld [vmem:[%s0 + $0xb0] sm:$0xff]
    %v50 = vld [vmem:[%s0 + $0xb8] sm:$0xff]
    %v51 = vld [vmem:[%s0 + $0xc0] sm:$0xff]
    %v52 = vld [vmem:[%s0 + $0xc8] sm:$0xff]
    %v53 = vld [vmem:[%s0 + $0xd0] sm:$0xff]
    %v54 = vld [vmem:[%s0 + $0xd8] sm:$0xff]
    %v55 = vld [vmem:[%s1] sm:$0x3]
    %s56 = scalar_lea.vmem %s1, 2
    %v57 = vld [vmem:[%s56] sm:$0x3]
    %86 = vrot.lane.b32.xlu0 %v27, 127
    %v87 = vpop.permute.xlu0 %86
    %88 = vrot.lane.b32.xlu0 %v28, 127
    %v89 = vpop.permute.xlu0 %88
    %90 = vrot.lane.b32.xlu0 %v29, 127
    %v91 = vpop.permute.xlu0 %90
    %92 = vrot.lane.b32.xlu0 %v30, 127
    %v93 = vpop.permute.xlu0 %92
    %94 = vrot.lane.b32.xlu0 %v31, 127
    %v95 = vpop.permute.xlu0 %94
    %96 = vrot.lane.b32.xlu0 %v32, 127
    %v97 = vpop.permute.xlu0 %96
    %98 = vrot.lane.b32.xlu0 %v33, 127
    %v99 = vpop.permute.xlu0 %98
    %100 = vrot.lane.b32.xlu0 %v34, 127
    %v101 = vpop.permute.xlu0 %100
    %102 = vrot.lane.b32.xlu0 %v35, 127
    %v103 = vpop.permute.xlu0 %102
    %104 = vrot.lane.b32.xlu0 %v36, 127
    %v105 = vpop.permute.xlu0 %104
    %106 = vrot.lane.b32.xlu0 %v37, 127
    %v107 = vpop.permute.xlu0 %106
    %108 = vrot.lane.b32.xlu0 %v38, 127
    %v109 = vpop.permute.xlu0 %108
    %110 = vrot.lane.b32.xlu0 %v39, 127
    %v111 = vpop.permute.xlu0 %110
    %112 = vrot.lane.b32.xlu0 %v40, 127
    %v113 = vpop.permute.xlu0 %112
    %114 = vrot.lane.b32.xlu0 %v41, 127
    %v115 = vpop.permute.xlu0 %114
    %116 = vrot.lane.b32.xlu0 %v42, 127
    %v117 = vpop.permute.xlu0 %116
    %118 = vrot.lane.b32.xlu0 %v43, 127
    %v119 = vpop.permute.xlu0 %118
    %120 = vrot.lane.b32.xlu0 %v44, 127
    %v121 = vpop.permute.xlu0 %120
    %122 = vrot.lane.b32.xlu0 %v45, 127
    %v123 = vpop.permute.xlu0 %122
    %124 = vrot.lane.b32.xlu0 %v46, 127
    %v125 = vpop.permute.xlu0 %124
    %126 = vrot.lane.b32.xlu0 %v47, 127
    %v127 = vpop.permute.xlu0 %126
    %128 = vrot.lane.b32.xlu0 %v48, 127
    %v129 = vpop.permute.xlu0 %128
    %130 = vrot.lane.b32.xlu0 %v49, 127
    %v131 = vpop.permute.xlu0 %130
    %132 = vrot.lane.b32.xlu0 %v50, 127
    %v133 = vpop.permute.xlu0 %132
    %134 = vrot.lane.b32.xlu0 %v51, 127
    %v135 = vpop.permute.xlu0 %134
    %136 = vrot.lane.b32.xlu0 %v52, 127
    %v137 = vpop.permute.xlu0 %136
    %138 = vrot.lane.b32.xlu0 %v53, 127
    %v139 = vpop.permute.xlu0 %138
    %140 = vrot.lane.b32.xlu0 %v54, 127
    %v141 = vpop.permute.xlu0 %140
    %vm142 = vcmask 1039360
    %v143 = vsel %vm142, %v87, %v89
    %v144 = vsel %vm142, %v89, %v91
    %v145 = vsel %vm142, %v91, %v93
    %v146 = vsel %vm142, %v93, %v95
    %v147 = vsel %vm142, %v95, %v97
    %v148 = vsel %vm142, %v97, %v99
    %v149 = vsel %vm142, %v101, %v103
    %v150 = vsel %vm142, %v103, %v105
    %v151 = vsel %vm142, %v105, %v107
    %v152 = vsel %vm142, %v107, %v109
    %v153 = vsel %vm142, %v109, %v111
    %v154 = vsel %vm142, %v111, %v113
    %v155 = vsel %vm142, %v115, %v117
    %v156 = vsel %vm142, %v117, %v119
    %v157 = vsel %vm142, %v119, %v121
    %v158 = vsel %vm142, %v121, %v123
    %v159 = vsel %vm142, %v123, %v125
    %v160 = vsel %vm142, %v125, %v127
    %v161 = vsel %vm142, %v129, %v131
    %v162 = vsel %vm142, %v131, %v133
    %v163 = vsel %vm142, %v133, %v135
    %v164 = vsel %vm142, %v135, %v137
    %v165 = vsel %vm142, %v137, %v139
    %v166 = vsel %vm142, %v139, %v141
    %vm195 = vcmask 261120
    %v197 = vsel %vm195, %v57, 0
    %199 = vmatpush.msra.mxu0 0.0
    %200 = vmatpush.msra.mxu0 0.0
    %201 = vmatpush.msra.mxu0 0.0
    %202 = vmatpush.msra.mxu0 0.0
    %203 = vmatpush.msra.mxu0 0.0
    %204 = vmatpush.msra.mxu0 0.0
    %205 = vmatpush.msra.mxu0 0.0
    %206 = vmatpush.msra.mxu0 0.0
    %207 = vmatpush.msra.mxu0 0.0
    %208 = vmatpush.msra.mxu0 0.0
    %209 = vmatpush.msra.mxu0 0.0
    %210 = vmatpush.msra.mxu0 0.0
    %211 = vmatpush.msra.mxu0 %v161
    %212 = vmatpush.msra.mxu0 %v155
    %213 = vmatpush.msra.mxu0 %v149
    %214 = vmatpush.msra.mxu0 %v143
    %215 = vmatmul.f32.gmra.mxu0 %v197
    %v216 = vpop.f32.mrf.mxu0
    %v217 = vadd.f32 0.0, %v216
    %218 = vdwg.mxu0
    %219 = vmatpush.msra.mxu0 0.0
    %220 = vmatpush.msra.mxu0 0.0
    %221 = vmatpush.msra.mxu0 0.0
    %222 = vmatpush.msra.mxu0 0.0
    %223 = vmatpush.msra.mxu0 0.0
    %224 = vmatpush.msra.mxu0 0.0
    %225 = vmatpush.msra.mxu0 0.0
    %226 = vmatpush.msra.mxu0 0.0
    %227 = vmatpush.msra.mxu0 0.0
    %228 = vmatpush.msra.mxu0 0.0
    %229 = vmatpush.msra.mxu0 0.0
    %230 = vmatpush.msra.mxu0 0.0
    %231 = vmatpush.msra.mxu0 %v162
    %232 = vmatpush.msra.mxu0 %v156
    %233 = vmatpush.msra.mxu0 %v150
    %234 = vmatpush.msra.mxu0 %v144
    %235 = vmatmul.f32.gmra.mxu0 %v197
    %v236 = vpop.f32.mrf.mxu0
    %v237 = vadd.f32 0.0, %v236
    %238 = vdwg.mxu0
    %239 = vmatpush.msra.mxu0 0.0
    %240 = vmatpush.msra.mxu0 0.0
    %241 = vmatpush.msra.mxu0 0.0
    %242 = vmatpush.msra.mxu0 0.0
    %243 = vmatpush.msra.mxu0 0.0
    %244 = vmatpush.msra.mxu0 0.0
    %245 = vmatpush.msra.mxu0 0.0
    %246 = vmatpush.msra.mxu0 0.0
    %247 = vmatpush.msra.mxu0 0.0
    %248 = vmatpush.msra.mxu0 0.0
    %249 = vmatpush.msra.mxu0 0.0
    %250 = vmatpush.msra.mxu0 0.0
    %251 = vmatpush.msra.mxu0 %v163
    %252 = vmatpush.msra.mxu0 %v157
    %253 = vmatpush.msra.mxu0 %v151
    %254 = vmatpush.msra.mxu0 %v145
    %255 = vmatmul.f32.gmra.mxu0 %v197
    %v256 = vpop.f32.mrf.mxu0
    %v257 = vadd.f32 0.0, %v256
    %258 = vdwg.mxu0
    %259 = vmatpush.msra.mxu0 0.0
    %260 = vmatpush.msra.mxu0 0.0
    %261 = vmatpush.msra.mxu0 0.0
    %262 = vmatpush.msra.mxu0 0.0
    %263 = vmatpush.msra.mxu0 0.0
    %264 = vmatpush.msra.mxu0 0.0
    %265 = vmatpush.msra.mxu0 0.0
    %266 = vmatpush.msra.mxu0 0.0
    %267 = vmatpush.msra.mxu0 0.0
    %268 = vmatpush.msra.mxu0 0.0
    %269 = vmatpush.msra.mxu0 0.0
    %270 = vmatpush.msra.mxu0 0.0
    %271 = vmatpush.msra.mxu0 %v164
    %272 = vmatpush.msra.mxu0 %v158
    %273 = vmatpush.msra.mxu0 %v152
    %274 = vmatpush.msra.mxu0 %v146
    %275 = vmatmul.f32.gmra.mxu0 %v197
    %v276 = vpop.f32.mrf.mxu0
    %v277 = vadd.f32 0.0, %v276
    %278 = vdwg.mxu0
    %279 = vmatpush.msra.mxu0 0.0
    %280 = vmatpush.msra.mxu0 0.0
    %281 = vmatpush.msra.mxu0 0.0
    %282 = vmatpush.msra.mxu0 0.0
    %283 = vmatpush.msra.mxu0 0.0
    %284 = vmatpush.msra.mxu0 0.0
    %285 = vmatpush.msra.mxu0 0.0
    %286 = vmatpush.msra.mxu0 0.0
    %287 = vmatpush.msra.mxu0 0.0
    %288 = vmatpush.msra.mxu0 0.0
    %289 = vmatpush.msra.mxu0 0.0
    %290 = vmatpush.msra.mxu0 0.0
    %291 = vmatpush.msra.mxu0 %v165
    %292 = vmatpush.msra.mxu0 %v159
    %293 = vmatpush.msra.mxu0 %v153
    %294 = vmatpush.msra.mxu0 %v147
    %295 = vmatmul.f32.gmra.mxu0 %v197
    %v296 = vpop.f32.mrf.mxu0
    %v297 = vadd.f32 0.0, %v296
    %298 = vdwg.mxu0
    %299 = vmatpush.msra.mxu0 0.0
    %300 = vmatpush.msra.mxu0 0.0
    %301 = vmatpush.msra.mxu0 0.0
    %302 = vmatpush.msra.mxu0 0.0
    %303 = vmatpush.msra.mxu0 0.0
    %304 = vmatpush.msra.mxu0 0.0
    %305 = vmatpush.msra.mxu0 0.0
    %306 = vmatpush.msra.mxu0 0.0
    %307 = vmatpush.msra.mxu0 0.0
    %308 = vmatpush.msra.mxu0 0.0
    %309 = vmatpush.msra.mxu0 0.0
    %310 = vmatpush.msra.mxu0 0.0
    %311 = vmatpush.msra.mxu0 %v166
    %312 = vmatpush.msra.mxu0 %v160
    %313 = vmatpush.msra.mxu0 %v154
    %314 = vmatpush.msra.mxu0 %v148
    %315 = vmatmul.f32.gmra.mxu0 %v197
    %v316 = vpop.f32.mrf.mxu0
    %v317 = vadd.f32 0.0, %v316
    %318 = vdwg.mxu0
    %319 = vmatpush.msra.mxu0 0.0
    %320 = vmatpush.msra.mxu0 0.0
    %321 = vmatpush.msra.mxu0 0.0
    %322 = vmatpush.msra.mxu0 0.0
    %323 = vmatpush.msra.mxu0 0.0
    %324 = vmatpush.msra.mxu0 0.0
    %325 = vmatpush.msra.mxu0 0.0
    %326 = vmatpush.msra.mxu0 0.0
    %327 = vmatpush.msra.mxu0 0.0
    %328 = vmatpush.msra.mxu0 0.0
    %329 = vmatpush.msra.mxu0 0.0
    %330 = vmatpush.msra.mxu0 0.0
    %331 = vmatpush.msra.mxu0 %v141
    %332 = vmatpush.msra.mxu0 %v127
    %333 = vmatpush.msra.mxu0 %v113
    %334 = vmatpush.msra.mxu0 %v99
    %335 = vmatmul.f32.gmra.mxu0 %v197
    %v336 = vpop.f32.mrf.mxu0
    %v337 = vadd.f32 0.0, %v336
    %338 = vdwg.mxu0
    %v340 = vsel %vm195, %v55, 0
    %342 = vmatpush.msra.mxu0 0.0
    %343 = vmatpush.msra.mxu0 0.0
    %344 = vmatpush.msra.mxu0 0.0
    %345 = vmatpush.msra.mxu0 0.0
    %346 = vmatpush.msra.mxu0 0.0
    %347 = vmatpush.msra.mxu0 0.0
    %348 = vmatpush.msra.mxu0 0.0
    %349 = vmatpush.msra.mxu0 0.0
    %350 = vmatpush.msra.mxu0 0.0
    %351 = vmatpush.msra.mxu0 0.0
    %352 = vmatpush.msra.mxu0 0.0
    %353 = vmatpush.msra.mxu0 0.0
    %354 = vmatpush.msra.mxu0 %v48
    %355 = vmatpush.msra.mxu0 %v41
    %356 = vmatpush.msra.mxu0 %v34
    %357 = vmatpush.msra.mxu0 %v27
    %358 = vmatmul.f32.gmra.mxu0 %v340
    %v359 = vpop.f32.mrf.mxu0
    %v360 = vadd.f32 %v217, %v359
    %361 = vdwg.mxu0
    %362 = vmatpush.msra.mxu0 0.0
    %363 = vmatpush.msra.mxu0 0.0
    %364 = vmatpush.msra.mxu0 0.0
    %365 = vmatpush.msra.mxu0 0.0
    %366 = vmatpush.msra.mxu0 0.0
    %367 = vmatpush.msra.mxu0 0.0
    %368 = vmatpush.msra.mxu0 0.0
    %369 = vmatpush.msra.mxu0 0.0
    %370 = vmatpush.msra.mxu0 0.0
    %371 = vmatpush.msra.mxu0 0.0
    %372 = vmatpush.msra.mxu0 0.0
    %373 = vmatpush.msra.mxu0 0.0
    %374 = vmatpush.msra.mxu0 %v49
    %375 = vmatpush.msra.mxu0 %v42
    %376 = vmatpush.msra.mxu0 %v35
    %377 = vmatpush.msra.mxu0 %v28
    %378 = vmatmul.f32.gmra.mxu0 %v340
    %v379 = vpop.f32.mrf.mxu0
    %v380 = vadd.f32 %v237, %v379
    %381 = vdwg.mxu0
    %382 = vmatpush.msra.mxu0 0.0
    %383 = vmatpush.msra.mxu0 0.0
    %384 = vmatpush.msra.mxu0 0.0
    %385 = vmatpush.msra.mxu0 0.0
    %386 = vmatpush.msra.mxu0 0.0
    %387 = vmatpush.msra.mxu0 0.0
    %388 = vmatpush.msra.mxu0 0.0
    %389 = vmatpush.msra.mxu0 0.0
    %390 = vmatpush.msra.mxu0 0.0
    %391 = vmatpush.msra.mxu0 0.0
    %392 = vmatpush.msra.mxu0 0.0
    %393 = vmatpush.msra.mxu0 0.0
    %394 = vmatpush.msra.mxu0 %v50
    %395 = vmatpush.msra.mxu0 %v43
    %396 = vmatpush.msra.mxu0 %v36
    %397 = vmatpush.msra.mxu0 %v29
    %398 = vmatmul.f32.gmra.mxu0 %v340
    %v399 = vpop.f32.mrf.mxu0
    %v400 = vadd.f32 %v257, %v399
    %401 = vdwg.mxu0
    %402 = vmatpush.msra.mxu0 0.0
    %403 = vmatpush.msra.mxu0 0.0
    %404 = vmatpush.msra.mxu0 0.0
    %405 = vmatpush.msra.mxu0 0.0
    %406 = vmatpush.msra.mxu0 0.0
    %407 = vmatpush.msra.mxu0 0.0
    %408 = vmatpush.msra.mxu0 0.0
    %409 = vmatpush.msra.mxu0 0.0
    %410 = vmatpush.msra.mxu0 0.0
    %411 = vmatpush.msra.mxu0 0.0
    %412 = vmatpush.msra.mxu0 0.0
    %413 = vmatpush.msra.mxu0 0.0
    %414 = vmatpush.msra.mxu0 %v51
    %415 = vmatpush.msra.mxu0 %v44
    %416 = vmatpush.msra.mxu0 %v37
    %417 = vmatpush.msra.mxu0 %v30
    %418 = vmatmul.f32.gmra.mxu0 %v340
    %v419 = vpop.f32.mrf.mxu0
    %v420 = vadd.f32 %v277, %v419
    %421 = vdwg.mxu0
    %422 = vmatpush.msra.mxu0 0.0
    %423 = vmatpush.msra.mxu0 0.0
    %424 = vmatpush.msra.mxu0 0.0
    %425 = vmatpush.msra.mxu0 0.0
    %426 = vmatpush.msra.mxu0 0.0
    %427 = vmatpush.msra.mxu0 0.0
    %428 = vmatpush.msra.mxu0 0.0
    %429 = vmatpush.msra.mxu0 0.0
    %430 = vmatpush.msra.mxu0 0.0
    %431 = vmatpush.msra.mxu0 0.0
    %432 = vmatpush.msra.mxu0 0.0
    %433 = vmatpush.msra.mxu0 0.0
    %434 = vmatpush.msra.mxu0 %v52
    %435 = vmatpush.msra.mxu0 %v45
    %436 = vmatpush.msra.mxu0 %v38
    %437 = vmatpush.msra.mxu0 %v31
    %438 = vmatmul.f32.gmra.mxu0 %v340
    %v439 = vpop.f32.mrf.mxu0
    %v440 = vadd.f32 %v297, %v439
    %441 = vdwg.mxu0
    %442 = vmatpush.msra.mxu0 0.0
    %443 = vmatpush.msra.mxu0 0.0
    %444 = vmatpush.msra.mxu0 0.0
    %445 = vmatpush.msra.mxu0 0.0
    %446 = vmatpush.msra.mxu0 0.0
    %447 = vmatpush.msra.mxu0 0.0
    %448 = vmatpush.msra.mxu0 0.0
    %449 = vmatpush.msra.mxu0 0.0
    %450 = vmatpush.msra.mxu0 0.0
    %451 = vmatpush.msra.mxu0 0.0
    %452 = vmatpush.msra.mxu0 0.0
    %453 = vmatpush.msra.mxu0 0.0
    %454 = vmatpush.msra.mxu0 %v53
    %455 = vmatpush.msra.mxu0 %v46
    %456 = vmatpush.msra.mxu0 %v39
    %457 = vmatpush.msra.mxu0 %v32
    %458 = vmatmul.f32.gmra.mxu0 %v340
    %v459 = vpop.f32.mrf.mxu0
    %v460 = vadd.f32 %v317, %v459
    %461 = vdwg.mxu0
    %462 = vmatpush.msra.mxu0 0.0
    %463 = vmatpush.msra.mxu0 0.0
    %464 = vmatpush.msra.mxu0 0.0
    %465 = vmatpush.msra.mxu0 0.0
    %466 = vmatpush.msra.mxu0 0.0
    %467 = vmatpush.msra.mxu0 0.0
    %468 = vmatpush.msra.mxu0 0.0
    %469 = vmatpush.msra.mxu0 0.0
    %470 = vmatpush.msra.mxu0 0.0
    %471 = vmatpush.msra.mxu0 0.0
    %472 = vmatpush.msra.mxu0 0.0
    %473 = vmatpush.msra.mxu0 0.0
    %474 = vmatpush.msra.mxu0 %v54
    %475 = vmatpush.msra.mxu0 %v47
    %476 = vmatpush.msra.mxu0 %v40
    %477 = vmatpush.msra.mxu0 %v33
    %478 = vmatmul.f32.gmra.mxu0 %v340
    %v479 = vpop.f32.mrf.mxu0
    %v480 = vadd.f32 %v337, %v479
    %481 = vdwg.mxu0
    %s482 = scalar_lea.vmem %s1, 4
    %v483 = vld [vmem:[%s482] sm:$0x3]
    %484 = vrot.lane.b32.xlu0 %v27, 126
    %v485 = vpop.permute.xlu0 %484
    %486 = vrot.lane.b32.xlu0 %v28, 126
    %v487 = vpop.permute.xlu0 %486
    %488 = vrot.lane.b32.xlu0 %v29, 126
    %v489 = vpop.permute.xlu0 %488
    %490 = vrot.lane.b32.xlu0 %v30, 126
    %v491 = vpop.permute.xlu0 %490
    %492 = vrot.lane.b32.xlu0 %v31, 126
    %v493 = vpop.permute.xlu0 %492
    %494 = vrot.lane.b32.xlu0 %v32, 126
    %v495 = vpop.permute.xlu0 %494
    %496 = vrot.lane.b32.xlu0 %v33, 126
    %v497 = vpop.permute.xlu0 %496
    %498 = vrot.lane.b32.xlu0 %v34, 126
    %v499 = vpop.permute.xlu0 %498
    %500 = vrot.lane.b32.xlu0 %v35, 126
    %v501 = vpop.permute.xlu0 %500
    %502 = vrot.lane.b32.xlu0 %v36, 126
    %v503 = vpop.permute.xlu0 %502
    %504 = vrot.lane.b32.xlu0 %v37, 126
    %v505 = vpop.permute.xlu0 %504
    %506 = vrot.lane.b32.xlu0 %v38, 126
    %v507 = vpop.permute.xlu0 %506
    %508 = vrot.lane.b32.xlu0 %v39, 126
    %v509 = vpop.permute.xlu0 %508
    %510 = vrot.lane.b32.xlu0 %v40, 126
    %v511 = vpop.permute.xlu0 %510
    %512 = vrot.lane.b32.xlu0 %v41, 126
    %v513 = vpop.permute.xlu0 %512
    %514 = vrot.lane.b32.xlu0 %v42, 126
    %v515 = vpop.permute.xlu0 %514
    %516 = vrot.lane.b32.xlu0 %v43, 126
    %v517 = vpop.permute.xlu0 %516
    %518 = vrot.lane.b32.xlu0 %v44, 126
    %v519 = vpop.permute.xlu0 %518
    %520 = vrot.lane.b32.xlu0 %v45, 126
    %v521 = vpop.permute.xlu0 %520
    %522 = vrot.lane.b32.xlu0 %v46, 126
    %v523 = vpop.permute.xlu0 %522
    %524 = vrot.lane.b32.xlu0 %v47, 126
    %v525 = vpop.permute.xlu0 %524
    %526 = vrot.lane.b32.xlu0 %v48, 126
    %v527 = vpop.permute.xlu0 %526
    %528 = vrot.lane.b32.xlu0 %v49, 126
    %v529 = vpop.permute.xlu0 %528
    %530 = vrot.lane.b32.xlu0 %v50, 126
    %v531 = vpop.permute.xlu0 %530
    %532 = vrot.lane.b32.xlu0 %v51, 126
    %v533 = vpop.permute.xlu0 %532
    %534 = vrot.lane.b32.xlu0 %v52, 126
    %v535 = vpop.permute.xlu0 %534
    %536 = vrot.lane.b32.xlu0 %v53, 126
    %v537 = vpop.permute.xlu0 %536
    %538 = vrot.lane.b32.xlu0 %v54, 126
    %v539 = vpop.permute.xlu0 %538
    %vm540 = vcmask 1031168
    %v541 = vsel %vm540, %v485, %v487
    %v542 = vsel %vm540, %v487, %v489
    %v543 = vsel %vm540, %v489, %v491
    %v544 = vsel %vm540, %v491, %v493
    %v545 = vsel %vm540, %v493, %v495
    %v546 = vsel %vm540, %v495, %v497
    %v547 = vsel %vm540, %v499, %v501
    %v548 = vsel %vm540, %v501, %v503
    %v549 = vsel %vm540, %v503, %v505
    %v550 = vsel %vm540, %v505, %v507
    %v551 = vsel %vm540, %v507, %v509
    %v552 = vsel %vm540, %v509, %v511
    %v553 = vsel %vm540, %v513, %v515
    %v554 = vsel %vm540, %v515, %v517
    %v555 = vsel %vm540, %v517, %v519
    %v556 = vsel %vm540, %v519, %v521
    %v557 = vsel %vm540, %v521, %v523
    %v558 = vsel %vm540, %v523, %v525
    %v559 = vsel %vm540, %v527, %v529
    %v560 = vsel %vm540, %v529, %v531
    %v561 = vsel %vm540, %v531, %v533
    %v562 = vsel %vm540, %v533, %v535
    %v563 = vsel %vm540, %v535, %v537
    %v564 = vsel %vm540, %v537, %v539
    %v594 = vsel %vm195, %v483, 0
    %596 = vmatpush.msra.mxu0 0.0
    %597 = vmatpush.msra.mxu0 0.0
    %598 = vmatpush.msra.mxu0 0.0
    %599 = vmatpush.msra.mxu0 0.0
    %600 = vmatpush.msra.mxu0 0.0
    %601 = vmatpush.msra.mxu0 0.0
    %602 = vmatpush.msra.mxu0 0.0
    %603 = vmatpush.msra.mxu0 0.0
    %604 = vmatpush.msra.mxu0 0.0
    %605 = vmatpush.msra.mxu0 0.0
    %606 = vmatpush.msra.mxu0 0.0
    %607 = vmatpush.msra.mxu0 0.0
    %608 = vmatpush.msra.mxu0 %v559
    %609 = vmatpush.msra.mxu0 %v553
    %610 = vmatpush.msra.mxu0 %v547
    %611 = vmatpush.msra.mxu0 %v541
    %612 = vmatmul.f32.gmra.mxu0 %v594
    %v613 = vpop.f32.mrf.mxu0
    %v614 = vadd.f32 0.0, %v613
    %615 = vdwg.mxu0
    %616 = vmatpush.msra.mxu0 0.0
    %617 = vmatpush.msra.mxu0 0.0
    %618 = vmatpush.msra.mxu0 0.0
    %619 = vmatpush.msra.mxu0 0.0
    %620 = vmatpush.msra.mxu0 0.0
    %621 = vmatpush.msra.mxu0 0.0
    %622 = vmatpush.msra.mxu0 0.0
    %623 = vmatpush.msra.mxu0 0.0
    %624 = vmatpush.msra.mxu0 0.0
    %625 = vmatpush.msra.mxu0 0.0
    %626 = vmatpush.msra.mxu0 0.0
    %627 = vmatpush.msra.mxu0 0.0
    %628 = vmatpush.msra.mxu0 %v560
    %629 = vmatpush.msra.mxu0 %v554
    %630 = vmatpush.msra.mxu0 %v548
    %631 = vmatpush.msra.mxu0 %v542
    %632 = vmatmul.f32.gmra.mxu0 %v594
    %v633 = vpop.f32.mrf.mxu0
    %v634 = vadd.f32 0.0, %v633
    %635 = vdwg.mxu0
    %636 = vmatpush.msra.mxu0 0.0
    %637 = vmatpush.msra.mxu0 0.0
    %638 = vmatpush.msra.mxu0 0.0
    %639 = vmatpush.msra.mxu0 0.0
    %640 = vmatpush.msra.mxu0 0.0
    %641 = vmatpush.msra.mxu0 0.0
    %642 = vmatpush.msra.mxu0 0.0
    %643 = vmatpush.msra.mxu0 0.0
    %644 = vmatpush.msra.mxu0 0.0
    %645 = vmatpush.msra.mxu0 0.0
    %646 = vmatpush.msra.mxu0 0.0
    %647 = vmatpush.msra.mxu0 0.0
    %648 = vmatpush.msra.mxu0 %v561
    %649 = vmatpush.msra.mxu0 %v555
    %650 = vmatpush.msra.mxu0 %v549
    %651 = vmatpush.msra.mxu0 %v543
    %652 = vmatmul.f32.gmra.mxu0 %v594
    %v653 = vpop.f32.mrf.mxu0
    %v654 = vadd.f32 0.0, %v653
    %655 = vdwg.mxu0
    %656 = vmatpush.msra.mxu0 0.0
    %657 = vmatpush.msra.mxu0 0.0
    %658 = vmatpush.msra.mxu0 0.0
    %659 = vmatpush.msra.mxu0 0.0
    %660 = vmatpush.msra.mxu0 0.0
    %661 = vmatpush.msra.mxu0 0.0
    %662 = vmatpush.msra.mxu0 0.0
    %663 = vmatpush.msra.mxu0 0.0
    %664 = vmatpush.msra.mxu0 0.0
    %665 = vmatpush.msra.mxu0 0.0
    %666 = vmatpush.msra.mxu0 0.0
    %667 = vmatpush.msra.mxu0 0.0
    %668 = vmatpush.msra.mxu0 %v562
    %669 = vmatpush.msra.mxu0 %v556
    %670 = vmatpush.msra.mxu0 %v550
    %671 = vmatpush.msra.mxu0 %v544
    %672 = vmatmul.f32.gmra.mxu0 %v594
    %v673 = vpop.f32.mrf.mxu0
    %v674 = vadd.f32 0.0, %v673
    %675 = vdwg.mxu0
    %676 = vmatpush.msra.mxu0 0.0
    %677 = vmatpush.msra.mxu0 0.0
    %678 = vmatpush.msra.mxu0 0.0
    %679 = vmatpush.msra.mxu0 0.0
    %680 = vmatpush.msra.mxu0 0.0
    %681 = vmatpush.msra.mxu0 0.0
    %682 = vmatpush.msra.mxu0 0.0
    %683 = vmatpush.msra.mxu0 0.0
    %684 = vmatpush.msra.mxu0 0.0
    %685 = vmatpush.msra.mxu0 0.0
    %686 = vmatpush.msra.mxu0 0.0
    %687 = vmatpush.msra.mxu0 0.0
    %688 = vmatpush.msra.mxu0 %v563
    %689 = vmatpush.msra.mxu0 %v557
    %690 = vmatpush.msra.mxu0 %v551
    %691 = vmatpush.msra.mxu0 %v545
    %692 = vmatmul.f32.gmra.mxu0 %v594
    %v693 = vpop.f32.mrf.mxu0
    %v694 = vadd.f32 0.0, %v693
    %695 = vdwg.mxu0
    %696 = vmatpush.msra.mxu0 0.0
    %697 = vmatpush.msra.mxu0 0.0
    %698 = vmatpush.msra.mxu0 0.0
    %699 = vmatpush.msra.mxu0 0.0
    %700 = vmatpush.msra.mxu0 0.0
    %701 = vmatpush.msra.mxu0 0.0
    %702 = vmatpush.msra.mxu0 0.0
    %703 = vmatpush.msra.mxu0 0.0
    %704 = vmatpush.msra.mxu0 0.0
    %705 = vmatpush.msra.mxu0 0.0
    %706 = vmatpush.msra.mxu0 0.0
    %707 = vmatpush.msra.mxu0 0.0
    %708 = vmatpush.msra.mxu0 %v564
    %709 = vmatpush.msra.mxu0 %v558
    %710 = vmatpush.msra.mxu0 %v552
    %711 = vmatpush.msra.mxu0 %v546
    %712 = vmatmul.f32.gmra.mxu0 %v594
    %v713 = vpop.f32.mrf.mxu0
    %v714 = vadd.f32 0.0, %v713
    %715 = vdwg.mxu0
    %716 = vmatpush.msra.mxu0 0.0
    %717 = vmatpush.msra.mxu0 0.0
    %718 = vmatpush.msra.mxu0 0.0
    %719 = vmatpush.msra.mxu0 0.0
    %720 = vmatpush.msra.mxu0 0.0
    %721 = vmatpush.msra.mxu0 0.0
    %722 = vmatpush.msra.mxu0 0.0
    %723 = vmatpush.msra.mxu0 0.0
    %724 = vmatpush.msra.mxu0 0.0
    %725 = vmatpush.msra.mxu0 0.0
    %726 = vmatpush.msra.mxu0 0.0
    %727 = vmatpush.msra.mxu0 0.0
    %728 = vmatpush.msra.mxu0 %v539
    %729 = vmatpush.msra.mxu0 %v525
    %730 = vmatpush.msra.mxu0 %v511
    %731 = vmatpush.msra.mxu0 %v497
    %732 = vmatmul.f32.gmra.mxu0 %v594
    %v733 = vpop.f32.mrf.mxu0
    %v734 = vadd.f32 0.0, %v733
    %735 = vdwg.mxu0
    %v736 = vadd.f32 %v360, %v614
    %v737 = vadd.f32 %v380, %v634
    %v738 = vadd.f32 %v400, %v654
    %v739 = vadd.f32 %v420, %v674
    %v740 = vadd.f32 %v440, %v694
    %v741 = vadd.f32 %v460, %v714
    %v742 = vadd.f32 %v480, %v734
    %s743 = scalar_lea.vmem %s1, 6
    %v744 = vld [vmem:[%s743] sm:$0x3]
    %745 = vrot.lane.b32.xlu0 %v27, 125
    %v746 = vpop.permute.xlu0 %745
    %747 = vrot.lane.b32.xlu0 %v28, 125
    %v748 = vpop.permute.xlu0 %747
    %749 = vrot.lane.b32.xlu0 %v29, 125
    %v750 = vpop.permute.xlu0 %749
    %751 = vrot.lane.b32.xlu0 %v30, 125
    %v752 = vpop.permute.xlu0 %751
    %753 = vrot.lane.b32.xlu0 %v31, 125
    %v754 = vpop.permute.xlu0 %753
    %755 = vrot.lane.b32.xlu0 %v32, 125
    %v756 = vpop.permute.xlu0 %755
    %757 = vrot.lane.b32.xlu0 %v33, 125
    %v758 = vpop.permute.xlu0 %757
    %759 = vrot.lane.b32.xlu0 %v34, 125
    %v760 = vpop.permute.xlu0 %759
    %761 = vrot.lane.b32.xlu0 %v35, 125
    %v762 = vpop.permute.xlu0 %761
    %763 = vrot.lane.b32.xlu0 %v36, 125
    %v764 = vpop.permute.xlu0 %763
    %765 = vrot.lane.b32.xlu0 %v37, 125
    %v766 = vpop.permute.xlu0 %765
    %767 = vrot.lane.b32.xlu0 %v38, 125
    %v768 = vpop.permute.xlu0 %767
    %769 = vrot.lane.b32.xlu0 %v39, 125
    %v770 = vpop.permute.xlu0 %769
    %771 = vrot.lane.b32.xlu0 %v40, 125
    %v772 = vpop.permute.xlu0 %771
    %773 = vrot.lane.b32.xlu0 %v41, 125
    %v774 = vpop.permute.xlu0 %773
    %775 = vrot.lane.b32.xlu0 %v42, 125
    %v776 = vpop.permute.xlu0 %775
    %777 = vrot.lane.b32.xlu0 %v43, 125
    %v778 = vpop.permute.xlu0 %777
    %779 = vrot.lane.b32.xlu0 %v44, 125
    %v780 = vpop.permute.xlu0 %779
    %781 = vrot.lane.b32.xlu0 %v45, 125
    %v782 = vpop.permute.xlu0 %781
    %783 = vrot.lane.b32.xlu0 %v46, 125
    %v784 = vpop.permute.xlu0 %783
    %785 = vrot.lane.b32.xlu0 %v47, 125
    %v786 = vpop.permute.xlu0 %785
    %787 = vrot.lane.b32.xlu0 %v48, 125
    %v788 = vpop.permute.xlu0 %787
    %789 = vrot.lane.b32.xlu0 %v49, 125
    %v790 = vpop.permute.xlu0 %789
    %791 = vrot.lane.b32.xlu0 %v50, 125
    %v792 = vpop.permute.xlu0 %791
    %793 = vrot.lane.b32.xlu0 %v51, 125
    %v794 = vpop.permute.xlu0 %793
    %795 = vrot.lane.b32.xlu0 %v52, 125
    %v796 = vpop.permute.xlu0 %795
    %797 = vrot.lane.b32.xlu0 %v53, 125
    %v798 = vpop.permute.xlu0 %797
    %799 = vrot.lane.b32.xlu0 %v54, 125
    %v800 = vpop.permute.xlu0 %799
    %vm801 = vcmask 1022976
    %v802 = vsel %vm801, %v746, %v748
    %v803 = vsel %vm801, %v748, %v750
    %v804 = vsel %vm801, %v750, %v752
    %v805 = vsel %vm801, %v752, %v754
    %v806 = vsel %vm801, %v754, %v756
    %v807 = vsel %vm801, %v756, %v758
    %v808 = vsel %vm801, %v760, %v762
    %v809 = vsel %vm801, %v762, %v764
    %v810 = vsel %vm801, %v764, %v766
    %v811 = vsel %vm801, %v766, %v768
    %v812 = vsel %vm801, %v768, %v770
    %v813 = vsel %vm801, %v770, %v772
    %v814 = vsel %vm801, %v774, %v776
    %v815 = vsel %vm801, %v776, %v778
    %v816 = vsel %vm801, %v778, %v780
    %v817 = vsel %vm801, %v780, %v782
    %v818 = vsel %vm801, %v782, %v784
    %v819 = vsel %vm801, %v784, %v786
    %v820 = vsel %vm801, %v788, %v790
    %v821 = vsel %vm801, %v790, %v792
    %v822 = vsel %vm801, %v792, %v794
    %v823 = vsel %vm801, %v794, %v796
    %v824 = vsel %vm801, %v796, %v798
    %v825 = vsel %vm801, %v798, %v800
    %v855 = vsel %vm195, %v744, 0
    %857 = vmatpush.msra.mxu0 0.0
    %858 = vmatpush.msra.mxu0 0.0
    %859 = vmatpush.msra.mxu0 0.0
    %860 = vmatpush.msra.mxu0 0.0
    %861 = vmatpush.msra.mxu0 0.0
    %862 = vmatpush.msra.mxu0 0.0
    %863 = vmatpush.msra.mxu0 0.0
    %864 = vmatpush.msra.mxu0 0.0
    %865 = vmatpush.msra.mxu0 0.0
    %866 = vmatpush.msra.mxu0 0.0
    %867 = vmatpush.msra.mxu0 0.0
    %868 = vmatpush.msra.mxu0 0.0
    %869 = vmatpush.msra.mxu0 %v820
    %870 = vmatpush.msra.mxu0 %v814
    %871 = vmatpush.msra.mxu0 %v808
    %872 = vmatpush.msra.mxu0 %v802
    %873 = vmatmul.f32.gmra.mxu0 %v855
    %v874 = vpop.f32.mrf.mxu0
    %v875 = vadd.f32 0.0, %v874
    %876 = vdwg.mxu0
    %877 = vmatpush.msra.mxu0 0.0
    %878 = vmatpush.msra.mxu0 0.0
    %879 = vmatpush.msra.mxu0 0.0
    %880 = vmatpush.msra.mxu0 0.0
    %881 = vmatpush.msra.mxu0 0.0
    %882 = vmatpush.msra.mxu0 0.0
    %883 = vmatpush.msra.mxu0 0.0
    %884 = vmatpush.msra.mxu0 0.0
    %885 = vmatpush.msra.mxu0 0.0
    %886 = vmatpush.msra.mxu0 0.0
    %887 = vmatpush.msra.mxu0 0.0
    %888 = vmatpush.msra.mxu0 0.0
    %889 = vmatpush.msra.mxu0 %v821
    %890 = vmatpush.msra.mxu0 %v815
    %891 = vmatpush.msra.mxu0 %v809
    %892 = vmatpush.msra.mxu0 %v803
    %893 = vmatmul.f32.gmra.mxu0 %v855
    %v894 = vpop.f32.mrf.mxu0
    %v895 = vadd.f32 0.0, %v894
    %896 = vdwg.mxu0
    %897 = vmatpush.msra.mxu0 0.0
    %898 = vmatpush.msra.mxu0 0.0
    %899 = vmatpush.msra.mxu0 0.0
    %900 = vmatpush.msra.mxu0 0.0
    %901 = vmatpush.msra.mxu0 0.0
    %902 = vmatpush.msra.mxu0 0.0
    %903 = vmatpush.msra.mxu0 0.0
    %904 = vmatpush.msra.mxu0 0.0
    %905 = vmatpush.msra.mxu0 0.0
    %906 = vmatpush.msra.mxu0 0.0
    %907 = vmatpush.msra.mxu0 0.0
    %908 = vmatpush.msra.mxu0 0.0
    %909 = vmatpush.msra.mxu0 %v822
    %910 = vmatpush.msra.mxu0 %v816
    %911 = vmatpush.msra.mxu0 %v810
    %912 = vmatpush.msra.mxu0 %v804
    %913 = vmatmul.f32.gmra.mxu0 %v855
    %v914 = vpop.f32.mrf.mxu0
    %v915 = vadd.f32 0.0, %v914
    %916 = vdwg.mxu0
    %917 = vmatpush.msra.mxu0 0.0
    %918 = vmatpush.msra.mxu0 0.0
    %919 = vmatpush.msra.mxu0 0.0
    %920 = vmatpush.msra.mxu0 0.0
    %921 = vmatpush.msra.mxu0 0.0
    %922 = vmatpush.msra.mxu0 0.0
    %923 = vmatpush.msra.mxu0 0.0
    %924 = vmatpush.msra.mxu0 0.0
    %925 = vmatpush.msra.mxu0 0.0
    %926 = vmatpush.msra.mxu0 0.0
    %927 = vmatpush.msra.mxu0 0.0
    %928 = vmatpush.msra.mxu0 0.0
    %929 = vmatpush.msra.mxu0 %v823
    %930 = vmatpush.msra.mxu0 %v817
    %931 = vmatpush.msra.mxu0 %v811
    %932 = vmatpush.msra.mxu0 %v805
    %933 = vmatmul.f32.gmra.mxu0 %v855
    %v934 = vpop.f32.mrf.mxu0
    %v935 = vadd.f32 0.0, %v934
    %936 = vdwg.mxu0
    %937 = vmatpush.msra.mxu0 0.0
    %938 = vmatpush.msra.mxu0 0.0
    %939 = vmatpush.msra.mxu0 0.0
    %940 = vmatpush.msra.mxu0 0.0
    %941 = vmatpush.msra.mxu0 0.0
    %942 = vmatpush.msra.mxu0 0.0
    %943 = vmatpush.msra.mxu0 0.0
    %944 = vmatpush.msra.mxu0 0.0
    %945 = vmatpush.msra.mxu0 0.0
    %946 = vmatpush.msra.mxu0 0.0
    %947 = vmatpush.msra.mxu0 0.0
    %948 = vmatpush.msra.mxu0 0.0
    %949 = vmatpush.msra.mxu0 %v824
    %950 = vmatpush.msra.mxu0 %v818
    %951 = vmatpush.msra.mxu0 %v812
    %952 = vmatpush.msra.mxu0 %v806
    %953 = vmatmul.f32.gmra.mxu0 %v855
    %v954 = vpop.f32.mrf.mxu0
    %v955 = vadd.f32 0.0, %v954
    %956 = vdwg.mxu0
    %957 = vmatpush.msra.mxu0 0.0
    %958 = vmatpush.msra.mxu0 0.0
    %959 = vmatpush.msra.mxu0 0.0
    %960 = vmatpush.msra.mxu0 0.0
    %961 = vmatpush.msra.mxu0 0.0
    %962 = vmatpush.msra.mxu0 0.0
    %963 = vmatpush.msra.mxu0 0.0
    %964 = vmatpush.msra.mxu0 0.0
    %965 = vmatpush.msra.mxu0 0.0
    %966 = vmatpush.msra.mxu0 0.0
    %967 = vmatpush.msra.mxu0 0.0
    %968 = vmatpush.msra.mxu0 0.0
    %969 = vmatpush.msra.mxu0 %v825
    %970 = vmatpush.msra.mxu0 %v819
    %971 = vmatpush.msra.mxu0 %v813
    %972 = vmatpush.msra.mxu0 %v807
    %973 = vmatmul.f32.gmra.mxu0 %v855
    %v974 = vpop.f32.mrf.mxu0
    %v975 = vadd.f32 0.0, %v974
    %976 = vdwg.mxu0
    %977 = vmatpush.msra.mxu0 0.0
    %978 = vmatpush.msra.mxu0 0.0
    %979 = vmatpush.msra.mxu0 0.0
    %980 = vmatpush.msra.mxu0 0.0
    %981 = vmatpush.msra.mxu0 0.0
    %982 = vmatpush.msra.mxu0 0.0
    %983 = vmatpush.msra.mxu0 0.0
    %984 = vmatpush.msra.mxu0 0.0
    %985 = vmatpush.msra.mxu0 0.0
    %986 = vmatpush.msra.mxu0 0.0
    %987 = vmatpush.msra.mxu0 0.0
    %988 = vmatpush.msra.mxu0 0.0
    %989 = vmatpush.msra.mxu0 %v800
    %990 = vmatpush.msra.mxu0 %v786
    %991 = vmatpush.msra.mxu0 %v772
    %992 = vmatpush.msra.mxu0 %v758
    %993 = vmatmul.f32.gmra.mxu0 %v855
    %v994 = vpop.f32.mrf.mxu0
    %v995 = vadd.f32 0.0, %v994
    %996 = vdwg.mxu0
    %v997 = vadd.f32 %v736, %v875
    %v998 = vadd.f32 %v737, %v895
    %v999 = vadd.f32 %v738, %v915
    %v1000 = vadd.f32 %v739, %v935
    %v1001 = vadd.f32 %v740, %v955
    %v1002 = vadd.f32 %v741, %v975
    %v1003 = vadd.f32 %v742, %v995
    %s1004 = scalar_lea.vmem %s1, 8
    %v1005 = vld [vmem:[%s1004] sm:$0x3]
    %1006 = vrot.lane.b32.xlu0 %v27, 124
    %v1007 = vpop.permute.xlu0 %1006
    %1008 = vrot.lane.b32.xlu0 %v28, 124
    %v1009 = vpop.permute.xlu0 %1008
    %1010 = vrot.lane.b32.xlu0 %v29, 124
    %v1011 = vpop.permute.xlu0 %1010
    %1012 = vrot.lane.b32.xlu0 %v30, 124
    %v1013 = vpop.permute.xlu0 %1012
    %1014 = vrot.lane.b32.xlu0 %v31, 124
    %v1015 = vpop.permute.xlu0 %1014
    %1016 = vrot.lane.b32.xlu0 %v32, 124
    %v1017 = vpop.permute.xlu0 %1016
    %1018 = vrot.lane.b32.xlu0 %v33, 124
    %v1019 = vpop.permute.xlu0 %1018
    %1020 = vrot.lane.b32.xlu0 %v34, 124
    %v1021 = vpop.permute.xlu0 %1020
    %1022 = vrot.lane.b32.xlu0 %v35, 124
    %v1023 = vpop.permute.xlu0 %1022
    %1024 = vrot.lane.b32.xlu0 %v36, 124
    %v1025 = vpop.permute.xlu0 %1024
    %1026 = vrot.lane.b32.xlu0 %v37, 124
    %v1027 = vpop.permute.xlu0 %1026
    %1028 = vrot.lane.b32.xlu0 %v38, 124
    %v1029 = vpop.permute.xlu0 %1028
    %1030 = vrot.lane.b32.xlu0 %v39, 124
    %v1031 = vpop.permute.xlu0 %1030
    %1032 = vrot.lane.b32.xlu0 %v40, 124
    %v1033 = vpop.permute.xlu0 %1032
    %1034 = vrot.lane.b32.xlu0 %v41, 124
    %v1035 = vpop.permute.xlu0 %1034
    %1036 = vrot.lane.b32.xlu0 %v42, 124
    %v1037 = vpop.permute.xlu0 %1036
    %1038 = vrot.lane.b32.xlu0 %v43, 124
    %v1039 = vpop.permute.xlu0 %1038
    %1040 = vrot.lane.b32.xlu0 %v44, 124
    %v1041 = vpop.permute.xlu0 %1040
    %1042 = vrot.lane.b32.xlu0 %v45, 124
    %v1043 = vpop.permute.xlu0 %1042
    %1044 = vrot.lane.b32.xlu0 %v46, 124
    %v1045 = vpop.permute.xlu0 %1044
    %1046 = vrot.lane.b32.xlu0 %v47, 124
    %v1047 = vpop.permute.xlu0 %1046
    %1048 = vrot.lane.b32.xlu0 %v48, 124
    %v1049 = vpop.permute.xlu0 %1048
    %1050 = vrot.lane.b32.xlu0 %v49, 124
    %v1051 = vpop.permute.xlu0 %1050
    %1052 = vrot.lane.b32.xlu0 %v50, 124
    %v1053 = vpop.permute.xlu0 %1052
    %1054 = vrot.lane.b32.xlu0 %v51, 124
    %v1055 = vpop.permute.xlu0 %1054
    %1056 = vrot.lane.b32.xlu0 %v52, 124
    %v1057 = vpop.permute.xlu0 %1056
    %1058 = vrot.lane.b32.xlu0 %v53, 124
    %v1059 = vpop.permute.xlu0 %1058
    %1060 = vrot.lane.b32.xlu0 %v54, 124
    %v1061 = vpop.permute.xlu0 %1060
    %vm1062 = vcmask 1014784
    %v1063 = vsel %vm1062, %v1007, %v1009
    %v1064 = vsel %vm1062, %v1009, %v1011
    %v1065 = vsel %vm1062, %v1011, %v1013
    %v1066 = vsel %vm1062, %v1013, %v1015
    %v1067 = vsel %vm1062, %v1015, %v1017
    %v1068 = vsel %vm1062, %v1017, %v1019
    %v1069 = vsel %vm1062, %v1021, %v1023
    %v1070 = vsel %vm1062, %v1023, %v1025
    %v1071 = vsel %vm1062, %v1025, %v1027
    %v1072 = vsel %vm1062, %v1027, %v1029
    %v1073 = vsel %vm1062, %v1029, %v1031
    %v1074 = vsel %vm1062, %v1031, %v1033
    %v1075 = vsel %vm1062, %v1035, %v1037
    %v1076 = vsel %vm1062, %v1037, %v1039
    %v1077 = vsel %vm1062, %v1039, %v1041
    %v1078 = vsel %vm1062, %v1041, %v1043
    %v1079 = vsel %vm1062, %v1043, %v1045
    %v1080 = vsel %vm1062, %v1045, %v1047
    %v1081 = vsel %vm1062, %v1049, %v1051
    %v1082 = vsel %vm1062, %v1051, %v1053
    %v1083 = vsel %vm1062, %v1053, %v1055
    %v1084 = vsel %vm1062, %v1055, %v1057
    %v1085 = vsel %vm1062, %v1057, %v1059
    %v1086 = vsel %vm1062, %v1059, %v1061
    %v1116 = vsel %vm195, %v1005, 0
    %1118 = vmatpush.msra.mxu0 0.0
    %1119 = vmatpush.msra.mxu0 0.0
    %1120 = vmatpush.msra.mxu0 0.0
    %1121 = vmatpush.msra.mxu0 0.0
    %1122 = vmatpush.msra.mxu0 0.0
    %1123 = vmatpush.msra.mxu0 0.0
    %1124 = vmatpush.msra.mxu0 0.0
    %1125 = vmatpush.msra.mxu0 0.0
    %1126 = vmatpush.msra.mxu0 0.0
    %1127 = vmatpush.msra.mxu0 0.0
    %1128 = vmatpush.msra.mxu0 0.0
    %1129 = vmatpush.msra.mxu0 0.0
    %1130 = vmatpush.msra.mxu0 %v1081
    %1131 = vmatpush.msra.mxu0 %v1075
    %1132 = vmatpush.msra.mxu0 %v1069
    %1133 = vmatpush.msra.mxu0 %v1063
    %1134 = vmatmul.f32.gmra.mxu0 %v1116
    %v1135 = vpop.f32.mrf.mxu0
    %v1136 = vadd.f32 0.0, %v1135
    %1137 = vdwg.mxu0
    %1138 = vmatpush.msra.mxu0 0.0
    %1139 = vmatpush.msra.mxu0 0.0
    %1140 = vmatpush.msra.mxu0 0.0
    %1141 = vmatpush.msra.mxu0 0.0
    %1142 = vmatpush.msra.mxu0 0.0
    %1143 = vmatpush.msra.mxu0 0.0
    %1144 = vmatpush.msra.mxu0 0.0
    %1145 = vmatpush.msra.mxu0 0.0
    %1146 = vmatpush.msra.mxu0 0.0
    %1147 = vmatpush.msra.mxu0 0.0
    %1148 = vmatpush.msra.mxu0 0.0
    %1149 = vmatpush.msra.mxu0 0.0
    %1150 = vmatpush.msra.mxu0 %v1082
    %1151 = vmatpush.msra.mxu0 %v1076
    %1152 = vmatpush.msra.mxu0 %v1070
    %1153 = vmatpush.msra.mxu0 %v1064
    %1154 = vmatmul.f32.gmra.mxu0 %v1116
    %v1155 = vpop.f32.mrf.mxu0
    %v1156 = vadd.f32 0.0, %v1155
    %1157 = vdwg.mxu0
    %1158 = vmatpush.msra.mxu0 0.0
    %1159 = vmatpush.msra.mxu0 0.0
    %1160 = vmatpush.msra.mxu0 0.0
    %1161 = vmatpush.msra.mxu0 0.0
    %1162 = vmatpush.msra.mxu0 0.0
    %1163 = vmatpush.msra.mxu0 0.0
    %1164 = vmatpush.msra.mxu0 0.0
    %1165 = vmatpush.msra.mxu0 0.0
    %1166 = vmatpush.msra.mxu0 0.0
    %1167 = vmatpush.msra.mxu0 0.0
    %1168 = vmatpush.msra.mxu0 0.0
    %1169 = vmatpush.msra.mxu0 0.0
    %1170 = vmatpush.msra.mxu0 %v1083
    %1171 = vmatpush.msra.mxu0 %v1077
    %1172 = vmatpush.msra.mxu0 %v1071
    %1173 = vmatpush.msra.mxu0 %v1065
    %1174 = vmatmul.f32.gmra.mxu0 %v1116
    %v1175 = vpop.f32.mrf.mxu0
    %v1176 = vadd.f32 0.0, %v1175
    %1177 = vdwg.mxu0
    %1178 = vmatpush.msra.mxu0 0.0
    %1179 = vmatpush.msra.mxu0 0.0
    %1180 = vmatpush.msra.mxu0 0.0
    %1181 = vmatpush.msra.mxu0 0.0
    %1182 = vmatpush.msra.mxu0 0.0
    %1183 = vmatpush.msra.mxu0 0.0
    %1184 = vmatpush.msra.mxu0 0.0
    %1185 = vmatpush.msra.mxu0 0.0
    %1186 = vmatpush.msra.mxu0 0.0
    %1187 = vmatpush.msra.mxu0 0.0
    %1188 = vmatpush.msra.mxu0 0.0
    %1189 = vmatpush.msra.mxu0 0.0
    %1190 = vmatpush.msra.mxu0 %v1084
    %1191 = vmatpush.msra.mxu0 %v1078
    %1192 = vmatpush.msra.mxu0 %v1072
    %1193 = vmatpush.msra.mxu0 %v1066
    %1194 = vmatmul.f32.gmra.mxu0 %v1116
    %v1195 = vpop.f32.mrf.mxu0
    %v1196 = vadd.f32 0.0, %v1195
    %1197 = vdwg.mxu0
    %1198 = vmatpush.msra.mxu0 0.0
    %1199 = vmatpush.msra.mxu0 0.0
    %1200 = vmatpush.msra.mxu0 0.0
    %1201 = vmatpush.msra.mxu0 0.0
    %1202 = vmatpush.msra.mxu0 0.0
    %1203 = vmatpush.msra.mxu0 0.0
    %1204 = vmatpush.msra.mxu0 0.0
    %1205 = vmatpush.msra.mxu0 0.0
    %1206 = vmatpush.msra.mxu0 0.0
    %1207 = vmatpush.msra.mxu0 0.0
    %1208 = vmatpush.msra.mxu0 0.0
    %1209 = vmatpush.msra.mxu0 0.0
    %1210 = vmatpush.msra.mxu0 %v1085
    %1211 = vmatpush.msra.mxu0 %v1079
    %1212 = vmatpush.msra.mxu0 %v1073
    %1213 = vmatpush.msra.mxu0 %v1067
    %1214 = vmatmul.f32.gmra.mxu0 %v1116
    %v1215 = vpop.f32.mrf.mxu0
    %v1216 = vadd.f32 0.0, %v1215
    %1217 = vdwg.mxu0
    %1218 = vmatpush.msra.mxu0 0.0
    %1219 = vmatpush.msra.mxu0 0.0
    %1220 = vmatpush.msra.mxu0 0.0
    %1221 = vmatpush.msra.mxu0 0.0
    %1222 = vmatpush.msra.mxu0 0.0
    %1223 = vmatpush.msra.mxu0 0.0
    %1224 = vmatpush.msra.mxu0 0.0
    %1225 = vmatpush.msra.mxu0 0.0
    %1226 = vmatpush.msra.mxu0 0.0
    %1227 = vmatpush.msra.mxu0 0.0
    %1228 = vmatpush.msra.mxu0 0.0
    %1229 = vmatpush.msra.mxu0 0.0
    %1230 = vmatpush.msra.mxu0 %v1086
    %1231 = vmatpush.msra.mxu0 %v1080
    %1232 = vmatpush.msra.mxu0 %v1074
    %1233 = vmatpush.msra.mxu0 %v1068
    %1234 = vmatmul.f32.gmra.mxu0 %v1116
    %v1235 = vpop.f32.mrf.mxu0
    %v1236 = vadd.f32 0.0, %v1235
    %1237 = vdwg.mxu0
    %1238 = vmatpush.msra.mxu0 0.0
    %1239 = vmatpush.msra.mxu0 0.0
    %1240 = vmatpush.msra.mxu0 0.0
    %1241 = vmatpush.msra.mxu0 0.0
    %1242 = vmatpush.msra.mxu0 0.0
    %1243 = vmatpush.msra.mxu0 0.0
    %1244 = vmatpush.msra.mxu0 0.0
    %1245 = vmatpush.msra.mxu0 0.0
    %1246 = vmatpush.msra.mxu0 0.0
    %1247 = vmatpush.msra.mxu0 0.0
    %1248 = vmatpush.msra.mxu0 0.0
    %1249 = vmatpush.msra.mxu0 0.0
    %1250 = vmatpush.msra.mxu0 %v1061
    %1251 = vmatpush.msra.mxu0 %v1047
    %1252 = vmatpush.msra.mxu0 %v1033
    %1253 = vmatpush.msra.mxu0 %v1019
    %1254 = vmatmul.f32.gmra.mxu0 %v1116
    %v1255 = vpop.f32.mrf.mxu0
    %v1256 = vadd.f32 0.0, %v1255
    %1257 = vdwg.mxu0
    %v1258 = vadd.f32 %v997, %v1136
    %v1259 = vadd.f32 %v998, %v1156
    %v1260 = vadd.f32 %v999, %v1176
    %v1261 = vadd.f32 %v1000, %v1196
    %v1262 = vadd.f32 %v1001, %v1216
    %v1263 = vadd.f32 %v1002, %v1236
    %v1264 = vadd.f32 %v1003, %v1256
    %s1265 = scalar_lea.vmem %s1, 10
    %v1266 = vld [vmem:[%s1265] sm:$0x3]
    %1267 = vrot.lane.b32.xlu0 %v27, 108
    %v1268 = vpop.permute.xlu0 %1267
    %1269 = vrot.lane.b32.xlu0 %v28, 108
    %v1270 = vpop.permute.xlu0 %1269
    %1271 = vrot.lane.b32.xlu0 %v29, 108
    %v1272 = vpop.permute.xlu0 %1271
    %1273 = vrot.lane.b32.xlu0 %v30, 108
    %v1274 = vpop.permute.xlu0 %1273
    %1275 = vrot.lane.b32.xlu0 %v31, 108
    %v1276 = vpop.permute.xlu0 %1275
    %1277 = vrot.lane.b32.xlu0 %v32, 108
    %v1278 = vpop.permute.xlu0 %1277
    %1279 = vrot.lane.b32.xlu0 %v33, 108
    %v1280 = vpop.permute.xlu0 %1279
    %1281 = vrot.lane.b32.xlu0 %v34, 108
    %v1282 = vpop.permute.xlu0 %1281
    %1283 = vrot.lane.b32.xlu0 %v35, 108
    %v1284 = vpop.permute.xlu0 %1283
    %1285 = vrot.lane.b32.xlu0 %v36, 108
    %v1286 = vpop.permute.xlu0 %1285
    %1287 = vrot.lane.b32.xlu0 %v37, 108
    %v1288 = vpop.permute.xlu0 %1287
    %1289 = vrot.lane.b32.xlu0 %v38, 108
    %v1290 = vpop.permute.xlu0 %1289
    %1291 = vrot.lane.b32.xlu0 %v39, 108
    %v1292 = vpop.permute.xlu0 %1291
    %1293 = vrot.lane.b32.xlu0 %v40, 108
    %v1294 = vpop.permute.xlu0 %1293
    %1295 = vrot.lane.b32.xlu0 %v41, 108
    %v1296 = vpop.permute.xlu0 %1295
    %1297 = vrot.lane.b32.xlu0 %v42, 108
    %v1298 = vpop.permute.xlu0 %1297
    %1299 = vrot.lane.b32.xlu0 %v43, 108
    %v1300 = vpop.permute.xlu0 %1299
    %1301 = vrot.lane.b32.xlu0 %v44, 108
    %v1302 = vpop.permute.xlu0 %1301
    %1303 = vrot.lane.b32.xlu0 %v45, 108
    %v1304 = vpop.permute.xlu0 %1303
    %1305 = vrot.lane.b32.xlu0 %v46, 108
    %v1306 = vpop.permute.xlu0 %1305
    %1307 = vrot.lane.b32.xlu0 %v47, 108
    %v1308 = vpop.permute.xlu0 %1307
    %1309 = vrot.lane.b32.xlu0 %v48, 108
    %v1310 = vpop.permute.xlu0 %1309
    %1311 = vrot.lane.b32.xlu0 %v49, 108
    %v1312 = vpop.permute.xlu0 %1311
    %1313 = vrot.lane.b32.xlu0 %v50, 108
    %v1314 = vpop.permute.xlu0 %1313
    %1315 = vrot.lane.b32.xlu0 %v51, 108
    %v1316 = vpop.permute.xlu0 %1315
    %1317 = vrot.lane.b32.xlu0 %v52, 108
    %v1318 = vpop.permute.xlu0 %1317
    %1319 = vrot.lane.b32.xlu0 %v53, 108
    %v1320 = vpop.permute.xlu0 %1319
    %1321 = vrot.lane.b32.xlu0 %v54, 108
    %v1322 = vpop.permute.xlu0 %1321
    %vm1323 = vcmask 883712
    %v1324 = vsel %vm1323, %v1268, %v1270
    %v1325 = vsel %vm1323, %v1270, %v1272
    %v1326 = vsel %vm1323, %v1272, %v1274
    %v1327 = vsel %vm1323, %v1274, %v1276
    %v1328 = vsel %vm1323, %v1276, %v1278
    %v1329 = vsel %vm1323, %v1278, %v1280
    %v1330 = vsel %vm1323, %v1282, %v1284
    %v1331 = vsel %vm1323, %v1284, %v1286
    %v1332 = vsel %vm1323, %v1286, %v1288
    %v1333 = vsel %vm1323, %v1288, %v1290
    %v1334 = vsel %vm1323, %v1290, %v1292
    %v1335 = vsel %vm1323, %v1292, %v1294
    %v1336 = vsel %vm1323, %v1296, %v1298
    %v1337 = vsel %vm1323, %v1298, %v1300
    %v1338 = vsel %vm1323, %v1300, %v1302
    %v1339 = vsel %vm1323, %v1302, %v1304
    %v1340 = vsel %vm1323, %v1304, %v1306
    %v1341 = vsel %vm1323, %v1306, %v1308
    %v1342 = vsel %vm1323, %v1310, %v1312
    %v1343 = vsel %vm1323, %v1312, %v1314
    %v1344 = vsel %vm1323, %v1314, %v1316
    %v1345 = vsel %vm1323, %v1316, %v1318
    %v1346 = vsel %vm1323, %v1318, %v1320
    %v1347 = vsel %vm1323, %v1320, %v1322
    %v1377 = vsel %vm195, %v1266, 0
    %1379 = vmatpush.msra.mxu0 0.0
    %1380 = vmatpush.msra.mxu0 0.0
    %1381 = vmatpush.msra.mxu0 0.0
    %1382 = vmatpush.msra.mxu0 0.0
    %1383 = vmatpush.msra.mxu0 0.0
    %1384 = vmatpush.msra.mxu0 0.0
    %1385 = vmatpush.msra.mxu0 0.0
    %1386 = vmatpush.msra.mxu0 0.0
    %1387 = vmatpush.msra.mxu0 0.0
    %1388 = vmatpush.msra.mxu0 0.0
    %1389 = vmatpush.msra.mxu0 0.0
    %1390 = vmatpush.msra.mxu0 0.0
    %1391 = vmatpush.msra.mxu0 %v1342
    %1392 = vmatpush.msra.mxu0 %v1336
    %1393 = vmatpush.msra.mxu0 %v1330
    %1394 = vmatpush.msra.mxu0 %v1324
    %1395 = vmatmul.f32.gmra.mxu0 %v1377
    %v1396 = vpop.f32.mrf.mxu0
    %v1397 = vadd.f32 0.0, %v1396
    %1398 = vdwg.mxu0
    %1399 = vmatpush.msra.mxu0 0.0
    %1400 = vmatpush.msra.mxu0 0.0
    %1401 = vmatpush.msra.mxu0 0.0
    %1402 = vmatpush.msra.mxu0 0.0
    %1403 = vmatpush.msra.mxu0 0.0
    %1404 = vmatpush.msra.mxu0 0.0
    %1405 = vmatpush.msra.mxu0 0.0
    %1406 = vmatpush.msra.mxu0 0.0
    %1407 = vmatpush.msra.mxu0 0.0
    %1408 = vmatpush.msra.mxu0 0.0
    %1409 = vmatpush.msra.mxu0 0.0
    %1410 = vmatpush.msra.mxu0 0.0
    %1411 = vmatpush.msra.mxu0 %v1343
    %1412 = vmatpush.msra.mxu0 %v1337
    %1413 = vmatpush.msra.mxu0 %v1331
    %1414 = vmatpush.msra.mxu0 %v1325
    %1415 = vmatmul.f32.gmra.mxu0 %v1377
    %v1416 = vpop.f32.mrf.mxu0
    %v1417 = vadd.f32 0.0, %v1416
    %1418 = vdwg.mxu0
    %1419 = vmatpush.msra.mxu0 0.0
    %1420 = vmatpush.msra.mxu0 0.0
    %1421 = vmatpush.msra.mxu0 0.0
    %1422 = vmatpush.msra.mxu0 0.0
    %1423 = vmatpush.msra.mxu0 0.0
    %1424 = vmatpush.msra.mxu0 0.0
    %1425 = vmatpush.msra.mxu0 0.0
    %1426 = vmatpush.msra.mxu0 0.0
    %1427 = vmatpush.msra.mxu0 0.0
    %1428 = vmatpush.msra.mxu0 0.0
    %1429 = vmatpush.msra.mxu0 0.0
    %1430 = vmatpush.msra.mxu0 0.0
    %1431 = vmatpush.msra.mxu0 %v1344
    %1432 = vmatpush.msra.mxu0 %v1338
    %1433 = vmatpush.msra.mxu0 %v1332
    %1434 = vmatpush.msra.mxu0 %v1326
    %1435 = vmatmul.f32.gmra.mxu0 %v1377
    %v1436 = vpop.f32.mrf.mxu0
    %v1437 = vadd.f32 0.0, %v1436
    %1438 = vdwg.mxu0
    %1439 = vmatpush.msra.mxu0 0.0
    %1440 = vmatpush.msra.mxu0 0.0
    %1441 = vmatpush.msra.mxu0 0.0
    %1442 = vmatpush.msra.mxu0 0.0
    %1443 = vmatpush.msra.mxu0 0.0
    %1444 = vmatpush.msra.mxu0 0.0
    %1445 = vmatpush.msra.mxu0 0.0
    %1446 = vmatpush.msra.mxu0 0.0
    %1447 = vmatpush.msra.mxu0 0.0
    %1448 = vmatpush.msra.mxu0 0.0
    %1449 = vmatpush.msra.mxu0 0.0
    %1450 = vmatpush.msra.mxu0 0.0
    %1451 = vmatpush.msra.mxu0 %v1345
    %1452 = vmatpush.msra.mxu0 %v1339
    %1453 = vmatpush.msra.mxu0 %v1333
    %1454 = vmatpush.msra.mxu0 %v1327
    %1455 = vmatmul.f32.gmra.mxu0 %v1377
    %v1456 = vpop.f32.mrf.mxu0
    %v1457 = vadd.f32 0.0, %v1456
    %1458 = vdwg.mxu0
    %1459 = vmatpush.msra.mxu0 0.0
    %1460 = vmatpush.msra.mxu0 0.0
    %1461 = vmatpush.msra.mxu0 0.0
    %1462 = vmatpush.msra.mxu0 0.0
    %1463 = vmatpush.msra.mxu0 0.0
    %1464 = vmatpush.msra.mxu0 0.0
    %1465 = vmatpush.msra.mxu0 0.0
    %1466 = vmatpush.msra.mxu0 0.0
    %1467 = vmatpush.msra.mxu0 0.0
    %1468 = vmatpush.msra.mxu0 0.0
    %1469 = vmatpush.msra.mxu0 0.0
    %1470 = vmatpush.msra.mxu0 0.0
    %1471 = vmatpush.msra.mxu0 %v1346
    %1472 = vmatpush.msra.mxu0 %v1340
    %1473 = vmatpush.msra.mxu0 %v1334
    %1474 = vmatpush.msra.mxu0 %v1328
    %1475 = vmatmul.f32.gmra.mxu0 %v1377
    %v1476 = vpop.f32.mrf.mxu0
    %v1477 = vadd.f32 0.0, %v1476
    %1478 = vdwg.mxu0
    %1479 = vmatpush.msra.mxu0 0.0
    %1480 = vmatpush.msra.mxu0 0.0
    %1481 = vmatpush.msra.mxu0 0.0
    %1482 = vmatpush.msra.mxu0 0.0
    %1483 = vmatpush.msra.mxu0 0.0
    %1484 = vmatpush.msra.mxu0 0.0
    %1485 = vmatpush.msra.mxu0 0.0
    %1486 = vmatpush.msra.mxu0 0.0
    %1487 = vmatpush.msra.mxu0 0.0
    %1488 = vmatpush.msra.mxu0 0.0
    %1489 = vmatpush.msra.mxu0 0.0
    %1490 = vmatpush.msra.mxu0 0.0
    %1491 = vmatpush.msra.mxu0 %v1347
    %1492 = vmatpush.msra.mxu0 %v1341
    %1493 = vmatpush.msra.mxu0 %v1335
    %1494 = vmatpush.msra.mxu0 %v1329
    %1495 = vmatmul.f32.gmra.mxu0 %v1377
    %v1496 = vpop.f32.mrf.mxu0
    %v1497 = vadd.f32 0.0, %v1496
    %1498 = vdwg.mxu0
    %1499 = vmatpush.msra.mxu0 0.0
    %1500 = vmatpush.msra.mxu0 0.0
    %1501 = vmatpush.msra.mxu0 0.0
    %1502 = vmatpush.msra.mxu0 0.0
    %1503 = vmatpush.msra.mxu0 0.0
    %1504 = vmatpush.msra.mxu0 0.0
    %1505 = vmatpush.msra.mxu0 0.0
    %1506 = vmatpush.msra.mxu0 0.0
    %1507 = vmatpush.msra.mxu0 0.0
    %1508 = vmatpush.msra.mxu0 0.0
    %1509 = vmatpush.msra.mxu0 0.0
    %1510 = vmatpush.msra.mxu0 0.0
    %1511 = vmatpush.msra.mxu0 %v1322
    %1512 = vmatpush.msra.mxu0 %v1308
    %1513 = vmatpush.msra.mxu0 %v1294
    %1514 = vmatpush.msra.mxu0 %v1280
    %1515 = vmatmul.f32.gmra.mxu0 %v1377
    %v1516 = vpop.f32.mrf.mxu0
    %v1517 = vadd.f32 0.0, %v1516
    %1518 = vdwg.mxu0
    %v1519 = vadd.f32 %v1258, %v1397
    %v1520 = vadd.f32 %v1259, %v1417
    %v1521 = vadd.f32 %v1260, %v1437
    %v1522 = vadd.f32 %v1261, %v1457
    %v1523 = vadd.f32 %v1262, %v1477
    %v1524 = vadd.f32 %v1263, %v1497
    %v1525 = vadd.f32 %v1264, %v1517
    %s1526 = scalar_lea.vmem %s1, 12
    %v1527 = vld [vmem:[%s1526] sm:$0x3]
    %1528 = vrot.lane.b32.xlu0 %v27, 107
    %v1529 = vpop.permute.xlu0 %1528
    %1530 = vrot.lane.b32.xlu0 %v28, 107
    %v1531 = vpop.permute.xlu0 %1530
    %1532 = vrot.lane.b32.xlu0 %v29, 107
    %v1533 = vpop.permute.xlu0 %1532
    %1534 = vrot.lane.b32.xlu0 %v30, 107
    %v1535 = vpop.permute.xlu0 %1534
    %1536 = vrot.lane.b32.xlu0 %v31, 107
    %v1537 = vpop.permute.xlu0 %1536
    %1538 = vrot.lane.b32.xlu0 %v32, 107
    %v1539 = vpop.permute.xlu0 %1538
    %1540 = vrot.lane.b32.xlu0 %v33, 107
    %v1541 = vpop.permute.xlu0 %1540
    %1542 = vrot.lane.b32.xlu0 %v34, 107
    %v1543 = vpop.permute.xlu0 %1542
    %1544 = vrot.lane.b32.xlu0 %v35, 107
    %v1545 = vpop.permute.xlu0 %1544
    %1546 = vrot.lane.b32.xlu0 %v36, 107
    %v1547 = vpop.permute.xlu0 %1546
    %1548 = vrot.lane.b32.xlu0 %v37, 107
    %v1549 = vpop.permute.xlu0 %1548
    %1550 = vrot.lane.b32.xlu0 %v38, 107
    %v1551 = vpop.permute.xlu0 %1550
    %1552 = vrot.lane.b32.xlu0 %v39, 107
    %v1553 = vpop.permute.xlu0 %1552
    %1554 = vrot.lane.b32.xlu0 %v40, 107
    %v1555 = vpop.permute.xlu0 %1554
    %1556 = vrot.lane.b32.xlu0 %v41, 107
    %v1557 = vpop.permute.xlu0 %1556
    %1558 = vrot.lane.b32.xlu0 %v42, 107
    %v1559 = vpop.permute.xlu0 %1558
    %1560 = vrot.lane.b32.xlu0 %v43, 107
    %v1561 = vpop.permute.xlu0 %1560
    %1562 = vrot.lane.b32.xlu0 %v44, 107
    %v1563 = vpop.permute.xlu0 %1562
    %1564 = vrot.lane.b32.xlu0 %v45, 107
    %v1565 = vpop.permute.xlu0 %1564
    %1566 = vrot.lane.b32.xlu0 %v46, 107
    %v1567 = vpop.permute.xlu0 %1566
    %1568 = vrot.lane.b32.xlu0 %v47, 107
    %v1569 = vpop.permute.xlu0 %1568
    %1570 = vrot.lane.b32.xlu0 %v48, 107
    %v1571 = vpop.permute.xlu0 %1570
    %1572 = vrot.lane.b32.xlu0 %v49, 107
    %v1573 = vpop.permute.xlu0 %1572
    %1574 = vrot.lane.b32.xlu0 %v50, 107
    %v1575 = vpop.permute.xlu0 %1574
    %1576 = vrot.lane.b32.xlu0 %v51, 107
    %v1577 = vpop.permute.xlu0 %1576
    %1578 = vrot.lane.b32.xlu0 %v52, 107
    %v1579 = vpop.permute.xlu0 %1578
    %1580 = vrot.lane.b32.xlu0 %v53, 107
    %v1581 = vpop.permute.xlu0 %1580
    %1582 = vrot.lane.b32.xlu0 %v54, 107
    %v1583 = vpop.permute.xlu0 %1582
    %vm1584 = vcmask 875520
    %v1585 = vsel %vm1584, %v1529, %v1531
    %v1586 = vsel %vm1584, %v1531, %v1533
    %v1587 = vsel %vm1584, %v1533, %v1535
    %v1588 = vsel %vm1584, %v1535, %v1537
    %v1589 = vsel %vm1584, %v1537, %v1539
    %v1590 = vsel %vm1584, %v1539, %v1541
    %v1591 = vsel %vm1584, %v1543, %v1545
    %v1592 = vsel %vm1584, %v1545, %v1547
    %v1593 = vsel %vm1584, %v1547, %v1549
    %v1594 = vsel %vm1584, %v1549, %v1551
    %v1595 = vsel %vm1584, %v1551, %v1553
    %v1596 = vsel %vm1584, %v1553, %v1555
    %v1597 = vsel %vm1584, %v1557, %v1559
    %v1598 = vsel %vm1584, %v1559, %v1561
    %v1599 = vsel %vm1584, %v1561, %v1563
    %v1600 = vsel %vm1584, %v1563, %v1565
    %v1601 = vsel %vm1584, %v1565, %v1567
    %v1602 = vsel %vm1584, %v1567, %v1569
    %v1603 = vsel %vm1584, %v1571, %v1573
    %v1604 = vsel %vm1584, %v1573, %v1575
    %v1605 = vsel %vm1584, %v1575, %v1577
    %v1606 = vsel %vm1584, %v1577, %v1579
    %v1607 = vsel %vm1584, %v1579, %v1581
    %v1608 = vsel %vm1584, %v1581, %v1583
    %v1638 = vsel %vm195, %v1527, 0
    %1640 = vmatpush.msra.mxu0 0.0
    %1641 = vmatpush.msra.mxu0 0.0
    %1642 = vmatpush.msra.mxu0 0.0
    %1643 = vmatpush.msra.mxu0 0.0
    %1644 = vmatpush.msra.mxu0 0.0
    %1645 = vmatpush.msra.mxu0 0.0
    %1646 = vmatpush.msra.mxu0 0.0
    %1647 = vmatpush.msra.mxu0 0.0
    %1648 = vmatpush.msra.mxu0 0.0
    %1649 = vmatpush.msra.mxu0 0.0
    %1650 = vmatpush.msra.mxu0 0.0
    %1651 = vmatpush.msra.mxu0 0.0
    %1652 = vmatpush.msra.mxu0 %v1603
    %1653 = vmatpush.msra.mxu0 %v1597
    %1654 = vmatpush.msra.mxu0 %v1591
    %1655 = vmatpush.msra.mxu0 %v1585
    %1656 = vmatmul.f32.gmra.mxu0 %v1638
    %v1657 = vpop.f32.mrf.mxu0
    %v1658 = vadd.f32 0.0, %v1657
    %1659 = vdwg.mxu0
    %1660 = vmatpush.msra.mxu0 0.0
    %1661 = vmatpush.msra.mxu0 0.0
    %1662 = vmatpush.msra.mxu0 0.0
    %1663 = vmatpush.msra.mxu0 0.0
    %1664 = vmatpush.msra.mxu0 0.0
    %1665 = vmatpush.msra.mxu0 0.0
    %1666 = vmatpush.msra.mxu0 0.0
    %1667 = vmatpush.msra.mxu0 0.0
    %1668 = vmatpush.msra.mxu0 0.0
    %1669 = vmatpush.msra.mxu0 0.0
    %1670 = vmatpush.msra.mxu0 0.0
    %1671 = vmatpush.msra.mxu0 0.0
    %1672 = vmatpush.msra.mxu0 %v1604
    %1673 = vmatpush.msra.mxu0 %v1598
    %1674 = vmatpush.msra.mxu0 %v1592
    %1675 = vmatpush.msra.mxu0 %v1586
    %1676 = vmatmul.f32.gmra.mxu0 %v1638
    %v1677 = vpop.f32.mrf.mxu0
    %v1678 = vadd.f32 0.0, %v1677
    %1679 = vdwg.mxu0
    %1680 = vmatpush.msra.mxu0 0.0
    %1681 = vmatpush.msra.mxu0 0.0
    %1682 = vmatpush.msra.mxu0 0.0
    %1683 = vmatpush.msra.mxu0 0.0
    %1684 = vmatpush.msra.mxu0 0.0
    %1685 = vmatpush.msra.mxu0 0.0
    %1686 = vmatpush.msra.mxu0 0.0
    %1687 = vmatpush.msra.mxu0 0.0
    %1688 = vmatpush.msra.mxu0 0.0
    %1689 = vmatpush.msra.mxu0 0.0
    %1690 = vmatpush.msra.mxu0 0.0
    %1691 = vmatpush.msra.mxu0 0.0
    %1692 = vmatpush.msra.mxu0 %v1605
    %1693 = vmatpush.msra.mxu0 %v1599
    %1694 = vmatpush.msra.mxu0 %v1593
    %1695 = vmatpush.msra.mxu0 %v1587
    %1696 = vmatmul.f32.gmra.mxu0 %v1638
    %v1697 = vpop.f32.mrf.mxu0
    %v1698 = vadd.f32 0.0, %v1697
    %1699 = vdwg.mxu0
    %1700 = vmatpush.msra.mxu0 0.0
    %1701 = vmatpush.msra.mxu0 0.0
    %1702 = vmatpush.msra.mxu0 0.0
    %1703 = vmatpush.msra.mxu0 0.0
    %1704 = vmatpush.msra.mxu0 0.0
    %1705 = vmatpush.msra.mxu0 0.0
    %1706 = vmatpush.msra.mxu0 0.0
    %1707 = vmatpush.msra.mxu0 0.0
    %1708 = vmatpush.msra.mxu0 0.0
    %1709 = vmatpush.msra.mxu0 0.0
    %1710 = vmatpush.msra.mxu0 0.0
    %1711 = vmatpush.msra.mxu0 0.0
    %1712 = vmatpush.msra.mxu0 %v1606
    %1713 = vmatpush.msra.mxu0 %v1600
    %1714 = vmatpush.msra.mxu0 %v1594
    %1715 = vmatpush.msra.mxu0 %v1588
    %1716 = vmatmul.f32.gmra.mxu0 %v1638
    %v1717 = vpop.f32.mrf.mxu0
    %v1718 = vadd.f32 0.0, %v1717
    %1719 = vdwg.mxu0
    %1720 = vmatpush.msra.mxu0 0.0
    %1721 = vmatpush.msra.mxu0 0.0
    %1722 = vmatpush.msra.mxu0 0.0
    %1723 = vmatpush.msra.mxu0 0.0
    %1724 = vmatpush.msra.mxu0 0.0
    %1725 = vmatpush.msra.mxu0 0.0
    %1726 = vmatpush.msra.mxu0 0.0
    %1727 = vmatpush.msra.mxu0 0.0
    %1728 = vmatpush.msra.mxu0 0.0
    %1729 = vmatpush.msra.mxu0 0.0
    %1730 = vmatpush.msra.mxu0 0.0
    %1731 = vmatpush.msra.mxu0 0.0
    %1732 = vmatpush.msra.mxu0 %v1607
    %1733 = vmatpush.msra.mxu0 %v1601
    %1734 = vmatpush.msra.mxu0 %v1595
    %1735 = vmatpush.msra.mxu0 %v1589
    %1736 = vmatmul.f32.gmra.mxu0 %v1638
    %v1737 = vpop.f32.mrf.mxu0
    %v1738 = vadd.f32 0.0, %v1737
    %1739 = vdwg.mxu0
    %1740 = vmatpush.msra.mxu0 0.0
    %1741 = vmatpush.msra.mxu0 0.0
    %1742 = vmatpush.msra.mxu0 0.0
    %1743 = vmatpush.msra.mxu0 0.0
    %1744 = vmatpush.msra.mxu0 0.0
    %1745 = vmatpush.msra.mxu0 0.0
    %1746 = vmatpush.msra.mxu0 0.0
    %1747 = vmatpush.msra.mxu0 0.0
    %1748 = vmatpush.msra.mxu0 0.0
    %1749 = vmatpush.msra.mxu0 0.0
    %1750 = vmatpush.msra.mxu0 0.0
    %1751 = vmatpush.msra.mxu0 0.0
    %1752 = vmatpush.msra.mxu0 %v1608
    %1753 = vmatpush.msra.mxu0 %v1602
    %1754 = vmatpush.msra.mxu0 %v1596
    %1755 = vmatpush.msra.mxu0 %v1590
    %1756 = vmatmul.f32.gmra.mxu0 %v1638
    %v1757 = vpop.f32.mrf.mxu0
    %v1758 = vadd.f32 0.0, %v1757
    %1759 = vdwg.mxu0
    %1760 = vmatpush.msra.mxu0 0.0
    %1761 = vmatpush.msra.mxu0 0.0
    %1762 = vmatpush.msra.mxu0 0.0
    %1763 = vmatpush.msra.mxu0 0.0
    %1764 = vmatpush.msra.mxu0 0.0
    %1765 = vmatpush.msra.mxu0 0.0
    %1766 = vmatpush.msra.mxu0 0.0
    %1767 = vmatpush.msra.mxu0 0.0
    %1768 = vmatpush.msra.mxu0 0.0
    %1769 = vmatpush.msra.mxu0 0.0
    %1770 = vmatpush.msra.mxu0 0.0
    %1771 = vmatpush.msra.mxu0 0.0
    %1772 = vmatpush.msra.mxu0 %v1583
    %1773 = vmatpush.msra.mxu0 %v1569
    %1774 = vmatpush.msra.mxu0 %v1555
    %1775 = vmatpush.msra.mxu0 %v1541
    %1776 = vmatmul.f32.gmra.mxu0 %v1638
    %v1777 = vpop.f32.mrf.mxu0
    %v1778 = vadd.f32 0.0, %v1777
    %1779 = vdwg.mxu0
    %v1780 = vadd.f32 %v1519, %v1658
    %v1781 = vadd.f32 %v1520, %v1678
    %v1782 = vadd.f32 %v1521, %v1698
    %v1783 = vadd.f32 %v1522, %v1718
    %v1784 = vadd.f32 %v1523, %v1738
    %v1785 = vadd.f32 %v1524, %v1758
    %v1786 = vadd.f32 %v1525, %v1778
    %s1787 = scalar_lea.vmem %s1, 14
    %v1788 = vld [vmem:[%s1787] sm:$0x3]
    %1789 = vrot.lane.b32.xlu0 %v27, 106
    %v1790 = vpop.permute.xlu0 %1789
    %1791 = vrot.lane.b32.xlu0 %v28, 106
    %v1792 = vpop.permute.xlu0 %1791
    %1793 = vrot.lane.b32.xlu0 %v29, 106
    %v1794 = vpop.permute.xlu0 %1793
    %1795 = vrot.lane.b32.xlu0 %v30, 106
    %v1796 = vpop.permute.xlu0 %1795
    %1797 = vrot.lane.b32.xlu0 %v31, 106
    %v1798 = vpop.permute.xlu0 %1797
    %1799 = vrot.lane.b32.xlu0 %v32, 106
    %v1800 = vpop.permute.xlu0 %1799
    %1801 = vrot.lane.b32.xlu0 %v33, 106
    %v1802 = vpop.permute.xlu0 %1801
    %1803 = vrot.lane.b32.xlu0 %v34, 106
    %v1804 = vpop.permute.xlu0 %1803
    %1805 = vrot.lane.b32.xlu0 %v35, 106
    %v1806 = vpop.permute.xlu0 %1805
    %1807 = vrot.lane.b32.xlu0 %v36, 106
    %v1808 = vpop.permute.xlu0 %1807
    %1809 = vrot.lane.b32.xlu0 %v37, 106
    %v1810 = vpop.permute.xlu0 %1809
    %1811 = vrot.lane.b32.xlu0 %v38, 106
    %v1812 = vpop.permute.xlu0 %1811
    %1813 = vrot.lane.b32.xlu0 %v39, 106
    %v1814 = vpop.permute.xlu0 %1813
    %1815 = vrot.lane.b32.xlu0 %v40, 106
    %v1816 = vpop.permute.xlu0 %1815
    %1817 = vrot.lane.b32.xlu0 %v41, 106
    %v1818 = vpop.permute.xlu0 %1817
    %1819 = vrot.lane.b32.xlu0 %v42, 106
    %v1820 = vpop.permute.xlu0 %1819
    %1821 = vrot.lane.b32.xlu0 %v43, 106
    %v1822 = vpop.permute.xlu0 %1821
    %1823 = vrot.lane.b32.xlu0 %v44, 106
    %v1824 = vpop.permute.xlu0 %1823
    %1825 = vrot.lane.b32.xlu0 %v45, 106
    %v1826 = vpop.permute.xlu0 %1825
    %1827 = vrot.lane.b32.xlu0 %v46, 106
    %v1828 = vpop.permute.xlu0 %1827
    %1829 = vrot.lane.b32.xlu0 %v47, 106
    %v1830 = vpop.permute.xlu0 %1829
    %1831 = vrot.lane.b32.xlu0 %v48, 106
    %v1832 = vpop.permute.xlu0 %1831
    %1833 = vrot.lane.b32.xlu0 %v49, 106
    %v1834 = vpop.permute.xlu0 %1833
    %1835 = vrot.lane.b32.xlu0 %v50, 106
    %v1836 = vpop.permute.xlu0 %1835
    %1837 = vrot.lane.b32.xlu0 %v51, 106
    %v1838 = vpop.permute.xlu0 %1837
    %1839 = vrot.lane.b32.xlu0 %v52, 106
    %v1840 = vpop.permute.xlu0 %1839
    %1841 = vrot.lane.b32.xlu0 %v53, 106
    %v1842 = vpop.permute.xlu0 %1841
    %1843 = vrot.lane.b32.xlu0 %v54, 106
    %v1844 = vpop.permute.xlu0 %1843
    %vm1845 = vcmask 867328
    %v1846 = vsel %vm1845, %v1790, %v1792
    %v1847 = vsel %vm1845, %v1792, %v1794
    %v1848 = vsel %vm1845, %v1794, %v1796
    %v1849 = vsel %vm1845, %v1796, %v1798
    %v1850 = vsel %vm1845, %v1798, %v1800
    %v1851 = vsel %vm1845, %v1800, %v1802
    %v1852 = vsel %vm1845, %v1804, %v1806
    %v1853 = vsel %vm1845, %v1806, %v1808
    %v1854 = vsel %vm1845, %v1808, %v1810
    %v1855 = vsel %vm1845, %v1810, %v1812
    %v1856 = vsel %vm1845, %v1812, %v1814
    %v1857 = vsel %vm1845, %v1814, %v1816
    %v1858 = vsel %vm1845, %v1818, %v1820
    %v1859 = vsel %vm1845, %v1820, %v1822
    %v1860 = vsel %vm1845, %v1822, %v1824
    %v1861 = vsel %vm1845, %v1824, %v1826
    %v1862 = vsel %vm1845, %v1826, %v1828
    %v1863 = vsel %vm1845, %v1828, %v1830
    %v1864 = vsel %vm1845, %v1832, %v1834
    %v1865 = vsel %vm1845, %v1834, %v1836
    %v1866 = vsel %vm1845, %v1836, %v1838
    %v1867 = vsel %vm1845, %v1838, %v1840
    %v1868 = vsel %vm1845, %v1840, %v1842
    %v1869 = vsel %vm1845, %v1842, %v1844
    %v1899 = vsel %vm195, %v1788, 0
    %1901 = vmatpush.msra.mxu0 0.0
    %1902 = vmatpush.msra.mxu0 0.0
    %1903 = vmatpush.msra.mxu0 0.0
    %1904 = vmatpush.msra.mxu0 0.0
    %1905 = vmatpush.msra.mxu0 0.0
    %1906 = vmatpush.msra.mxu0 0.0
    %1907 = vmatpush.msra.mxu0 0.0
    %1908 = vmatpush.msra.mxu0 0.0
    %1909 = vmatpush.msra.mxu0 0.0
    %1910 = vmatpush.msra.mxu0 0.0
    %1911 = vmatpush.msra.mxu0 0.0
    %1912 = vmatpush.msra.mxu0 0.0
    %1913 = vmatpush.msra.mxu0 %v1864
    %1914 = vmatpush.msra.mxu0 %v1858
    %1915 = vmatpush.msra.mxu0 %v1852
    %1916 = vmatpush.msra.mxu0 %v1846
    %1917 = vmatmul.f32.gmra.mxu0 %v1899
    %v1918 = vpop.f32.mrf.mxu0
    %v1919 = vadd.f32 0.0, %v1918
    %1920 = vdwg.mxu0
    %1921 = vmatpush.msra.mxu0 0.0
    %1922 = vmatpush.msra.mxu0 0.0
    %1923 = vmatpush.msra.mxu0 0.0
    %1924 = vmatpush.msra.mxu0 0.0
    %1925 = vmatpush.msra.mxu0 0.0
    %1926 = vmatpush.msra.mxu0 0.0
    %1927 = vmatpush.msra.mxu0 0.0
    %1928 = vmatpush.msra.mxu0 0.0
    %1929 = vmatpush.msra.mxu0 0.0
    %1930 = vmatpush.msra.mxu0 0.0
    %1931 = vmatpush.msra.mxu0 0.0
    %1932 = vmatpush.msra.mxu0 0.0
    %1933 = vmatpush.msra.mxu0 %v1865
    %1934 = vmatpush.msra.mxu0 %v1859
    %1935 = vmatpush.msra.mxu0 %v1853
    %1936 = vmatpush.msra.mxu0 %v1847
    %1937 = vmatmul.f32.gmra.mxu0 %v1899
    %v1938 = vpop.f32.mrf.mxu0
    %v1939 = vadd.f32 0.0, %v1938
    %1940 = vdwg.mxu0
    %1941 = vmatpush.msra.mxu0 0.0
    %1942 = vmatpush.msra.mxu0 0.0
    %1943 = vmatpush.msra.mxu0 0.0
    %1944 = vmatpush.msra.mxu0 0.0
    %1945 = vmatpush.msra.mxu0 0.0
    %1946 = vmatpush.msra.mxu0 0.0
    %1947 = vmatpush.msra.mxu0 0.0
    %1948 = vmatpush.msra.mxu0 0.0
    %1949 = vmatpush.msra.mxu0 0.0
    %1950 = vmatpush.msra.mxu0 0.0
    %1951 = vmatpush.msra.mxu0 0.0
    %1952 = vmatpush.msra.mxu0 0.0
    %1953 = vmatpush.msra.mxu0 %v1866
    %1954 = vmatpush.msra.mxu0 %v1860
    %1955 = vmatpush.msra.mxu0 %v1854
    %1956 = vmatpush.msra.mxu0 %v1848
    %1957 = vmatmul.f32.gmra.mxu0 %v1899
    %v1958 = vpop.f32.mrf.mxu0
    %v1959 = vadd.f32 0.0, %v1958
    %1960 = vdwg.mxu0
    %1961 = vmatpush.msra.mxu0 0.0
    %1962 = vmatpush.msra.mxu0 0.0
    %1963 = vmatpush.msra.mxu0 0.0
    %1964 = vmatpush.msra.mxu0 0.0
    %1965 = vmatpush.msra.mxu0 0.0
    %1966 = vmatpush.msra.mxu0 0.0
    %1967 = vmatpush.msra.mxu0 0.0
    %1968 = vmatpush.msra.mxu0 0.0
    %1969 = vmatpush.msra.mxu0 0.0
    %1970 = vmatpush.msra.mxu0 0.0
    %1971 = vmatpush.msra.mxu0 0.0
    %1972 = vmatpush.msra.mxu0 0.0
    %1973 = vmatpush.msra.mxu0 %v1867
    %1974 = vmatpush.msra.mxu0 %v1861
    %1975 = vmatpush.msra.mxu0 %v1855
    %1976 = vmatpush.msra.mxu0 %v1849
    %1977 = vmatmul.f32.gmra.mxu0 %v1899
    %v1978 = vpop.f32.mrf.mxu0
    %v1979 = vadd.f32 0.0, %v1978
    %1980 = vdwg.mxu0
    %1981 = vmatpush.msra.mxu0 0.0
    %1982 = vmatpush.msra.mxu0 0.0
    %1983 = vmatpush.msra.mxu0 0.0
    %1984 = vmatpush.msra.mxu0 0.0
    %1985 = vmatpush.msra.mxu0 0.0
    %1986 = vmatpush.msra.mxu0 0.0
    %1987 = vmatpush.msra.mxu0 0.0
    %1988 = vmatpush.msra.mxu0 0.0
    %1989 = vmatpush.msra.mxu0 0.0
    %1990 = vmatpush.msra.mxu0 0.0
    %1991 = vmatpush.msra.mxu0 0.0
    %1992 = vmatpush.msra.mxu0 0.0
    %1993 = vmatpush.msra.mxu0 %v1868
    %1994 = vmatpush.msra.mxu0 %v1862
    %1995 = vmatpush.msra.mxu0 %v1856
    %1996 = vmatpush.msra.mxu0 %v1850
    %1997 = vmatmul.f32.gmra.mxu0 %v1899
    %v1998 = vpop.f32.mrf.mxu0
    %v1999 = vadd.f32 0.0, %v1998
    %2000 = vdwg.mxu0
    %2001 = vmatpush.msra.mxu0 0.0
    %2002 = vmatpush.msra.mxu0 0.0
    %2003 = vmatpush.msra.mxu0 0.0
    %2004 = vmatpush.msra.mxu0 0.0
    %2005 = vmatpush.msra.mxu0 0.0
    %2006 = vmatpush.msra.mxu0 0.0
    %2007 = vmatpush.msra.mxu0 0.0
    %2008 = vmatpush.msra.mxu0 0.0
    %2009 = vmatpush.msra.mxu0 0.0
    %2010 = vmatpush.msra.mxu0 0.0
    %2011 = vmatpush.msra.mxu0 0.0
    %2012 = vmatpush.msra.mxu0 0.0
    %2013 = vmatpush.msra.mxu0 %v1869
    %2014 = vmatpush.msra.mxu0 %v1863
    %2015 = vmatpush.msra.mxu0 %v1857
    %2016 = vmatpush.msra.mxu0 %v1851
    %2017 = vmatmul.f32.gmra.mxu0 %v1899
    %v2018 = vpop.f32.mrf.mxu0
    %v2019 = vadd.f32 0.0, %v2018
    %2020 = vdwg.mxu0
    %2021 = vmatpush.msra.mxu0 0.0
    %2022 = vmatpush.msra.mxu0 0.0
    %2023 = vmatpush.msra.mxu0 0.0
    %2024 = vmatpush.msra.mxu0 0.0
    %2025 = vmatpush.msra.mxu0 0.0
    %2026 = vmatpush.msra.mxu0 0.0
    %2027 = vmatpush.msra.mxu0 0.0
    %2028 = vmatpush.msra.mxu0 0.0
    %2029 = vmatpush.msra.mxu0 0.0
    %2030 = vmatpush.msra.mxu0 0.0
    %2031 = vmatpush.msra.mxu0 0.0
    %2032 = vmatpush.msra.mxu0 0.0
    %2033 = vmatpush.msra.mxu0 %v1844
    %2034 = vmatpush.msra.mxu0 %v1830
    %2035 = vmatpush.msra.mxu0 %v1816
    %2036 = vmatpush.msra.mxu0 %v1802
    %2037 = vmatmul.f32.gmra.mxu0 %v1899
    %v2038 = vpop.f32.mrf.mxu0
    %v2039 = vadd.f32 0.0, %v2038
    %2040 = vdwg.mxu0
    %v2041 = vadd.f32 %v1780, %v1919
    %v2042 = vadd.f32 %v1781, %v1939
    %v2043 = vadd.f32 %v1782, %v1959
    %v2044 = vadd.f32 %v1783, %v1979
    %v2045 = vadd.f32 %v1784, %v1999
    %v2046 = vadd.f32 %v1785, %v2019
    %v2047 = vadd.f32 %v1786, %v2039
    %s2048 = scalar_lea.vmem %s1, 16
    %v2049 = vld [vmem:[%s2048] sm:$0x3]
    %2050 = vrot.lane.b32.xlu0 %v27, 105
    %v2051 = vpop.permute.xlu0 %2050
    %2052 = vrot.lane.b32.xlu0 %v28, 105
    %v2053 = vpop.permute.xlu0 %2052
    %2054 = vrot.lane.b32.xlu0 %v29, 105
    %v2055 = vpop.permute.xlu0 %2054
    %2056 = vrot.lane.b32.xlu0 %v30, 105
    %v2057 = vpop.permute.xlu0 %2056
    %2058 = vrot.lane.b32.xlu0 %v31, 105
    %v2059 = vpop.permute.xlu0 %2058
    %2060 = vrot.lane.b32.xlu0 %v32, 105
    %v2061 = vpop.permute.xlu0 %2060
    %2062 = vrot.lane.b32.xlu0 %v33, 105
    %v2063 = vpop.permute.xlu0 %2062
    %2064 = vrot.lane.b32.xlu0 %v34, 105
    %v2065 = vpop.permute.xlu0 %2064
    %2066 = vrot.lane.b32.xlu0 %v35, 105
    %v2067 = vpop.permute.xlu0 %2066
    %2068 = vrot.lane.b32.xlu0 %v36, 105
    %v2069 = vpop.permute.xlu0 %2068
    %2070 = vrot.lane.b32.xlu0 %v37, 105
    %v2071 = vpop.permute.xlu0 %2070
    %2072 = vrot.lane.b32.xlu0 %v38, 105
    %v2073 = vpop.permute.xlu0 %2072
    %2074 = vrot.lane.b32.xlu0 %v39, 105
    %v2075 = vpop.permute.xlu0 %2074
    %2076 = vrot.lane.b32.xlu0 %v40, 105
    %v2077 = vpop.permute.xlu0 %2076
    %2078 = vrot.lane.b32.xlu0 %v41, 105
    %v2079 = vpop.permute.xlu0 %2078
    %2080 = vrot.lane.b32.xlu0 %v42, 105
    %v2081 = vpop.permute.xlu0 %2080
    %2082 = vrot.lane.b32.xlu0 %v43, 105
    %v2083 = vpop.permute.xlu0 %2082
    %2084 = vrot.lane.b32.xlu0 %v44, 105
    %v2085 = vpop.permute.xlu0 %2084
    %2086 = vrot.lane.b32.xlu0 %v45, 105
    %v2087 = vpop.permute.xlu0 %2086
    %2088 = vrot.lane.b32.xlu0 %v46, 105
    %v2089 = vpop.permute.xlu0 %2088
    %2090 = vrot.lane.b32.xlu0 %v47, 105
    %v2091 = vpop.permute.xlu0 %2090
    %2092 = vrot.lane.b32.xlu0 %v48, 105
    %v2093 = vpop.permute.xlu0 %2092
    %2094 = vrot.lane.b32.xlu0 %v49, 105
    %v2095 = vpop.permute.xlu0 %2094
    %2096 = vrot.lane.b32.xlu0 %v50, 105
    %v2097 = vpop.permute.xlu0 %2096
    %2098 = vrot.lane.b32.xlu0 %v51, 105
    %v2099 = vpop.permute.xlu0 %2098
    %2100 = vrot.lane.b32.xlu0 %v52, 105
    %v2101 = vpop.permute.xlu0 %2100
    %2102 = vrot.lane.b32.xlu0 %v53, 105
    %v2103 = vpop.permute.xlu0 %2102
    %2104 = vrot.lane.b32.xlu0 %v54, 105
    %v2105 = vpop.permute.xlu0 %2104
    %vm2106 = vcmask 859136
    %v2107 = vsel %vm2106, %v2051, %v2053
    %v2108 = vsel %vm2106, %v2053, %v2055
    %v2109 = vsel %vm2106, %v2055, %v2057
    %v2110 = vsel %vm2106, %v2057, %v2059
    %v2111 = vsel %vm2106, %v2059, %v2061
    %v2112 = vsel %vm2106, %v2061, %v2063
    %v2113 = vsel %vm2106, %v2065, %v2067
    %v2114 = vsel %vm2106, %v2067, %v2069
    %v2115 = vsel %vm2106, %v2069, %v2071
    %v2116 = vsel %vm2106, %v2071, %v2073
    %v2117 = vsel %vm2106, %v2073, %v2075
    %v2118 = vsel %vm2106, %v2075, %v2077
    %v2119 = vsel %vm2106, %v2079, %v2081
    %v2120 = vsel %vm2106, %v2081, %v2083
    %v2121 = vsel %vm2106, %v2083, %v2085
    %v2122 = vsel %vm2106, %v2085, %v2087
    %v2123 = vsel %vm2106, %v2087, %v2089
    %v2124 = vsel %vm2106, %v2089, %v2091
    %v2125 = vsel %vm2106, %v2093, %v2095
    %v2126 = vsel %vm2106, %v2095, %v2097
    %v2127 = vsel %vm2106, %v2097, %v2099
    %v2128 = vsel %vm2106, %v2099, %v2101
    %v2129 = vsel %vm2106, %v2101, %v2103
    %v2130 = vsel %vm2106, %v2103, %v2105
    %v2160 = vsel %vm195, %v2049, 0
    %2162 = vmatpush.msra.mxu0 0.0
    %2163 = vmatpush.msra.mxu0 0.0
    %2164 = vmatpush.msra.mxu0 0.0
    %2165 = vmatpush.msra.mxu0 0.0
    %2166 = vmatpush.msra.mxu0 0.0
    %2167 = vmatpush.msra.mxu0 0.0
    %2168 = vmatpush.msra.mxu0 0.0
    %2169 = vmatpush.msra.mxu0 0.0
    %2170 = vmatpush.msra.mxu0 0.0
    %2171 = vmatpush.msra.mxu0 0.0
    %2172 = vmatpush.msra.mxu0 0.0
    %2173 = vmatpush.msra.mxu0 0.0
    %2174 = vmatpush.msra.mxu0 %v2125
    %2175 = vmatpush.msra.mxu0 %v2119
    %2176 = vmatpush.msra.mxu0 %v2113
    %2177 = vmatpush.msra.mxu0 %v2107
    %2178 = vmatmul.f32.gmra.mxu0 %v2160
    %v2179 = vpop.f32.mrf.mxu0
    %v2180 = vadd.f32 0.0, %v2179
    %2181 = vdwg.mxu0
    %2182 = vmatpush.msra.mxu0 0.0
    %2183 = vmatpush.msra.mxu0 0.0
    %2184 = vmatpush.msra.mxu0 0.0
    %2185 = vmatpush.msra.mxu0 0.0
    %2186 = vmatpush.msra.mxu0 0.0
    %2187 = vmatpush.msra.mxu0 0.0
    %2188 = vmatpush.msra.mxu0 0.0
    %2189 = vmatpush.msra.mxu0 0.0
    %2190 = vmatpush.msra.mxu0 0.0
    %2191 = vmatpush.msra.mxu0 0.0
    %2192 = vmatpush.msra.mxu0 0.0
    %2193 = vmatpush.msra.mxu0 0.0
    %2194 = vmatpush.msra.mxu0 %v2126
    %2195 = vmatpush.msra.mxu0 %v2120
    %2196 = vmatpush.msra.mxu0 %v2114
    %2197 = vmatpush.msra.mxu0 %v2108
    %2198 = vmatmul.f32.gmra.mxu0 %v2160
    %v2199 = vpop.f32.mrf.mxu0
    %v2200 = vadd.f32 0.0, %v2199
    %2201 = vdwg.mxu0
    %2202 = vmatpush.msra.mxu0 0.0
    %2203 = vmatpush.msra.mxu0 0.0
    %2204 = vmatpush.msra.mxu0 0.0
    %2205 = vmatpush.msra.mxu0 0.0
    %2206 = vmatpush.msra.mxu0 0.0
    %2207 = vmatpush.msra.mxu0 0.0
    %2208 = vmatpush.msra.mxu0 0.0
    %2209 = vmatpush.msra.mxu0 0.0
    %2210 = vmatpush.msra.mxu0 0.0
    %2211 = vmatpush.msra.mxu0 0.0
    %2212 = vmatpush.msra.mxu0 0.0
    %2213 = vmatpush.msra.mxu0 0.0
    %2214 = vmatpush.msra.mxu0 %v2127
    %2215 = vmatpush.msra.mxu0 %v2121
    %2216 = vmatpush.msra.mxu0 %v2115
    %2217 = vmatpush.msra.mxu0 %v2109
    %2218 = vmatmul.f32.gmra.mxu0 %v2160
    %v2219 = vpop.f32.mrf.mxu0
    %v2220 = vadd.f32 0.0, %v2219
    %2221 = vdwg.mxu0
    %2222 = vmatpush.msra.mxu0 0.0
    %2223 = vmatpush.msra.mxu0 0.0
    %2224 = vmatpush.msra.mxu0 0.0
    %2225 = vmatpush.msra.mxu0 0.0
    %2226 = vmatpush.msra.mxu0 0.0
    %2227 = vmatpush.msra.mxu0 0.0
    %2228 = vmatpush.msra.mxu0 0.0
    %2229 = vmatpush.msra.mxu0 0.0
    %2230 = vmatpush.msra.mxu0 0.0
    %2231 = vmatpush.msra.mxu0 0.0
    %2232 = vmatpush.msra.mxu0 0.0
    %2233 = vmatpush.msra.mxu0 0.0
    %2234 = vmatpush.msra.mxu0 %v2128
    %2235 = vmatpush.msra.mxu0 %v2122
    %2236 = vmatpush.msra.mxu0 %v2116
    %2237 = vmatpush.msra.mxu0 %v2110
    %2238 = vmatmul.f32.gmra.mxu0 %v2160
    %v2239 = vpop.f32.mrf.mxu0
    %v2240 = vadd.f32 0.0, %v2239
    %2241 = vdwg.mxu0
    %2242 = vmatpush.msra.mxu0 0.0
    %2243 = vmatpush.msra.mxu0 0.0
    %2244 = vmatpush.msra.mxu0 0.0
    %2245 = vmatpush.msra.mxu0 0.0
    %2246 = vmatpush.msra.mxu0 0.0
    %2247 = vmatpush.msra.mxu0 0.0
    %2248 = vmatpush.msra.mxu0 0.0
    %2249 = vmatpush.msra.mxu0 0.0
    %2250 = vmatpush.msra.mxu0 0.0
    %2251 = vmatpush.msra.mxu0 0.0
    %2252 = vmatpush.msra.mxu0 0.0
    %2253 = vmatpush.msra.mxu0 0.0
    %2254 = vmatpush.msra.mxu0 %v2129
    %2255 = vmatpush.msra.mxu0 %v2123
    %2256 = vmatpush.msra.mxu0 %v2117
    %2257 = vmatpush.msra.mxu0 %v2111
    %2258 = vmatmul.f32.gmra.mxu0 %v2160
    %v2259 = vpop.f32.mrf.mxu0
    %v2260 = vadd.f32 0.0, %v2259
    %2261 = vdwg.mxu0
    %2262 = vmatpush.msra.mxu0 0.0
    %2263 = vmatpush.msra.mxu0 0.0
    %2264 = vmatpush.msra.mxu0 0.0
    %2265 = vmatpush.msra.mxu0 0.0
    %2266 = vmatpush.msra.mxu0 0.0
    %2267 = vmatpush.msra.mxu0 0.0
    %2268 = vmatpush.msra.mxu0 0.0
    %2269 = vmatpush.msra.mxu0 0.0
    %2270 = vmatpush.msra.mxu0 0.0
    %2271 = vmatpush.msra.mxu0 0.0
    %2272 = vmatpush.msra.mxu0 0.0
    %2273 = vmatpush.msra.mxu0 0.0
    %2274 = vmatpush.msra.mxu0 %v2130
    %2275 = vmatpush.msra.mxu0 %v2124
    %2276 = vmatpush.msra.mxu0 %v2118
    %2277 = vmatpush.msra.mxu0 %v2112
    %2278 = vmatmul.f32.gmra.mxu0 %v2160
    %v2279 = vpop.f32.mrf.mxu0
    %v2280 = vadd.f32 0.0, %v2279
    %2281 = vdwg.mxu0
    %2282 = vmatpush.msra.mxu0 0.0
    %2283 = vmatpush.msra.mxu0 0.0
    %2284 = vmatpush.msra.mxu0 0.0
    %2285 = vmatpush.msra.mxu0 0.0
    %2286 = vmatpush.msra.mxu0 0.0
    %2287 = vmatpush.msra.mxu0 0.0
    %2288 = vmatpush.msra.mxu0 0.0
    %2289 = vmatpush.msra.mxu0 0.0
    %2290 = vmatpush.msra.mxu0 0.0
    %2291 = vmatpush.msra.mxu0 0.0
    %2292 = vmatpush.msra.mxu0 0.0
    %2293 = vmatpush.msra.mxu0 0.0
    %2294 = vmatpush.msra.mxu0 %v2105
    %2295 = vmatpush.msra.mxu0 %v2091
    %2296 = vmatpush.msra.mxu0 %v2077
    %2297 = vmatpush.msra.mxu0 %v2063
    %2298 = vmatmul.f32.gmra.mxu0 %v2160
    %v2299 = vpop.f32.mrf.mxu0
    %v2300 = vadd.f32 0.0, %v2299
    %2301 = vdwg.mxu0
    %v2302 = vadd.f32 %v2041, %v2180
    %v2303 = vadd.f32 %v2042, %v2200
    %v2304 = vadd.f32 %v2043, %v2220
    %v2305 = vadd.f32 %v2044, %v2240
    %v2306 = vadd.f32 %v2045, %v2260
    %v2307 = vadd.f32 %v2046, %v2280
    %v2308 = vadd.f32 %v2047, %v2300
    %s2309 = scalar_lea.vmem %s1, 18
    %v2310 = vld [vmem:[%s2309] sm:$0x3]
    %2311 = vrot.lane.b32.xlu0 %v27, 104
    %v2312 = vpop.permute.xlu0 %2311
    %2313 = vrot.lane.b32.xlu0 %v28, 104
    %v2314 = vpop.permute.xlu0 %2313
    %2315 = vrot.lane.b32.xlu0 %v29, 104
    %v2316 = vpop.permute.xlu0 %2315
    %2317 = vrot.lane.b32.xlu0 %v30, 104
    %v2318 = vpop.permute.xlu0 %2317
    %2319 = vrot.lane.b32.xlu0 %v31, 104
    %v2320 = vpop.permute.xlu0 %2319
    %2321 = vrot.lane.b32.xlu0 %v32, 104
    %v2322 = vpop.permute.xlu0 %2321
    %2323 = vrot.lane.b32.xlu0 %v33, 104
    %v2324 = vpop.permute.xlu0 %2323
    %2325 = vrot.lane.b32.xlu0 %v34, 104
    %v2326 = vpop.permute.xlu0 %2325
    %2327 = vrot.lane.b32.xlu0 %v35, 104
    %v2328 = vpop.permute.xlu0 %2327
    %2329 = vrot.lane.b32.xlu0 %v36, 104
    %v2330 = vpop.permute.xlu0 %2329
    %2331 = vrot.lane.b32.xlu0 %v37, 104
    %v2332 = vpop.permute.xlu0 %2331
    %2333 = vrot.lane.b32.xlu0 %v38, 104
    %v2334 = vpop.permute.xlu0 %2333
    %2335 = vrot.lane.b32.xlu0 %v39, 104
    %v2336 = vpop.permute.xlu0 %2335
    %2337 = vrot.lane.b32.xlu0 %v40, 104
    %v2338 = vpop.permute.xlu0 %2337
    %2339 = vrot.lane.b32.xlu0 %v41, 104
    %v2340 = vpop.permute.xlu0 %2339
    %2341 = vrot.lane.b32.xlu0 %v42, 104
    %v2342 = vpop.permute.xlu0 %2341
    %2343 = vrot.lane.b32.xlu0 %v43, 104
    %v2344 = vpop.permute.xlu0 %2343
    %2345 = vrot.lane.b32.xlu0 %v44, 104
    %v2346 = vpop.permute.xlu0 %2345
    %2347 = vrot.lane.b32.xlu0 %v45, 104
    %v2348 = vpop.permute.xlu0 %2347
    %2349 = vrot.lane.b32.xlu0 %v46, 104
    %v2350 = vpop.permute.xlu0 %2349
    %2351 = vrot.lane.b32.xlu0 %v47, 104
    %v2352 = vpop.permute.xlu0 %2351
    %2353 = vrot.lane.b32.xlu0 %v48, 104
    %v2354 = vpop.permute.xlu0 %2353
    %2355 = vrot.lane.b32.xlu0 %v49, 104
    %v2356 = vpop.permute.xlu0 %2355
    %2357 = vrot.lane.b32.xlu0 %v50, 104
    %v2358 = vpop.permute.xlu0 %2357
    %2359 = vrot.lane.b32.xlu0 %v51, 104
    %v2360 = vpop.permute.xlu0 %2359
    %2361 = vrot.lane.b32.xlu0 %v52, 104
    %v2362 = vpop.permute.xlu0 %2361
    %2363 = vrot.lane.b32.xlu0 %v53, 104
    %v2364 = vpop.permute.xlu0 %2363
    %2365 = vrot.lane.b32.xlu0 %v54, 104
    %v2366 = vpop.permute.xlu0 %2365
    %vm2367 = vcmask 850944
    %v2368 = vsel %vm2367, %v2312, %v2314
    %v2369 = vsel %vm2367, %v2314, %v2316
    %v2370 = vsel %vm2367, %v2316, %v2318
    %v2371 = vsel %vm2367, %v2318, %v2320
    %v2372 = vsel %vm2367, %v2320, %v2322
    %v2373 = vsel %vm2367, %v2322, %v2324
    %v2374 = vsel %vm2367, %v2326, %v2328
    %v2375 = vsel %vm2367, %v2328, %v2330
    %v2376 = vsel %vm2367, %v2330, %v2332
    %v2377 = vsel %vm2367, %v2332, %v2334
    %v2378 = vsel %vm2367, %v2334, %v2336
    %v2379 = vsel %vm2367, %v2336, %v2338
    %v2380 = vsel %vm2367, %v2340, %v2342
    %v2381 = vsel %vm2367, %v2342, %v2344
    %v2382 = vsel %vm2367, %v2344, %v2346
    %v2383 = vsel %vm2367, %v2346, %v2348
    %v2384 = vsel %vm2367, %v2348, %v2350
    %v2385 = vsel %vm2367, %v2350, %v2352
    %v2386 = vsel %vm2367, %v2354, %v2356
    %v2387 = vsel %vm2367, %v2356, %v2358
    %v2388 = vsel %vm2367, %v2358, %v2360
    %v2389 = vsel %vm2367, %v2360, %v2362
    %v2390 = vsel %vm2367, %v2362, %v2364
    %v2391 = vsel %vm2367, %v2364, %v2366
    %v2421 = vsel %vm195, %v2310, 0
    %2423 = vmatpush.msra.mxu0 0.0
    %2424 = vmatpush.msra.mxu0 0.0
    %2425 = vmatpush.msra.mxu0 0.0
    %2426 = vmatpush.msra.mxu0 0.0
    %2427 = vmatpush.msra.mxu0 0.0
    %2428 = vmatpush.msra.mxu0 0.0
    %2429 = vmatpush.msra.mxu0 0.0
    %2430 = vmatpush.msra.mxu0 0.0
    %2431 = vmatpush.msra.mxu0 0.0
    %2432 = vmatpush.msra.mxu0 0.0
    %2433 = vmatpush.msra.mxu0 0.0
    %2434 = vmatpush.msra.mxu0 0.0
    %2435 = vmatpush.msra.mxu0 %v2386
    %2436 = vmatpush.msra.mxu0 %v2380
    %2437 = vmatpush.msra.mxu0 %v2374
    %2438 = vmatpush.msra.mxu0 %v2368
    %2439 = vmatmul.f32.gmra.mxu0 %v2421
    %v2440 = vpop.f32.mrf.mxu0
    %v2441 = vadd.f32 0.0, %v2440
    %2442 = vdwg.mxu0
    %2443 = vmatpush.msra.mxu0 0.0
    %2444 = vmatpush.msra.mxu0 0.0
    %2445 = vmatpush.msra.mxu0 0.0
    %2446 = vmatpush.msra.mxu0 0.0
    %2447 = vmatpush.msra.mxu0 0.0
    %2448 = vmatpush.msra.mxu0 0.0
    %2449 = vmatpush.msra.mxu0 0.0
    %2450 = vmatpush.msra.mxu0 0.0
    %2451 = vmatpush.msra.mxu0 0.0
    %2452 = vmatpush.msra.mxu0 0.0
    %2453 = vmatpush.msra.mxu0 0.0
    %2454 = vmatpush.msra.mxu0 0.0
    %2455 = vmatpush.msra.mxu0 %v2387
    %2456 = vmatpush.msra.mxu0 %v2381
    %2457 = vmatpush.msra.mxu0 %v2375
    %2458 = vmatpush.msra.mxu0 %v2369
    %2459 = vmatmul.f32.gmra.mxu0 %v2421
    %v2460 = vpop.f32.mrf.mxu0
    %v2461 = vadd.f32 0.0, %v2460
    %2462 = vdwg.mxu0
    %2463 = vmatpush.msra.mxu0 0.0
    %2464 = vmatpush.msra.mxu0 0.0
    %2465 = vmatpush.msra.mxu0 0.0
    %2466 = vmatpush.msra.mxu0 0.0
    %2467 = vmatpush.msra.mxu0 0.0
    %2468 = vmatpush.msra.mxu0 0.0
    %2469 = vmatpush.msra.mxu0 0.0
    %2470 = vmatpush.msra.mxu0 0.0
    %2471 = vmatpush.msra.mxu0 0.0
    %2472 = vmatpush.msra.mxu0 0.0
    %2473 = vmatpush.msra.mxu0 0.0
    %2474 = vmatpush.msra.mxu0 0.0
    %2475 = vmatpush.msra.mxu0 %v2388
    %2476 = vmatpush.msra.mxu0 %v2382
    %2477 = vmatpush.msra.mxu0 %v2376
    %2478 = vmatpush.msra.mxu0 %v2370
    %2479 = vmatmul.f32.gmra.mxu0 %v2421
    %v2480 = vpop.f32.mrf.mxu0
    %v2481 = vadd.f32 0.0, %v2480
    %2482 = vdwg.mxu0
    %2483 = vmatpush.msra.mxu0 0.0
    %2484 = vmatpush.msra.mxu0 0.0
    %2485 = vmatpush.msra.mxu0 0.0
    %2486 = vmatpush.msra.mxu0 0.0
    %2487 = vmatpush.msra.mxu0 0.0
    %2488 = vmatpush.msra.mxu0 0.0
    %2489 = vmatpush.msra.mxu0 0.0
    %2490 = vmatpush.msra.mxu0 0.0
    %2491 = vmatpush.msra.mxu0 0.0
    %2492 = vmatpush.msra.mxu0 0.0
    %2493 = vmatpush.msra.mxu0 0.0
    %2494 = vmatpush.msra.mxu0 0.0
    %2495 = vmatpush.msra.mxu0 %v2389
    %2496 = vmatpush.msra.mxu0 %v2383
    %2497 = vmatpush.msra.mxu0 %v2377
    %2498 = vmatpush.msra.mxu0 %v2371
    %2499 = vmatmul.f32.gmra.mxu0 %v2421
    %v2500 = vpop.f32.mrf.mxu0
    %v2501 = vadd.f32 0.0, %v2500
    %2502 = vdwg.mxu0
    %2503 = vmatpush.msra.mxu0 0.0
    %2504 = vmatpush.msra.mxu0 0.0
    %2505 = vmatpush.msra.mxu0 0.0
    %2506 = vmatpush.msra.mxu0 0.0
    %2507 = vmatpush.msra.mxu0 0.0
    %2508 = vmatpush.msra.mxu0 0.0
    %2509 = vmatpush.msra.mxu0 0.0
    %2510 = vmatpush.msra.mxu0 0.0
    %2511 = vmatpush.msra.mxu0 0.0
    %2512 = vmatpush.msra.mxu0 0.0
    %2513 = vmatpush.msra.mxu0 0.0
    %2514 = vmatpush.msra.mxu0 0.0
    %2515 = vmatpush.msra.mxu0 %v2390
    %2516 = vmatpush.msra.mxu0 %v2384
    %2517 = vmatpush.msra.mxu0 %v2378
    %2518 = vmatpush.msra.mxu0 %v2372
    %2519 = vmatmul.f32.gmra.mxu0 %v2421
    %v2520 = vpop.f32.mrf.mxu0
    %v2521 = vadd.f32 0.0, %v2520
    %2522 = vdwg.mxu0
    %2523 = vmatpush.msra.mxu0 0.0
    %2524 = vmatpush.msra.mxu0 0.0
    %2525 = vmatpush.msra.mxu0 0.0
    %2526 = vmatpush.msra.mxu0 0.0
    %2527 = vmatpush.msra.mxu0 0.0
    %2528 = vmatpush.msra.mxu0 0.0
    %2529 = vmatpush.msra.mxu0 0.0
    %2530 = vmatpush.msra.mxu0 0.0
    %2531 = vmatpush.msra.mxu0 0.0
    %2532 = vmatpush.msra.mxu0 0.0
    %2533 = vmatpush.msra.mxu0 0.0
    %2534 = vmatpush.msra.mxu0 0.0
    %2535 = vmatpush.msra.mxu0 %v2391
    %2536 = vmatpush.msra.mxu0 %v2385
    %2537 = vmatpush.msra.mxu0 %v2379
    %2538 = vmatpush.msra.mxu0 %v2373
    %2539 = vmatmul.f32.gmra.mxu0 %v2421
    %v2540 = vpop.f32.mrf.mxu0
    %v2541 = vadd.f32 0.0, %v2540
    %2542 = vdwg.mxu0
    %2543 = vmatpush.msra.mxu0 0.0
    %2544 = vmatpush.msra.mxu0 0.0
    %2545 = vmatpush.msra.mxu0 0.0
    %2546 = vmatpush.msra.mxu0 0.0
    %2547 = vmatpush.msra.mxu0 0.0
    %2548 = vmatpush.msra.mxu0 0.0
    %2549 = vmatpush.msra.mxu0 0.0
    %2550 = vmatpush.msra.mxu0 0.0
    %2551 = vmatpush.msra.mxu0 0.0
    %2552 = vmatpush.msra.mxu0 0.0
    %2553 = vmatpush.msra.mxu0 0.0
    %2554 = vmatpush.msra.mxu0 0.0
    %2555 = vmatpush.msra.mxu0 %v2366
    %2556 = vmatpush.msra.mxu0 %v2352
    %2557 = vmatpush.msra.mxu0 %v2338
    %2558 = vmatpush.msra.mxu0 %v2324
    %2559 = vmatmul.f32.gmra.mxu0 %v2421
    %v2560 = vpop.f32.mrf.mxu0
    %v2561 = vadd.f32 0.0, %v2560
    %2562 = vdwg.mxu0
    %v2563 = vadd.f32 %v2302, %v2441
    %v2564 = vadd.f32 %v2303, %v2461
    %v2565 = vadd.f32 %v2304, %v2481
    %v2566 = vadd.f32 %v2305, %v2501
    %v2567 = vadd.f32 %v2306, %v2521
    %v2568 = vadd.f32 %v2307, %v2541
    %v2569 = vadd.f32 %v2308, %v2561
    %s2570 = scalar_lea.vmem %s1, 20
    %v2571 = vld [vmem:[%s2570] sm:$0x3]
    %2572 = vrot.lane.b32.xlu0 %v27, 88
    %v2573 = vpop.permute.xlu0 %2572
    %2574 = vrot.lane.b32.xlu0 %v28, 88
    %v2575 = vpop.permute.xlu0 %2574
    %2576 = vrot.lane.b32.xlu0 %v29, 88
    %v2577 = vpop.permute.xlu0 %2576
    %2578 = vrot.lane.b32.xlu0 %v30, 88
    %v2579 = vpop.permute.xlu0 %2578
    %2580 = vrot.lane.b32.xlu0 %v31, 88
    %v2581 = vpop.permute.xlu0 %2580
    %2582 = vrot.lane.b32.xlu0 %v32, 88
    %v2583 = vpop.permute.xlu0 %2582
    %2584 = vrot.lane.b32.xlu0 %v33, 88
    %v2585 = vpop.permute.xlu0 %2584
    %2586 = vrot.lane.b32.xlu0 %v34, 88
    %v2587 = vpop.permute.xlu0 %2586
    %2588 = vrot.lane.b32.xlu0 %v35, 88
    %v2589 = vpop.permute.xlu0 %2588
    %2590 = vrot.lane.b32.xlu0 %v36, 88
    %v2591 = vpop.permute.xlu0 %2590
    %2592 = vrot.lane.b32.xlu0 %v37, 88
    %v2593 = vpop.permute.xlu0 %2592
    %2594 = vrot.lane.b32.xlu0 %v38, 88
    %v2595 = vpop.permute.xlu0 %2594
    %2596 = vrot.lane.b32.xlu0 %v39, 88
    %v2597 = vpop.permute.xlu0 %2596
    %2598 = vrot.lane.b32.xlu0 %v40, 88
    %v2599 = vpop.permute.xlu0 %2598
    %2600 = vrot.lane.b32.xlu0 %v41, 88
    %v2601 = vpop.permute.xlu0 %2600
    %2602 = vrot.lane.b32.xlu0 %v42, 88
    %v2603 = vpop.permute.xlu0 %2602
    %2604 = vrot.lane.b32.xlu0 %v43, 88
    %v2605 = vpop.permute.xlu0 %2604
    %2606 = vrot.lane.b32.xlu0 %v44, 88
    %v2607 = vpop.permute.xlu0 %2606
    %2608 = vrot.lane.b32.xlu0 %v45, 88
    %v2609 = vpop.permute.xlu0 %2608
    %2610 = vrot.lane.b32.xlu0 %v46, 88
    %v2611 = vpop.permute.xlu0 %2610
    %2612 = vrot.lane.b32.xlu0 %v47, 88
    %v2613 = vpop.permute.xlu0 %2612
    %2614 = vrot.lane.b32.xlu0 %v48, 88
    %v2615 = vpop.permute.xlu0 %2614
    %2616 = vrot.lane.b32.xlu0 %v49, 88
    %v2617 = vpop.permute.xlu0 %2616
    %2618 = vrot.lane.b32.xlu0 %v50, 88
    %v2619 = vpop.permute.xlu0 %2618
    %2620 = vrot.lane.b32.xlu0 %v51, 88
    %v2621 = vpop.permute.xlu0 %2620
    %2622 = vrot.lane.b32.xlu0 %v52, 88
    %v2623 = vpop.permute.xlu0 %2622
    %2624 = vrot.lane.b32.xlu0 %v53, 88
    %v2625 = vpop.permute.xlu0 %2624
    %2626 = vrot.lane.b32.xlu0 %v54, 88
    %v2627 = vpop.permute.xlu0 %2626
    %vm2628 = vcmask 719872
    %v2629 = vsel %vm2628, %v2573, %v2575
    %v2630 = vsel %vm2628, %v2575, %v2577
    %v2631 = vsel %vm2628, %v2577, %v2579
    %v2632 = vsel %vm2628, %v2579, %v2581
    %v2633 = vsel %vm2628, %v2581, %v2583
    %v2634 = vsel %vm2628, %v2583, %v2585
    %v2635 = vsel %vm2628, %v2587, %v2589
    %v2636 = vsel %vm2628, %v2589, %v2591
    %v2637 = vsel %vm2628, %v2591, %v2593
    %v2638 = vsel %vm2628, %v2593, %v2595
    %v2639 = vsel %vm2628, %v2595, %v2597
    %v2640 = vsel %vm2628, %v2597, %v2599
    %v2641 = vsel %vm2628, %v2601, %v2603
    %v2642 = vsel %vm2628, %v2603, %v2605
    %v2643 = vsel %vm2628, %v2605, %v2607
    %v2644 = vsel %vm2628, %v2607, %v2609
    %v2645 = vsel %vm2628, %v2609, %v2611
    %v2646 = vsel %vm2628, %v2611, %v2613
    %v2647 = vsel %vm2628, %v2615, %v2617
    %v2648 = vsel %vm2628, %v2617, %v2619
    %v2649 = vsel %vm2628, %v2619, %v2621
    %v2650 = vsel %vm2628, %v2621, %v2623
    %v2651 = vsel %vm2628, %v2623, %v2625
    %v2652 = vsel %vm2628, %v2625, %v2627
    %v2682 = vsel %vm195, %v2571, 0
    %2684 = vmatpush.msra.mxu0 0.0
    %2685 = vmatpush.msra.mxu0 0.0
    %2686 = vmatpush.msra.mxu0 0.0
    %2687 = vmatpush.msra.mxu0 0.0
    %2688 = vmatpush.msra.mxu0 0.0
    %2689 = vmatpush.msra.mxu0 0.0
    %2690 = vmatpush.msra.mxu0 0.0
    %2691 = vmatpush.msra.mxu0 0.0
    %2692 = vmatpush.msra.mxu0 0.0
    %2693 = vmatpush.msra.mxu0 0.0
    %2694 = vmatpush.msra.mxu0 0.0
    %2695 = vmatpush.msra.mxu0 0.0
    %2696 = vmatpush.msra.mxu0 %v2647
    %2697 = vmatpush.msra.mxu0 %v2641
    %2698 = vmatpush.msra.mxu0 %v2635
    %2699 = vmatpush.msra.mxu0 %v2629
    %2700 = vmatmul.f32.gmra.mxu0 %v2682
    %v2701 = vpop.f32.mrf.mxu0
    %v2702 = vadd.f32 0.0, %v2701
    %2703 = vdwg.mxu0
    %2704 = vmatpush.msra.mxu0 0.0
    %2705 = vmatpush.msra.mxu0 0.0
    %2706 = vmatpush.msra.mxu0 0.0
    %2707 = vmatpush.msra.mxu0 0.0
    %2708 = vmatpush.msra.mxu0 0.0
    %2709 = vmatpush.msra.mxu0 0.0
    %2710 = vmatpush.msra.mxu0 0.0
    %2711 = vmatpush.msra.mxu0 0.0
    %2712 = vmatpush.msra.mxu0 0.0
    %2713 = vmatpush.msra.mxu0 0.0
    %2714 = vmatpush.msra.mxu0 0.0
    %2715 = vmatpush.msra.mxu0 0.0
    %2716 = vmatpush.msra.mxu0 %v2648
    %2717 = vmatpush.msra.mxu0 %v2642
    %2718 = vmatpush.msra.mxu0 %v2636
    %2719 = vmatpush.msra.mxu0 %v2630
    %2720 = vmatmul.f32.gmra.mxu0 %v2682
    %v2721 = vpop.f32.mrf.mxu0
    %v2722 = vadd.f32 0.0, %v2721
    %2723 = vdwg.mxu0
    %2724 = vmatpush.msra.mxu0 0.0
    %2725 = vmatpush.msra.mxu0 0.0
    %2726 = vmatpush.msra.mxu0 0.0
    %2727 = vmatpush.msra.mxu0 0.0
    %2728 = vmatpush.msra.mxu0 0.0
    %2729 = vmatpush.msra.mxu0 0.0
    %2730 = vmatpush.msra.mxu0 0.0
    %2731 = vmatpush.msra.mxu0 0.0
    %2732 = vmatpush.msra.mxu0 0.0
    %2733 = vmatpush.msra.mxu0 0.0
    %2734 = vmatpush.msra.mxu0 0.0
    %2735 = vmatpush.msra.mxu0 0.0
    %2736 = vmatpush.msra.mxu0 %v2649
    %2737 = vmatpush.msra.mxu0 %v2643
    %2738 = vmatpush.msra.mxu0 %v2637
    %2739 = vmatpush.msra.mxu0 %v2631
    %2740 = vmatmul.f32.gmra.mxu0 %v2682
    %v2741 = vpop.f32.mrf.mxu0
    %v2742 = vadd.f32 0.0, %v2741
    %2743 = vdwg.mxu0
    %2744 = vmatpush.msra.mxu0 0.0
    %2745 = vmatpush.msra.mxu0 0.0
    %2746 = vmatpush.msra.mxu0 0.0
    %2747 = vmatpush.msra.mxu0 0.0
    %2748 = vmatpush.msra.mxu0 0.0
    %2749 = vmatpush.msra.mxu0 0.0
    %2750 = vmatpush.msra.mxu0 0.0
    %2751 = vmatpush.msra.mxu0 0.0
    %2752 = vmatpush.msra.mxu0 0.0
    %2753 = vmatpush.msra.mxu0 0.0
    %2754 = vmatpush.msra.mxu0 0.0
    %2755 = vmatpush.msra.mxu0 0.0
    %2756 = vmatpush.msra.mxu0 %v2650
    %2757 = vmatpush.msra.mxu0 %v2644
    %2758 = vmatpush.msra.mxu0 %v2638
    %2759 = vmatpush.msra.mxu0 %v2632
    %2760 = vmatmul.f32.gmra.mxu0 %v2682
    %v2761 = vpop.f32.mrf.mxu0
    %v2762 = vadd.f32 0.0, %v2761
    %2763 = vdwg.mxu0
    %2764 = vmatpush.msra.mxu0 0.0
    %2765 = vmatpush.msra.mxu0 0.0
    %2766 = vmatpush.msra.mxu0 0.0
    %2767 = vmatpush.msra.mxu0 0.0
    %2768 = vmatpush.msra.mxu0 0.0
    %2769 = vmatpush.msra.mxu0 0.0
    %2770 = vmatpush.msra.mxu0 0.0
    %2771 = vmatpush.msra.mxu0 0.0
    %2772 = vmatpush.msra.mxu0 0.0
    %2773 = vmatpush.msra.mxu0 0.0
    %2774 = vmatpush.msra.mxu0 0.0
    %2775 = vmatpush.msra.mxu0 0.0
    %2776 = vmatpush.msra.mxu0 %v2651
    %2777 = vmatpush.msra.mxu0 %v2645
    %2778 = vmatpush.msra.mxu0 %v2639
    %2779 = vmatpush.msra.mxu0 %v2633
    %2780 = vmatmul.f32.gmra.mxu0 %v2682
    %v2781 = vpop.f32.mrf.mxu0
    %v2782 = vadd.f32 0.0, %v2781
    %2783 = vdwg.mxu0
    %2784 = vmatpush.msra.mxu0 0.0
    %2785 = vmatpush.msra.mxu0 0.0
    %2786 = vmatpush.msra.mxu0 0.0
    %2787 = vmatpush.msra.mxu0 0.0
    %2788 = vmatpush.msra.mxu0 0.0
    %2789 = vmatpush.msra.mxu0 0.0
    %2790 = vmatpush.msra.mxu0 0.0
    %2791 = vmatpush.msra.mxu0 0.0
    %2792 = vmatpush.msra.mxu0 0.0
    %2793 = vmatpush.msra.mxu0 0.0
    %2794 = vmatpush.msra.mxu0 0.0
    %2795 = vmatpush.msra.mxu0 0.0
    %2796 = vmatpush.msra.mxu0 %v2652
    %2797 = vmatpush.msra.mxu0 %v2646
    %2798 = vmatpush.msra.mxu0 %v2640
    %2799 = vmatpush.msra.mxu0 %v2634
    %2800 = vmatmul.f32.gmra.mxu0 %v2682
    %v2801 = vpop.f32.mrf.mxu0
    %v2802 = vadd.f32 0.0, %v2801
    %2803 = vdwg.mxu0
    %2804 = vmatpush.msra.mxu0 0.0
    %2805 = vmatpush.msra.mxu0 0.0
    %2806 = vmatpush.msra.mxu0 0.0
    %2807 = vmatpush.msra.mxu0 0.0
    %2808 = vmatpush.msra.mxu0 0.0
    %2809 = vmatpush.msra.mxu0 0.0
    %2810 = vmatpush.msra.mxu0 0.0
    %2811 = vmatpush.msra.mxu0 0.0
    %2812 = vmatpush.msra.mxu0 0.0
    %2813 = vmatpush.msra.mxu0 0.0
    %2814 = vmatpush.msra.mxu0 0.0
    %2815 = vmatpush.msra.mxu0 0.0
    %2816 = vmatpush.msra.mxu0 %v2627
    %2817 = vmatpush.msra.mxu0 %v2613
    %2818 = vmatpush.msra.mxu0 %v2599
    %2819 = vmatpush.msra.mxu0 %v2585
    %2820 = vmatmul.f32.gmra.mxu0 %v2682
    %v2821 = vpop.f32.mrf.mxu0
    %v2822 = vadd.f32 0.0, %v2821
    %2823 = vdwg.mxu0
    %v2824 = vadd.f32 %v2563, %v2702
    %v2825 = vadd.f32 %v2564, %v2722
    %v2826 = vadd.f32 %v2565, %v2742
    %v2827 = vadd.f32 %v2566, %v2762
    %v2828 = vadd.f32 %v2567, %v2782
    %v2829 = vadd.f32 %v2568, %v2802
    %v2830 = vadd.f32 %v2569, %v2822
    %s2831 = scalar_lea.vmem %s1, 22
    %v2832 = vld [vmem:[%s2831] sm:$0x3]
    %2833 = vrot.lane.b32.xlu0 %v27, 87
    %v2834 = vpop.permute.xlu0 %2833
    %2835 = vrot.lane.b32.xlu0 %v28, 87
    %v2836 = vpop.permute.xlu0 %2835
    %2837 = vrot.lane.b32.xlu0 %v29, 87
    %v2838 = vpop.permute.xlu0 %2837
    %2839 = vrot.lane.b32.xlu0 %v30, 87
    %v2840 = vpop.permute.xlu0 %2839
    %2841 = vrot.lane.b32.xlu0 %v31, 87
    %v2842 = vpop.permute.xlu0 %2841
    %2843 = vrot.lane.b32.xlu0 %v32, 87
    %v2844 = vpop.permute.xlu0 %2843
    %2845 = vrot.lane.b32.xlu0 %v33, 87
    %v2846 = vpop.permute.xlu0 %2845
    %2847 = vrot.lane.b32.xlu0 %v34, 87
    %v2848 = vpop.permute.xlu0 %2847
    %2849 = vrot.lane.b32.xlu0 %v35, 87
    %v2850 = vpop.permute.xlu0 %2849
    %2851 = vrot.lane.b32.xlu0 %v36, 87
    %v2852 = vpop.permute.xlu0 %2851
    %2853 = vrot.lane.b32.xlu0 %v37, 87
    %v2854 = vpop.permute.xlu0 %2853
    %2855 = vrot.lane.b32.xlu0 %v38, 87
    %v2856 = vpop.permute.xlu0 %2855
    %2857 = vrot.lane.b32.xlu0 %v39, 87
    %v2858 = vpop.permute.xlu0 %2857
    %2859 = vrot.lane.b32.xlu0 %v40, 87
    %v2860 = vpop.permute.xlu0 %2859
    %2861 = vrot.lane.b32.xlu0 %v41, 87
    %v2862 = vpop.permute.xlu0 %2861
    %2863 = vrot.lane.b32.xlu0 %v42, 87
    %v2864 = vpop.permute.xlu0 %2863
    %2865 = vrot.lane.b32.xlu0 %v43, 87
    %v2866 = vpop.permute.xlu0 %2865
    %2867 = vrot.lane.b32.xlu0 %v44, 87
    %v2868 = vpop.permute.xlu0 %2867
    %2869 = vrot.lane.b32.xlu0 %v45, 87
    %v2870 = vpop.permute.xlu0 %2869
    %2871 = vrot.lane.b32.xlu0 %v46, 87
    %v2872 = vpop.permute.xlu0 %2871
    %2873 = vrot.lane.b32.xlu0 %v47, 87
    %v2874 = vpop.permute.xlu0 %2873
    %2875 = vrot.lane.b32.xlu0 %v48, 87
    %v2876 = vpop.permute.xlu0 %2875
    %2877 = vrot.lane.b32.xlu0 %v49, 87
    %v2878 = vpop.permute.xlu0 %2877
    %2879 = vrot.lane.b32.xlu0 %v50, 87
    %v2880 = vpop.permute.xlu0 %2879
    %2881 = vrot.lane.b32.xlu0 %v51, 87
    %v2882 = vpop.permute.xlu0 %2881
    %2883 = vrot.lane.b32.xlu0 %v52, 87
    %v2884 = vpop.permute.xlu0 %2883
    %2885 = vrot.lane.b32.xlu0 %v53, 87
    %v2886 = vpop.permute.xlu0 %2885
    %2887 = vrot.lane.b32.xlu0 %v54, 87
    %v2888 = vpop.permute.xlu0 %2887
    %vm2889 = vcmask 711680
    %v2890 = vsel %vm2889, %v2834, %v2836
    %v2891 = vsel %vm2889, %v2836, %v2838
    %v2892 = vsel %vm2889, %v2838, %v2840
    %v2893 = vsel %vm2889, %v2840, %v2842
    %v2894 = vsel %vm2889, %v2842, %v2844
    %v2895 = vsel %vm2889, %v2844, %v2846
    %v2896 = vsel %vm2889, %v2848, %v2850
    %v2897 = vsel %vm2889, %v2850, %v2852
    %v2898 = vsel %vm2889, %v2852, %v2854
    %v2899 = vsel %vm2889, %v2854, %v2856
    %v2900 = vsel %vm2889, %v2856, %v2858
    %v2901 = vsel %vm2889, %v2858, %v2860
    %v2902 = vsel %vm2889, %v2862, %v2864
    %v2903 = vsel %vm2889, %v2864, %v2866
    %v2904 = vsel %vm2889, %v2866, %v2868
    %v2905 = vsel %vm2889, %v2868, %v2870
    %v2906 = vsel %vm2889, %v2870, %v2872
    %v2907 = vsel %vm2889, %v2872, %v2874
    %v2908 = vsel %vm2889, %v2876, %v2878
    %v2909 = vsel %vm2889, %v2878, %v2880
    %v2910 = vsel %vm2889, %v2880, %v2882
    %v2911 = vsel %vm2889, %v2882, %v2884
    %v2912 = vsel %vm2889, %v2884, %v2886
    %v2913 = vsel %vm2889, %v2886, %v2888
    %v2943 = vsel %vm195, %v2832, 0
    %2945 = vmatpush.msra.mxu0 0.0
    %2946 = vmatpush.msra.mxu0 0.0
    %2947 = vmatpush.msra.mxu0 0.0
    %2948 = vmatpush.msra.mxu0 0.0
    %2949 = vmatpush.msra.mxu0 0.0
    %2950 = vmatpush.msra.mxu0 0.0
    %2951 = vmatpush.msra.mxu0 0.0
    %2952 = vmatpush.msra.mxu0 0.0
    %2953 = vmatpush.msra.mxu0 0.0
    %2954 = vmatpush.msra.mxu0 0.0
    %2955 = vmatpush.msra.mxu0 0.0
    %2956 = vmatpush.msra.mxu0 0.0
    %2957 = vmatpush.msra.mxu0 %v2908
    %2958 = vmatpush.msra.mxu0 %v2902
    %2959 = vmatpush.msra.mxu0 %v2896
    %2960 = vmatpush.msra.mxu0 %v2890
    %2961 = vmatmul.f32.gmra.mxu0 %v2943
    %v2962 = vpop.f32.mrf.mxu0
    %v2963 = vadd.f32 0.0, %v2962
    %2964 = vdwg.mxu0
    %2965 = vmatpush.msra.mxu0 0.0
    %2966 = vmatpush.msra.mxu0 0.0
    %2967 = vmatpush.msra.mxu0 0.0
    %2968 = vmatpush.msra.mxu0 0.0
    %2969 = vmatpush.msra.mxu0 0.0
    %2970 = vmatpush.msra.mxu0 0.0
    %2971 = vmatpush.msra.mxu0 0.0
    %2972 = vmatpush.msra.mxu0 0.0
    %2973 = vmatpush.msra.mxu0 0.0
    %2974 = vmatpush.msra.mxu0 0.0
    %2975 = vmatpush.msra.mxu0 0.0
    %2976 = vmatpush.msra.mxu0 0.0
    %2977 = vmatpush.msra.mxu0 %v2909
    %2978 = vmatpush.msra.mxu0 %v2903
    %2979 = vmatpush.msra.mxu0 %v2897
    %2980 = vmatpush.msra.mxu0 %v2891
    %2981 = vmatmul.f32.gmra.mxu0 %v2943
    %v2982 = vpop.f32.mrf.mxu0
    %v2983 = vadd.f32 0.0, %v2982
    %2984 = vdwg.mxu0
    %2985 = vmatpush.msra.mxu0 0.0
    %2986 = vmatpush.msra.mxu0 0.0
    %2987 = vmatpush.msra.mxu0 0.0
    %2988 = vmatpush.msra.mxu0 0.0
    %2989 = vmatpush.msra.mxu0 0.0
    %2990 = vmatpush.msra.mxu0 0.0
    %2991 = vmatpush.msra.mxu0 0.0
    %2992 = vmatpush.msra.mxu0 0.0
    %2993 = vmatpush.msra.mxu0 0.0
    %2994 = vmatpush.msra.mxu0 0.0
    %2995 = vmatpush.msra.mxu0 0.0
    %2996 = vmatpush.msra.mxu0 0.0
    %2997 = vmatpush.msra.mxu0 %v2910
    %2998 = vmatpush.msra.mxu0 %v2904
    %2999 = vmatpush.msra.mxu0 %v2898
    %3000 = vmatpush.msra.mxu0 %v2892
    %3001 = vmatmul.f32.gmra.mxu0 %v2943
    %v3002 = vpop.f32.mrf.mxu0
    %v3003 = vadd.f32 0.0, %v3002
    %3004 = vdwg.mxu0
    %3005 = vmatpush.msra.mxu0 0.0
    %3006 = vmatpush.msra.mxu0 0.0
    %3007 = vmatpush.msra.mxu0 0.0
    %3008 = vmatpush.msra.mxu0 0.0
    %3009 = vmatpush.msra.mxu0 0.0
    %3010 = vmatpush.msra.mxu0 0.0
    %3011 = vmatpush.msra.mxu0 0.0
    %3012 = vmatpush.msra.mxu0 0.0
    %3013 = vmatpush.msra.mxu0 0.0
    %3014 = vmatpush.msra.mxu0 0.0
    %3015 = vmatpush.msra.mxu0 0.0
    %3016 = vmatpush.msra.mxu0 0.0
    %3017 = vmatpush.msra.mxu0 %v2911
    %3018 = vmatpush.msra.mxu0 %v2905
    %3019 = vmatpush.msra.mxu0 %v2899
    %3020 = vmatpush.msra.mxu0 %v2893
    %3021 = vmatmul.f32.gmra.mxu0 %v2943
    %v3022 = vpop.f32.mrf.mxu0
    %v3023 = vadd.f32 0.0, %v3022
    %3024 = vdwg.mxu0
    %3025 = vmatpush.msra.mxu0 0.0
    %3026 = vmatpush.msra.mxu0 0.0
    %3027 = vmatpush.msra.mxu0 0.0
    %3028 = vmatpush.msra.mxu0 0.0
    %3029 = vmatpush.msra.mxu0 0.0
    %3030 = vmatpush.msra.mxu0 0.0
    %3031 = vmatpush.msra.mxu0 0.0
    %3032 = vmatpush.msra.mxu0 0.0
    %3033 = vmatpush.msra.mxu0 0.0
    %3034 = vmatpush.msra.mxu0 0.0
    %3035 = vmatpush.msra.mxu0 0.0
    %3036 = vmatpush.msra.mxu0 0.0
    %3037 = vmatpush.msra.mxu0 %v2912
    %3038 = vmatpush.msra.mxu0 %v2906
    %3039 = vmatpush.msra.mxu0 %v2900
    %3040 = vmatpush.msra.mxu0 %v2894
    %3041 = vmatmul.f32.gmra.mxu0 %v2943
    %v3042 = vpop.f32.mrf.mxu0
    %v3043 = vadd.f32 0.0, %v3042
    %3044 = vdwg.mxu0
    %3045 = vmatpush.msra.mxu0 0.0
    %3046 = vmatpush.msra.mxu0 0.0
    %3047 = vmatpush.msra.mxu0 0.0
    %3048 = vmatpush.msra.mxu0 0.0
    %3049 = vmatpush.msra.mxu0 0.0
    %3050 = vmatpush.msra.mxu0 0.0
    %3051 = vmatpush.msra.mxu0 0.0
    %3052 = vmatpush.msra.mxu0 0.0
    %3053 = vmatpush.msra.mxu0 0.0
    %3054 = vmatpush.msra.mxu0 0.0
    %3055 = vmatpush.msra.mxu0 0.0
    %3056 = vmatpush.msra.mxu0 0.0
    %3057 = vmatpush.msra.mxu0 %v2913
    %3058 = vmatpush.msra.mxu0 %v2907
    %3059 = vmatpush.msra.mxu0 %v2901
    %3060 = vmatpush.msra.mxu0 %v2895
    %3061 = vmatmul.f32.gmra.mxu0 %v2943
    %v3062 = vpop.f32.mrf.mxu0
    %v3063 = vadd.f32 0.0, %v3062
    %3064 = vdwg.mxu0
    %3065 = vmatpush.msra.mxu0 0.0
    %3066 = vmatpush.msra.mxu0 0.0
    %3067 = vmatpush.msra.mxu0 0.0
    %3068 = vmatpush.msra.mxu0 0.0
    %3069 = vmatpush.msra.mxu0 0.0
    %3070 = vmatpush.msra.mxu0 0.0
    %3071 = vmatpush.msra.mxu0 0.0
    %3072 = vmatpush.msra.mxu0 0.0
    %3073 = vmatpush.msra.mxu0 0.0
    %3074 = vmatpush.msra.mxu0 0.0
    %3075 = vmatpush.msra.mxu0 0.0
    %3076 = vmatpush.msra.mxu0 0.0
    %3077 = vmatpush.msra.mxu0 %v2888
    %3078 = vmatpush.msra.mxu0 %v2874
    %3079 = vmatpush.msra.mxu0 %v2860
    %3080 = vmatpush.msra.mxu0 %v2846
    %3081 = vmatmul.f32.gmra.mxu0 %v2943
    %v3082 = vpop.f32.mrf.mxu0
    %v3083 = vadd.f32 0.0, %v3082
    %3084 = vdwg.mxu0
    %v3085 = vadd.f32 %v2824, %v2963
    %v3086 = vadd.f32 %v2825, %v2983
    %v3087 = vadd.f32 %v2826, %v3003
    %v3088 = vadd.f32 %v2827, %v3023
    %v3089 = vadd.f32 %v2828, %v3043
    %v3090 = vadd.f32 %v2829, %v3063
    %v3091 = vadd.f32 %v2830, %v3083
    %s3092 = scalar_lea.vmem %s1, 24
    %v3093 = vld [vmem:[%s3092] sm:$0x3]
    %3094 = vrot.lane.b32.xlu0 %v27, 86
    %v3095 = vpop.permute.xlu0 %3094
    %3096 = vrot.lane.b32.xlu0 %v28, 86
    %v3097 = vpop.permute.xlu0 %3096
    %3098 = vrot.lane.b32.xlu0 %v29, 86
    %v3099 = vpop.permute.xlu0 %3098
    %3100 = vrot.lane.b32.xlu0 %v30, 86
    %v3101 = vpop.permute.xlu0 %3100
    %3102 = vrot.lane.b32.xlu0 %v31, 86
    %v3103 = vpop.permute.xlu0 %3102
    %3104 = vrot.lane.b32.xlu0 %v32, 86
    %v3105 = vpop.permute.xlu0 %3104
    %3106 = vrot.lane.b32.xlu0 %v33, 86
    %v3107 = vpop.permute.xlu0 %3106
    %3108 = vrot.lane.b32.xlu0 %v34, 86
    %v3109 = vpop.permute.xlu0 %3108
    %3110 = vrot.lane.b32.xlu0 %v35, 86
    %v3111 = vpop.permute.xlu0 %3110
    %3112 = vrot.lane.b32.xlu0 %v36, 86
    %v3113 = vpop.permute.xlu0 %3112
    %3114 = vrot.lane.b32.xlu0 %v37, 86
    %v3115 = vpop.permute.xlu0 %3114
    %3116 = vrot.lane.b32.xlu0 %v38, 86
    %v3117 = vpop.permute.xlu0 %3116
    %3118 = vrot.lane.b32.xlu0 %v39, 86
    %v3119 = vpop.permute.xlu0 %3118
    %3120 = vrot.lane.b32.xlu0 %v40, 86
    %v3121 = vpop.permute.xlu0 %3120
    %3122 = vrot.lane.b32.xlu0 %v41, 86
    %v3123 = vpop.permute.xlu0 %3122
    %3124 = vrot.lane.b32.xlu0 %v42, 86
    %v3125 = vpop.permute.xlu0 %3124
    %3126 = vrot.lane.b32.xlu0 %v43, 86
    %v3127 = vpop.permute.xlu0 %3126
    %3128 = vrot.lane.b32.xlu0 %v44, 86
    %v3129 = vpop.permute.xlu0 %3128
    %3130 = vrot.lane.b32.xlu0 %v45, 86
    %v3131 = vpop.permute.xlu0 %3130
    %3132 = vrot.lane.b32.xlu0 %v46, 86
    %v3133 = vpop.permute.xlu0 %3132
    %3134 = vrot.lane.b32.xlu0 %v47, 86
    %v3135 = vpop.permute.xlu0 %3134
    %3136 = vrot.lane.b32.xlu0 %v48, 86
    %v3137 = vpop.permute.xlu0 %3136
    %3138 = vrot.lane.b32.xlu0 %v49, 86
    %v3139 = vpop.permute.xlu0 %3138
    %3140 = vrot.lane.b32.xlu0 %v50, 86
    %v3141 = vpop.permute.xlu0 %3140
    %3142 = vrot.lane.b32.xlu0 %v51, 86
    %v3143 = vpop.permute.xlu0 %3142
    %3144 = vrot.lane.b32.xlu0 %v52, 86
    %v3145 = vpop.permute.xlu0 %3144
    %3146 = vrot.lane.b32.xlu0 %v53, 86
    %v3147 = vpop.permute.xlu0 %3146
    %3148 = vrot.lane.b32.xlu0 %v54, 86
    %v3149 = vpop.permute.xlu0 %3148
    %vm3150 = vcmask 703488
    %v3151 = vsel %vm3150, %v3095, %v3097
    %v3152 = vsel %vm3150, %v3097, %v3099
    %v3153 = vsel %vm3150, %v3099, %v3101
    %v3154 = vsel %vm3150, %v3101, %v3103
    %v3155 = vsel %vm3150, %v3103, %v3105
    %v3156 = vsel %vm3150, %v3105, %v3107
    %v3157 = vsel %vm3150, %v3109, %v3111
    %v3158 = vsel %vm3150, %v3111, %v3113
    %v3159 = vsel %vm3150, %v3113, %v3115
    %v3160 = vsel %vm3150, %v3115, %v3117
    %v3161 = vsel %vm3150, %v3117, %v3119
    %v3162 = vsel %vm3150, %v3119, %v3121
    %v3163 = vsel %vm3150, %v3123, %v3125
    %v3164 = vsel %vm3150, %v3125, %v3127
    %v3165 = vsel %vm3150, %v3127, %v3129
    %v3166 = vsel %vm3150, %v3129, %v3131
    %v3167 = vsel %vm3150, %v3131, %v3133
    %v3168 = vsel %vm3150, %v3133, %v3135
    %v3169 = vsel %vm3150, %v3137, %v3139
    %v3170 = vsel %vm3150, %v3139, %v3141
    %v3171 = vsel %vm3150, %v3141, %v3143
    %v3172 = vsel %vm3150, %v3143, %v3145
    %v3173 = vsel %vm3150, %v3145, %v3147
    %v3174 = vsel %vm3150, %v3147, %v3149
    %v3204 = vsel %vm195, %v3093, 0
    %3206 = vmatpush.msra.mxu0 0.0
    %3207 = vmatpush.msra.mxu0 0.0
    %3208 = vmatpush.msra.mxu0 0.0
    %3209 = vmatpush.msra.mxu0 0.0
    %3210 = vmatpush.msra.mxu0 0.0
    %3211 = vmatpush.msra.mxu0 0.0
    %3212 = vmatpush.msra.mxu0 0.0
    %3213 = vmatpush.msra.mxu0 0.0
    %3214 = vmatpush.msra.mxu0 0.0
    %3215 = vmatpush.msra.mxu0 0.0
    %3216 = vmatpush.msra.mxu0 0.0
    %3217 = vmatpush.msra.mxu0 0.0
    %3218 = vmatpush.msra.mxu0 %v3169
    %3219 = vmatpush.msra.mxu0 %v3163
    %3220 = vmatpush.msra.mxu0 %v3157
    %3221 = vmatpush.msra.mxu0 %v3151
    %3222 = vmatmul.f32.gmra.mxu0 %v3204
    %v3223 = vpop.f32.mrf.mxu0
    %v3224 = vadd.f32 0.0, %v3223
    %3225 = vdwg.mxu0
    %3226 = vmatpush.msra.mxu0 0.0
    %3227 = vmatpush.msra.mxu0 0.0
    %3228 = vmatpush.msra.mxu0 0.0
    %3229 = vmatpush.msra.mxu0 0.0
    %3230 = vmatpush.msra.mxu0 0.0
    %3231 = vmatpush.msra.mxu0 0.0
    %3232 = vmatpush.msra.mxu0 0.0
    %3233 = vmatpush.msra.mxu0 0.0
    %3234 = vmatpush.msra.mxu0 0.0
    %3235 = vmatpush.msra.mxu0 0.0
    %3236 = vmatpush.msra.mxu0 0.0
    %3237 = vmatpush.msra.mxu0 0.0
    %3238 = vmatpush.msra.mxu0 %v3170
    %3239 = vmatpush.msra.mxu0 %v3164
    %3240 = vmatpush.msra.mxu0 %v3158
    %3241 = vmatpush.msra.mxu0 %v3152
    %3242 = vmatmul.f32.gmra.mxu0 %v3204
    %v3243 = vpop.f32.mrf.mxu0
    %v3244 = vadd.f32 0.0, %v3243
    %3245 = vdwg.mxu0
    %3246 = vmatpush.msra.mxu0 0.0
    %3247 = vmatpush.msra.mxu0 0.0
    %3248 = vmatpush.msra.mxu0 0.0
    %3249 = vmatpush.msra.mxu0 0.0
    %3250 = vmatpush.msra.mxu0 0.0
    %3251 = vmatpush.msra.mxu0 0.0
    %3252 = vmatpush.msra.mxu0 0.0
    %3253 = vmatpush.msra.mxu0 0.0
    %3254 = vmatpush.msra.mxu0 0.0
    %3255 = vmatpush.msra.mxu0 0.0
    %3256 = vmatpush.msra.mxu0 0.0
    %3257 = vmatpush.msra.mxu0 0.0
    %3258 = vmatpush.msra.mxu0 %v3171
    %3259 = vmatpush.msra.mxu0 %v3165
    %3260 = vmatpush.msra.mxu0 %v3159
    %3261 = vmatpush.msra.mxu0 %v3153
    %3262 = vmatmul.f32.gmra.mxu0 %v3204
    %v3263 = vpop.f32.mrf.mxu0
    %v3264 = vadd.f32 0.0, %v3263
    %3265 = vdwg.mxu0
    %3266 = vmatpush.msra.mxu0 0.0
    %3267 = vmatpush.msra.mxu0 0.0
    %3268 = vmatpush.msra.mxu0 0.0
    %3269 = vmatpush.msra.mxu0 0.0
    %3270 = vmatpush.msra.mxu0 0.0
    %3271 = vmatpush.msra.mxu0 0.0
    %3272 = vmatpush.msra.mxu0 0.0
    %3273 = vmatpush.msra.mxu0 0.0
    %3274 = vmatpush.msra.mxu0 0.0
    %3275 = vmatpush.msra.mxu0 0.0
    %3276 = vmatpush.msra.mxu0 0.0
    %3277 = vmatpush.msra.mxu0 0.0
    %3278 = vmatpush.msra.mxu0 %v3172
    %3279 = vmatpush.msra.mxu0 %v3166
    %3280 = vmatpush.msra.mxu0 %v3160
    %3281 = vmatpush.msra.mxu0 %v3154
    %3282 = vmatmul.f32.gmra.mxu0 %v3204
    %v3283 = vpop.f32.mrf.mxu0
    %v3284 = vadd.f32 0.0, %v3283
    %3285 = vdwg.mxu0
    %3286 = vmatpush.msra.mxu0 0.0
    %3287 = vmatpush.msra.mxu0 0.0
    %3288 = vmatpush.msra.mxu0 0.0
    %3289 = vmatpush.msra.mxu0 0.0
    %3290 = vmatpush.msra.mxu0 0.0
    %3291 = vmatpush.msra.mxu0 0.0
    %3292 = vmatpush.msra.mxu0 0.0
    %3293 = vmatpush.msra.mxu0 0.0
    %3294 = vmatpush.msra.mxu0 0.0
    %3295 = vmatpush.msra.mxu0 0.0
    %3296 = vmatpush.msra.mxu0 0.0
    %3297 = vmatpush.msra.mxu0 0.0
    %3298 = vmatpush.msra.mxu0 %v3173
    %3299 = vmatpush.msra.mxu0 %v3167
    %3300 = vmatpush.msra.mxu0 %v3161
    %3301 = vmatpush.msra.mxu0 %v3155
    %3302 = vmatmul.f32.gmra.mxu0 %v3204
    %v3303 = vpop.f32.mrf.mxu0
    %v3304 = vadd.f32 0.0, %v3303
    %3305 = vdwg.mxu0
    %3306 = vmatpush.msra.mxu0 0.0
    %3307 = vmatpush.msra.mxu0 0.0
    %3308 = vmatpush.msra.mxu0 0.0
    %3309 = vmatpush.msra.mxu0 0.0
    %3310 = vmatpush.msra.mxu0 0.0
    %3311 = vmatpush.msra.mxu0 0.0
    %3312 = vmatpush.msra.mxu0 0.0
    %3313 = vmatpush.msra.mxu0 0.0
    %3314 = vmatpush.msra.mxu0 0.0
    %3315 = vmatpush.msra.mxu0 0.0
    %3316 = vmatpush.msra.mxu0 0.0
    %3317 = vmatpush.msra.mxu0 0.0
    %3318 = vmatpush.msra.mxu0 %v3174
    %3319 = vmatpush.msra.mxu0 %v3168
    %3320 = vmatpush.msra.mxu0 %v3162
    %3321 = vmatpush.msra.mxu0 %v3156
    %3322 = vmatmul.f32.gmra.mxu0 %v3204
    %v3323 = vpop.f32.mrf.mxu0
    %v3324 = vadd.f32 0.0, %v3323
    %3325 = vdwg.mxu0
    %3326 = vmatpush.msra.mxu0 0.0
    %3327 = vmatpush.msra.mxu0 0.0
    %3328 = vmatpush.msra.mxu0 0.0
    %3329 = vmatpush.msra.mxu0 0.0
    %3330 = vmatpush.msra.mxu0 0.0
    %3331 = vmatpush.msra.mxu0 0.0
    %3332 = vmatpush.msra.mxu0 0.0
    %3333 = vmatpush.msra.mxu0 0.0
    %3334 = vmatpush.msra.mxu0 0.0
    %3335 = vmatpush.msra.mxu0 0.0
    %3336 = vmatpush.msra.mxu0 0.0
    %3337 = vmatpush.msra.mxu0 0.0
    %3338 = vmatpush.msra.mxu0 %v3149
    %3339 = vmatpush.msra.mxu0 %v3135
    %3340 = vmatpush.msra.mxu0 %v3121
    %3341 = vmatpush.msra.mxu0 %v3107
    %3342 = vmatmul.f32.gmra.mxu0 %v3204
    %v3343 = vpop.f32.mrf.mxu0
    %v3344 = vadd.f32 0.0, %v3343
    %3345 = vdwg.mxu0
    %v3346 = vadd.f32 %v3085, %v3224
    %v3347 = vadd.f32 %v3086, %v3244
    %v3348 = vadd.f32 %v3087, %v3264
    %v3349 = vadd.f32 %v3088, %v3284
    %v3350 = vadd.f32 %v3089, %v3304
    %v3351 = vadd.f32 %v3090, %v3324
    %v3352 = vadd.f32 %v3091, %v3344
    %s3353 = scalar_lea.vmem %s1, 26
    %v3354 = vld [vmem:[%s3353] sm:$0x3]
    %3355 = vrot.lane.b32.xlu0 %v27, 85
    %v3356 = vpop.permute.xlu0 %3355
    %3357 = vrot.lane.b32.xlu0 %v28, 85
    %v3358 = vpop.permute.xlu0 %3357
    %3359 = vrot.lane.b32.xlu0 %v29, 85
    %v3360 = vpop.permute.xlu0 %3359
    %3361 = vrot.lane.b32.xlu0 %v30, 85
    %v3362 = vpop.permute.xlu0 %3361
    %3363 = vrot.lane.b32.xlu0 %v31, 85
    %v3364 = vpop.permute.xlu0 %3363
    %3365 = vrot.lane.b32.xlu0 %v32, 85
    %v3366 = vpop.permute.xlu0 %3365
    %3367 = vrot.lane.b32.xlu0 %v33, 85
    %v3368 = vpop.permute.xlu0 %3367
    %3369 = vrot.lane.b32.xlu0 %v34, 85
    %v3370 = vpop.permute.xlu0 %3369
    %3371 = vrot.lane.b32.xlu0 %v35, 85
    %v3372 = vpop.permute.xlu0 %3371
    %3373 = vrot.lane.b32.xlu0 %v36, 85
    %v3374 = vpop.permute.xlu0 %3373
    %3375 = vrot.lane.b32.xlu0 %v37, 85
    %v3376 = vpop.permute.xlu0 %3375
    %3377 = vrot.lane.b32.xlu0 %v38, 85
    %v3378 = vpop.permute.xlu0 %3377
    %3379 = vrot.lane.b32.xlu0 %v39, 85
    %v3380 = vpop.permute.xlu0 %3379
    %3381 = vrot.lane.b32.xlu0 %v40, 85
    %v3382 = vpop.permute.xlu0 %3381
    %3383 = vrot.lane.b32.xlu0 %v41, 85
    %v3384 = vpop.permute.xlu0 %3383
    %3385 = vrot.lane.b32.xlu0 %v42, 85
    %v3386 = vpop.permute.xlu0 %3385
    %3387 = vrot.lane.b32.xlu0 %v43, 85
    %v3388 = vpop.permute.xlu0 %3387
    %3389 = vrot.lane.b32.xlu0 %v44, 85
    %v3390 = vpop.permute.xlu0 %3389
    %3391 = vrot.lane.b32.xlu0 %v45, 85
    %v3392 = vpop.permute.xlu0 %3391
    %3393 = vrot.lane.b32.xlu0 %v46, 85
    %v3394 = vpop.permute.xlu0 %3393
    %3395 = vrot.lane.b32.xlu0 %v47, 85
    %v3396 = vpop.permute.xlu0 %3395
    %3397 = vrot.lane.b32.xlu0 %v48, 85
    %v3398 = vpop.permute.xlu0 %3397
    %3399 = vrot.lane.b32.xlu0 %v49, 85
    %v3400 = vpop.permute.xlu0 %3399
    %3401 = vrot.lane.b32.xlu0 %v50, 85
    %v3402 = vpop.permute.xlu0 %3401
    %3403 = vrot.lane.b32.xlu0 %v51, 85
    %v3404 = vpop.permute.xlu0 %3403
    %3405 = vrot.lane.b32.xlu0 %v52, 85
    %v3406 = vpop.permute.xlu0 %3405
    %3407 = vrot.lane.b32.xlu0 %v53, 85
    %v3408 = vpop.permute.xlu0 %3407
    %3409 = vrot.lane.b32.xlu0 %v54, 85
    %v3410 = vpop.permute.xlu0 %3409
    %vm3411 = vcmask 695296
    %v3412 = vsel %vm3411, %v3356, %v3358
    %v3413 = vsel %vm3411, %v3358, %v3360
    %v3414 = vsel %vm3411, %v3360, %v3362
    %v3415 = vsel %vm3411, %v3362, %v3364
    %v3416 = vsel %vm3411, %v3364, %v3366
    %v3417 = vsel %vm3411, %v3366, %v3368
    %v3418 = vsel %vm3411, %v3370, %v3372
    %v3419 = vsel %vm3411, %v3372, %v3374
    %v3420 = vsel %vm3411, %v3374, %v3376
    %v3421 = vsel %vm3411, %v3376, %v3378
    %v3422 = vsel %vm3411, %v3378, %v3380
    %v3423 = vsel %vm3411, %v3380, %v3382
    %v3424 = vsel %vm3411, %v3384, %v3386
    %v3425 = vsel %vm3411, %v3386, %v3388
    %v3426 = vsel %vm3411, %v3388, %v3390
    %v3427 = vsel %vm3411, %v3390, %v3392
    %v3428 = vsel %vm3411, %v3392, %v3394
    %v3429 = vsel %vm3411, %v3394, %v3396
    %v3430 = vsel %vm3411, %v3398, %v3400
    %v3431 = vsel %vm3411, %v3400, %v3402
    %v3432 = vsel %vm3411, %v3402, %v3404
    %v3433 = vsel %vm3411, %v3404, %v3406
    %v3434 = vsel %vm3411, %v3406, %v3408
    %v3435 = vsel %vm3411, %v3408, %v3410
    %v3465 = vsel %vm195, %v3354, 0
    %3467 = vmatpush.msra.mxu0 0.0
    %3468 = vmatpush.msra.mxu0 0.0
    %3469 = vmatpush.msra.mxu0 0.0
    %3470 = vmatpush.msra.mxu0 0.0
    %3471 = vmatpush.msra.mxu0 0.0
    %3472 = vmatpush.msra.mxu0 0.0
    %3473 = vmatpush.msra.mxu0 0.0
    %3474 = vmatpush.msra.mxu0 0.0
    %3475 = vmatpush.msra.mxu0 0.0
    %3476 = vmatpush.msra.mxu0 0.0
    %3477 = vmatpush.msra.mxu0 0.0
    %3478 = vmatpush.msra.mxu0 0.0
    %3479 = vmatpush.msra.mxu0 %v3430
    %3480 = vmatpush.msra.mxu0 %v3424
    %3481 = vmatpush.msra.mxu0 %v3418
    %3482 = vmatpush.msra.mxu0 %v3412
    %3483 = vmatmul.f32.gmra.mxu0 %v3465
    %v3484 = vpop.f32.mrf.mxu0
    %v3485 = vadd.f32 0.0, %v3484
    %3486 = vdwg.mxu0
    %3487 = vmatpush.msra.mxu0 0.0
    %3488 = vmatpush.msra.mxu0 0.0
    %3489 = vmatpush.msra.mxu0 0.0
    %3490 = vmatpush.msra.mxu0 0.0
    %3491 = vmatpush.msra.mxu0 0.0
    %3492 = vmatpush.msra.mxu0 0.0
    %3493 = vmatpush.msra.mxu0 0.0
    %3494 = vmatpush.msra.mxu0 0.0
    %3495 = vmatpush.msra.mxu0 0.0
    %3496 = vmatpush.msra.mxu0 0.0
    %3497 = vmatpush.msra.mxu0 0.0
    %3498 = vmatpush.msra.mxu0 0.0
    %3499 = vmatpush.msra.mxu0 %v3431
    %3500 = vmatpush.msra.mxu0 %v3425
    %3501 = vmatpush.msra.mxu0 %v3419
    %3502 = vmatpush.msra.mxu0 %v3413
    %3503 = vmatmul.f32.gmra.mxu0 %v3465
    %v3504 = vpop.f32.mrf.mxu0
    %v3505 = vadd.f32 0.0, %v3504
    %3506 = vdwg.mxu0
    %3507 = vmatpush.msra.mxu0 0.0
    %3508 = vmatpush.msra.mxu0 0.0
    %3509 = vmatpush.msra.mxu0 0.0
    %3510 = vmatpush.msra.mxu0 0.0
    %3511 = vmatpush.msra.mxu0 0.0
    %3512 = vmatpush.msra.mxu0 0.0
    %3513 = vmatpush.msra.mxu0 0.0
    %3514 = vmatpush.msra.mxu0 0.0
    %3515 = vmatpush.msra.mxu0 0.0
    %3516 = vmatpush.msra.mxu0 0.0
    %3517 = vmatpush.msra.mxu0 0.0
    %3518 = vmatpush.msra.mxu0 0.0
    %3519 = vmatpush.msra.mxu0 %v3432
    %3520 = vmatpush.msra.mxu0 %v3426
    %3521 = vmatpush.msra.mxu0 %v3420
    %3522 = vmatpush.msra.mxu0 %v3414
    %3523 = vmatmul.f32.gmra.mxu0 %v3465
    %v3524 = vpop.f32.mrf.mxu0
    %v3525 = vadd.f32 0.0, %v3524
    %3526 = vdwg.mxu0
    %3527 = vmatpush.msra.mxu0 0.0
    %3528 = vmatpush.msra.mxu0 0.0
    %3529 = vmatpush.msra.mxu0 0.0
    %3530 = vmatpush.msra.mxu0 0.0
    %3531 = vmatpush.msra.mxu0 0.0
    %3532 = vmatpush.msra.mxu0 0.0
    %3533 = vmatpush.msra.mxu0 0.0
    %3534 = vmatpush.msra.mxu0 0.0
    %3535 = vmatpush.msra.mxu0 0.0
    %3536 = vmatpush.msra.mxu0 0.0
    %3537 = vmatpush.msra.mxu0 0.0
    %3538 = vmatpush.msra.mxu0 0.0
    %3539 = vmatpush.msra.mxu0 %v3433
    %3540 = vmatpush.msra.mxu0 %v3427
    %3541 = vmatpush.msra.mxu0 %v3421
    %3542 = vmatpush.msra.mxu0 %v3415
    %3543 = vmatmul.f32.gmra.mxu0 %v3465
    %v3544 = vpop.f32.mrf.mxu0
    %v3545 = vadd.f32 0.0, %v3544
    %3546 = vdwg.mxu0
    %3547 = vmatpush.msra.mxu0 0.0
    %3548 = vmatpush.msra.mxu0 0.0
    %3549 = vmatpush.msra.mxu0 0.0
    %3550 = vmatpush.msra.mxu0 0.0
    %3551 = vmatpush.msra.mxu0 0.0
    %3552 = vmatpush.msra.mxu0 0.0
    %3553 = vmatpush.msra.mxu0 0.0
    %3554 = vmatpush.msra.mxu0 0.0
    %3555 = vmatpush.msra.mxu0 0.0
    %3556 = vmatpush.msra.mxu0 0.0
    %3557 = vmatpush.msra.mxu0 0.0
    %3558 = vmatpush.msra.mxu0 0.0
    %3559 = vmatpush.msra.mxu0 %v3434
    %3560 = vmatpush.msra.mxu0 %v3428
    %3561 = vmatpush.msra.mxu0 %v3422
    %3562 = vmatpush.msra.mxu0 %v3416
    %3563 = vmatmul.f32.gmra.mxu0 %v3465
    %v3564 = vpop.f32.mrf.mxu0
    %v3565 = vadd.f32 0.0, %v3564
    %3566 = vdwg.mxu0
    %3567 = vmatpush.msra.mxu0 0.0
    %3568 = vmatpush.msra.mxu0 0.0
    %3569 = vmatpush.msra.mxu0 0.0
    %3570 = vmatpush.msra.mxu0 0.0
    %3571 = vmatpush.msra.mxu0 0.0
    %3572 = vmatpush.msra.mxu0 0.0
    %3573 = vmatpush.msra.mxu0 0.0
    %3574 = vmatpush.msra.mxu0 0.0
    %3575 = vmatpush.msra.mxu0 0.0
    %3576 = vmatpush.msra.mxu0 0.0
    %3577 = vmatpush.msra.mxu0 0.0
    %3578 = vmatpush.msra.mxu0 0.0
    %3579 = vmatpush.msra.mxu0 %v3435
    %3580 = vmatpush.msra.mxu0 %v3429
    %3581 = vmatpush.msra.mxu0 %v3423
    %3582 = vmatpush.msra.mxu0 %v3417
    %3583 = vmatmul.f32.gmra.mxu0 %v3465
    %v3584 = vpop.f32.mrf.mxu0
    %v3585 = vadd.f32 0.0, %v3584
    %3586 = vdwg.mxu0
    %3587 = vmatpush.msra.mxu0 0.0
    %3588 = vmatpush.msra.mxu0 0.0
    %3589 = vmatpush.msra.mxu0 0.0
    %3590 = vmatpush.msra.mxu0 0.0
    %3591 = vmatpush.msra.mxu0 0.0
    %3592 = vmatpush.msra.mxu0 0.0
    %3593 = vmatpush.msra.mxu0 0.0
    %3594 = vmatpush.msra.mxu0 0.0
    %3595 = vmatpush.msra.mxu0 0.0
    %3596 = vmatpush.msra.mxu0 0.0
    %3597 = vmatpush.msra.mxu0 0.0
    %3598 = vmatpush.msra.mxu0 0.0
    %3599 = vmatpush.msra.mxu0 %v3410
    %3600 = vmatpush.msra.mxu0 %v3396
    %3601 = vmatpush.msra.mxu0 %v3382
    %3602 = vmatpush.msra.mxu0 %v3368
    %3603 = vmatmul.f32.gmra.mxu0 %v3465
    %v3604 = vpop.f32.mrf.mxu0
    %v3605 = vadd.f32 0.0, %v3604
    %3606 = vdwg.mxu0
    %v3607 = vadd.f32 %v3346, %v3485
    %v3608 = vadd.f32 %v3347, %v3505
    %v3609 = vadd.f32 %v3348, %v3525
    %v3610 = vadd.f32 %v3349, %v3545
    %v3611 = vadd.f32 %v3350, %v3565
    %v3612 = vadd.f32 %v3351, %v3585
    %v3613 = vadd.f32 %v3352, %v3605
    %s3614 = scalar_lea.vmem %s1, 28
    %v3615 = vld [vmem:[%s3614] sm:$0x3]
    %3616 = vrot.lane.b32.xlu0 %v27, 84
    %v3617 = vpop.permute.xlu0 %3616
    %3618 = vrot.lane.b32.xlu0 %v28, 84
    %v3619 = vpop.permute.xlu0 %3618
    %3620 = vrot.lane.b32.xlu0 %v29, 84
    %v3621 = vpop.permute.xlu0 %3620
    %3622 = vrot.lane.b32.xlu0 %v30, 84
    %v3623 = vpop.permute.xlu0 %3622
    %3624 = vrot.lane.b32.xlu0 %v31, 84
    %v3625 = vpop.permute.xlu0 %3624
    %3626 = vrot.lane.b32.xlu0 %v32, 84
    %v3627 = vpop.permute.xlu0 %3626
    %3628 = vrot.lane.b32.xlu0 %v33, 84
    %v3629 = vpop.permute.xlu0 %3628
    %3630 = vrot.lane.b32.xlu0 %v34, 84
    %v3631 = vpop.permute.xlu0 %3630
    %3632 = vrot.lane.b32.xlu0 %v35, 84
    %v3633 = vpop.permute.xlu0 %3632
    %3634 = vrot.lane.b32.xlu0 %v36, 84
    %v3635 = vpop.permute.xlu0 %3634
    %3636 = vrot.lane.b32.xlu0 %v37, 84
    %v3637 = vpop.permute.xlu0 %3636
    %3638 = vrot.lane.b32.xlu0 %v38, 84
    %v3639 = vpop.permute.xlu0 %3638
    %3640 = vrot.lane.b32.xlu0 %v39, 84
    %v3641 = vpop.permute.xlu0 %3640
    %3642 = vrot.lane.b32.xlu0 %v40, 84
    %v3643 = vpop.permute.xlu0 %3642
    %3644 = vrot.lane.b32.xlu0 %v41, 84
    %v3645 = vpop.permute.xlu0 %3644
    %3646 = vrot.lane.b32.xlu0 %v42, 84
    %v3647 = vpop.permute.xlu0 %3646
    %3648 = vrot.lane.b32.xlu0 %v43, 84
    %v3649 = vpop.permute.xlu0 %3648
    %3650 = vrot.lane.b32.xlu0 %v44, 84
    %v3651 = vpop.permute.xlu0 %3650
    %3652 = vrot.lane.b32.xlu0 %v45, 84
    %v3653 = vpop.permute.xlu0 %3652
    %3654 = vrot.lane.b32.xlu0 %v46, 84
    %v3655 = vpop.permute.xlu0 %3654
    %3656 = vrot.lane.b32.xlu0 %v47, 84
    %v3657 = vpop.permute.xlu0 %3656
    %3658 = vrot.lane.b32.xlu0 %v48, 84
    %v3659 = vpop.permute.xlu0 %3658
    %3660 = vrot.lane.b32.xlu0 %v49, 84
    %v3661 = vpop.permute.xlu0 %3660
    %3662 = vrot.lane.b32.xlu0 %v50, 84
    %v3663 = vpop.permute.xlu0 %3662
    %3664 = vrot.lane.b32.xlu0 %v51, 84
    %v3665 = vpop.permute.xlu0 %3664
    %3666 = vrot.lane.b32.xlu0 %v52, 84
    %v3667 = vpop.permute.xlu0 %3666
    %3668 = vrot.lane.b32.xlu0 %v53, 84
    %v3669 = vpop.permute.xlu0 %3668
    %3670 = vrot.lane.b32.xlu0 %v54, 84
    %v3671 = vpop.permute.xlu0 %3670
    %vm3672 = vcmask 687104
    %v3673 = vsel %vm3672, %v3617, %v3619
    %v3674 = vsel %vm3672, %v3619, %v3621
    %v3675 = vsel %vm3672, %v3621, %v3623
    %v3676 = vsel %vm3672, %v3623, %v3625
    %v3677 = vsel %vm3672, %v3625, %v3627
    %v3678 = vsel %vm3672, %v3627, %v3629
    %v3679 = vsel %vm3672, %v3631, %v3633
    %v3680 = vsel %vm3672, %v3633, %v3635
    %v3681 = vsel %vm3672, %v3635, %v3637
    %v3682 = vsel %vm3672, %v3637, %v3639
    %v3683 = vsel %vm3672, %v3639, %v3641
    %v3684 = vsel %vm3672, %v3641, %v3643
    %v3685 = vsel %vm3672, %v3645, %v3647
    %v3686 = vsel %vm3672, %v3647, %v3649
    %v3687 = vsel %vm3672, %v3649, %v3651
    %v3688 = vsel %vm3672, %v3651, %v3653
    %v3689 = vsel %vm3672, %v3653, %v3655
    %v3690 = vsel %vm3672, %v3655, %v3657
    %v3691 = vsel %vm3672, %v3659, %v3661
    %v3692 = vsel %vm3672, %v3661, %v3663
    %v3693 = vsel %vm3672, %v3663, %v3665
    %v3694 = vsel %vm3672, %v3665, %v3667
    %v3695 = vsel %vm3672, %v3667, %v3669
    %v3696 = vsel %vm3672, %v3669, %v3671
    %v3726 = vsel %vm195, %v3615, 0
    %3728 = vmatpush.msra.mxu0 0.0
    %3729 = vmatpush.msra.mxu0 0.0
    %3730 = vmatpush.msra.mxu0 0.0
    %3731 = vmatpush.msra.mxu0 0.0
    %3732 = vmatpush.msra.mxu0 0.0
    %3733 = vmatpush.msra.mxu0 0.0
    %3734 = vmatpush.msra.mxu0 0.0
    %3735 = vmatpush.msra.mxu0 0.0
    %3736 = vmatpush.msra.mxu0 0.0
    %3737 = vmatpush.msra.mxu0 0.0
    %3738 = vmatpush.msra.mxu0 0.0
    %3739 = vmatpush.msra.mxu0 0.0
    %3740 = vmatpush.msra.mxu0 %v3691
    %3741 = vmatpush.msra.mxu0 %v3685
    %3742 = vmatpush.msra.mxu0 %v3679
    %3743 = vmatpush.msra.mxu0 %v3673
    %3744 = vmatmul.f32.gmra.mxu0 %v3726
    %v3745 = vpop.f32.mrf.mxu0
    %v3746 = vadd.f32 0.0, %v3745
    %3747 = vdwg.mxu0
    %3748 = vmatpush.msra.mxu0 0.0
    %3749 = vmatpush.msra.mxu0 0.0
    %3750 = vmatpush.msra.mxu0 0.0
    %3751 = vmatpush.msra.mxu0 0.0
    %3752 = vmatpush.msra.mxu0 0.0
    %3753 = vmatpush.msra.mxu0 0.0
    %3754 = vmatpush.msra.mxu0 0.0
    %3755 = vmatpush.msra.mxu0 0.0
    %3756 = vmatpush.msra.mxu0 0.0
    %3757 = vmatpush.msra.mxu0 0.0
    %3758 = vmatpush.msra.mxu0 0.0
    %3759 = vmatpush.msra.mxu0 0.0
    %3760 = vmatpush.msra.mxu0 %v3692
    %3761 = vmatpush.msra.mxu0 %v3686
    %3762 = vmatpush.msra.mxu0 %v3680
    %3763 = vmatpush.msra.mxu0 %v3674
    %3764 = vmatmul.f32.gmra.mxu0 %v3726
    %v3765 = vpop.f32.mrf.mxu0
    %v3766 = vadd.f32 0.0, %v3765
    %3767 = vdwg.mxu0
    %3768 = vmatpush.msra.mxu0 0.0
    %3769 = vmatpush.msra.mxu0 0.0
    %3770 = vmatpush.msra.mxu0 0.0
    %3771 = vmatpush.msra.mxu0 0.0
    %3772 = vmatpush.msra.mxu0 0.0
    %3773 = vmatpush.msra.mxu0 0.0
    %3774 = vmatpush.msra.mxu0 0.0
    %3775 = vmatpush.msra.mxu0 0.0
    %3776 = vmatpush.msra.mxu0 0.0
    %3777 = vmatpush.msra.mxu0 0.0
    %3778 = vmatpush.msra.mxu0 0.0
    %3779 = vmatpush.msra.mxu0 0.0
    %3780 = vmatpush.msra.mxu0 %v3693
    %3781 = vmatpush.msra.mxu0 %v3687
    %3782 = vmatpush.msra.mxu0 %v3681
    %3783 = vmatpush.msra.mxu0 %v3675
    %3784 = vmatmul.f32.gmra.mxu0 %v3726
    %v3785 = vpop.f32.mrf.mxu0
    %v3786 = vadd.f32 0.0, %v3785
    %3787 = vdwg.mxu0
    %3788 = vmatpush.msra.mxu0 0.0
    %3789 = vmatpush.msra.mxu0 0.0
    %3790 = vmatpush.msra.mxu0 0.0
    %3791 = vmatpush.msra.mxu0 0.0
    %3792 = vmatpush.msra.mxu0 0.0
    %3793 = vmatpush.msra.mxu0 0.0
    %3794 = vmatpush.msra.mxu0 0.0
    %3795 = vmatpush.msra.mxu0 0.0
    %3796 = vmatpush.msra.mxu0 0.0
    %3797 = vmatpush.msra.mxu0 0.0
    %3798 = vmatpush.msra.mxu0 0.0
    %3799 = vmatpush.msra.mxu0 0.0
    %3800 = vmatpush.msra.mxu0 %v3694
    %3801 = vmatpush.msra.mxu0 %v3688
    %3802 = vmatpush.msra.mxu0 %v3682
    %3803 = vmatpush.msra.mxu0 %v3676
    %3804 = vmatmul.f32.gmra.mxu0 %v3726
    %v3805 = vpop.f32.mrf.mxu0
    %v3806 = vadd.f32 0.0, %v3805
    %3807 = vdwg.mxu0
    %3808 = vmatpush.msra.mxu0 0.0
    %3809 = vmatpush.msra.mxu0 0.0
    %3810 = vmatpush.msra.mxu0 0.0
    %3811 = vmatpush.msra.mxu0 0.0
    %3812 = vmatpush.msra.mxu0 0.0
    %3813 = vmatpush.msra.mxu0 0.0
    %3814 = vmatpush.msra.mxu0 0.0
    %3815 = vmatpush.msra.mxu0 0.0
    %3816 = vmatpush.msra.mxu0 0.0
    %3817 = vmatpush.msra.mxu0 0.0
    %3818 = vmatpush.msra.mxu0 0.0
    %3819 = vmatpush.msra.mxu0 0.0
    %3820 = vmatpush.msra.mxu0 %v3695
    %3821 = vmatpush.msra.mxu0 %v3689
    %3822 = vmatpush.msra.mxu0 %v3683
    %3823 = vmatpush.msra.mxu0 %v3677
    %3824 = vmatmul.f32.gmra.mxu0 %v3726
    %v3825 = vpop.f32.mrf.mxu0
    %v3826 = vadd.f32 0.0, %v3825
    %3827 = vdwg.mxu0
    %3828 = vmatpush.msra.mxu0 0.0
    %3829 = vmatpush.msra.mxu0 0.0
    %3830 = vmatpush.msra.mxu0 0.0
    %3831 = vmatpush.msra.mxu0 0.0
    %3832 = vmatpush.msra.mxu0 0.0
    %3833 = vmatpush.msra.mxu0 0.0
    %3834 = vmatpush.msra.mxu0 0.0
    %3835 = vmatpush.msra.mxu0 0.0
    %3836 = vmatpush.msra.mxu0 0.0
    %3837 = vmatpush.msra.mxu0 0.0
    %3838 = vmatpush.msra.mxu0 0.0
    %3839 = vmatpush.msra.mxu0 0.0
    %3840 = vmatpush.msra.mxu0 %v3696
    %3841 = vmatpush.msra.mxu0 %v3690
    %3842 = vmatpush.msra.mxu0 %v3684
    %3843 = vmatpush.msra.mxu0 %v3678
    %3844 = vmatmul.f32.gmra.mxu0 %v3726
    %v3845 = vpop.f32.mrf.mxu0
    %v3846 = vadd.f32 0.0, %v3845
    %3847 = vdwg.mxu0
    %3848 = vmatpush.msra.mxu0 0.0
    %3849 = vmatpush.msra.mxu0 0.0
    %3850 = vmatpush.msra.mxu0 0.0
    %3851 = vmatpush.msra.mxu0 0.0
    %3852 = vmatpush.msra.mxu0 0.0
    %3853 = vmatpush.msra.mxu0 0.0
    %3854 = vmatpush.msra.mxu0 0.0
    %3855 = vmatpush.msra.mxu0 0.0
    %3856 = vmatpush.msra.mxu0 0.0
    %3857 = vmatpush.msra.mxu0 0.0
    %3858 = vmatpush.msra.mxu0 0.0
    %3859 = vmatpush.msra.mxu0 0.0
    %3860 = vmatpush.msra.mxu0 %v3671
    %3861 = vmatpush.msra.mxu0 %v3657
    %3862 = vmatpush.msra.mxu0 %v3643
    %3863 = vmatpush.msra.mxu0 %v3629
    %3864 = vmatmul.f32.gmra.mxu0 %v3726
    %v3865 = vpop.f32.mrf.mxu0
    %v3866 = vadd.f32 0.0, %v3865
    %3867 = vdwg.mxu0
    %v3868 = vadd.f32 %v3607, %v3746
    %v3869 = vadd.f32 %v3608, %v3766
    %v3870 = vadd.f32 %v3609, %v3786
    %v3871 = vadd.f32 %v3610, %v3806
    %v3872 = vadd.f32 %v3611, %v3826
    %v3873 = vadd.f32 %v3612, %v3846
    %v3874 = vadd.f32 %v3613, %v3866
    %s3875 = scalar_lea.vmem %s1, 30
    %v3876 = vld [vmem:[%s3875] sm:$0x3]
    %3877 = vrot.lane.b32.xlu0 %v27, 68
    %v3878 = vpop.permute.xlu0 %3877
    %3879 = vrot.lane.b32.xlu0 %v28, 68
    %v3880 = vpop.permute.xlu0 %3879
    %3881 = vrot.lane.b32.xlu0 %v29, 68
    %v3882 = vpop.permute.xlu0 %3881
    %3883 = vrot.lane.b32.xlu0 %v30, 68
    %v3884 = vpop.permute.xlu0 %3883
    %3885 = vrot.lane.b32.xlu0 %v31, 68
    %v3886 = vpop.permute.xlu0 %3885
    %3887 = vrot.lane.b32.xlu0 %v32, 68
    %v3888 = vpop.permute.xlu0 %3887
    %3889 = vrot.lane.b32.xlu0 %v33, 68
    %v3890 = vpop.permute.xlu0 %3889
    %3891 = vrot.lane.b32.xlu0 %v34, 68
    %v3892 = vpop.permute.xlu0 %3891
    %3893 = vrot.lane.b32.xlu0 %v35, 68
    %v3894 = vpop.permute.xlu0 %3893
    %3895 = vrot.lane.b32.xlu0 %v36, 68
    %v3896 = vpop.permute.xlu0 %3895
    %3897 = vrot.lane.b32.xlu0 %v37, 68
    %v3898 = vpop.permute.xlu0 %3897
    %3899 = vrot.lane.b32.xlu0 %v38, 68
    %v3900 = vpop.permute.xlu0 %3899
    %3901 = vrot.lane.b32.xlu0 %v39, 68
    %v3902 = vpop.permute.xlu0 %3901
    %3903 = vrot.lane.b32.xlu0 %v40, 68
    %v3904 = vpop.permute.xlu0 %3903
    %3905 = vrot.lane.b32.xlu0 %v41, 68
    %v3906 = vpop.permute.xlu0 %3905
    %3907 = vrot.lane.b32.xlu0 %v42, 68
    %v3908 = vpop.permute.xlu0 %3907
    %3909 = vrot.lane.b32.xlu0 %v43, 68
    %v3910 = vpop.permute.xlu0 %3909
    %3911 = vrot.lane.b32.xlu0 %v44, 68
    %v3912 = vpop.permute.xlu0 %3911
    %3913 = vrot.lane.b32.xlu0 %v45, 68
    %v3914 = vpop.permute.xlu0 %3913
    %3915 = vrot.lane.b32.xlu0 %v46, 68
    %v3916 = vpop.permute.xlu0 %3915
    %3917 = vrot.lane.b32.xlu0 %v47, 68
    %v3918 = vpop.permute.xlu0 %3917
    %3919 = vrot.lane.b32.xlu0 %v48, 68
    %v3920 = vpop.permute.xlu0 %3919
    %3921 = vrot.lane.b32.xlu0 %v49, 68
    %v3922 = vpop.permute.xlu0 %3921
    %3923 = vrot.lane.b32.xlu0 %v50, 68
    %v3924 = vpop.permute.xlu0 %3923
    %3925 = vrot.lane.b32.xlu0 %v51, 68
    %v3926 = vpop.permute.xlu0 %3925
    %3927 = vrot.lane.b32.xlu0 %v52, 68
    %v3928 = vpop.permute.xlu0 %3927
    %3929 = vrot.lane.b32.xlu0 %v53, 68
    %v3930 = vpop.permute.xlu0 %3929
    %3931 = vrot.lane.b32.xlu0 %v54, 68
    %v3932 = vpop.permute.xlu0 %3931
    %vm3933 = vcmask 556032
    %v3934 = vsel %vm3933, %v3878, %v3880
    %v3935 = vsel %vm3933, %v3880, %v3882
    %v3936 = vsel %vm3933, %v3882, %v3884
    %v3937 = vsel %vm3933, %v3884, %v3886
    %v3938 = vsel %vm3933, %v3886, %v3888
    %v3939 = vsel %vm3933, %v3888, %v3890
    %v3940 = vsel %vm3933, %v3892, %v3894
    %v3941 = vsel %vm3933, %v3894, %v3896
    %v3942 = vsel %vm3933, %v3896, %v3898
    %v3943 = vsel %vm3933, %v3898, %v3900
    %v3944 = vsel %vm3933, %v3900, %v3902
    %v3945 = vsel %vm3933, %v3902, %v3904
    %v3946 = vsel %vm3933, %v3906, %v3908
    %v3947 = vsel %vm3933, %v3908, %v3910
    %v3948 = vsel %vm3933, %v3910, %v3912
    %v3949 = vsel %vm3933, %v3912, %v3914
    %v3950 = vsel %vm3933, %v3914, %v3916
    %v3951 = vsel %vm3933, %v3916, %v3918
    %v3952 = vsel %vm3933, %v3920, %v3922
    %v3953 = vsel %vm3933, %v3922, %v3924
    %v3954 = vsel %vm3933, %v3924, %v3926
    %v3955 = vsel %vm3933, %v3926, %v3928
    %v3956 = vsel %vm3933, %v3928, %v3930
    %v3957 = vsel %vm3933, %v3930, %v3932
    %v3987 = vsel %vm195, %v3876, 0
    %3989 = vmatpush.msra.mxu0 0.0
    %3990 = vmatpush.msra.mxu0 0.0
    %3991 = vmatpush.msra.mxu0 0.0
    %3992 = vmatpush.msra.mxu0 0.0
    %3993 = vmatpush.msra.mxu0 0.0
    %3994 = vmatpush.msra.mxu0 0.0
    %3995 = vmatpush.msra.mxu0 0.0
    %3996 = vmatpush.msra.mxu0 0.0
    %3997 = vmatpush.msra.mxu0 0.0
    %3998 = vmatpush.msra.mxu0 0.0
    %3999 = vmatpush.msra.mxu0 0.0
    %4000 = vmatpush.msra.mxu0 0.0
    %4001 = vmatpush.msra.mxu0 %v3952
    %4002 = vmatpush.msra.mxu0 %v3946
    %4003 = vmatpush.msra.mxu0 %v3940
    %4004 = vmatpush.msra.mxu0 %v3934
    %4005 = vmatmul.f32.gmra.mxu0 %v3987
    %v4006 = vpop.f32.mrf.mxu0
    %v4007 = vadd.f32 0.0, %v4006
    %4008 = vdwg.mxu0
    %4009 = vmatpush.msra.mxu0 0.0
    %4010 = vmatpush.msra.mxu0 0.0
    %4011 = vmatpush.msra.mxu0 0.0
    %4012 = vmatpush.msra.mxu0 0.0
    %4013 = vmatpush.msra.mxu0 0.0
    %4014 = vmatpush.msra.mxu0 0.0
    %4015 = vmatpush.msra.mxu0 0.0
    %4016 = vmatpush.msra.mxu0 0.0
    %4017 = vmatpush.msra.mxu0 0.0
    %4018 = vmatpush.msra.mxu0 0.0
    %4019 = vmatpush.msra.mxu0 0.0
    %4020 = vmatpush.msra.mxu0 0.0
    %4021 = vmatpush.msra.mxu0 %v3953
    %4022 = vmatpush.msra.mxu0 %v3947
    %4023 = vmatpush.msra.mxu0 %v3941
    %4024 = vmatpush.msra.mxu0 %v3935
    %4025 = vmatmul.f32.gmra.mxu0 %v3987
    %v4026 = vpop.f32.mrf.mxu0
    %v4027 = vadd.f32 0.0, %v4026
    %4028 = vdwg.mxu0
    %4029 = vmatpush.msra.mxu0 0.0
    %4030 = vmatpush.msra.mxu0 0.0
    %4031 = vmatpush.msra.mxu0 0.0
    %4032 = vmatpush.msra.mxu0 0.0
    %4033 = vmatpush.msra.mxu0 0.0
    %4034 = vmatpush.msra.mxu0 0.0
    %4035 = vmatpush.msra.mxu0 0.0
    %4036 = vmatpush.msra.mxu0 0.0
    %4037 = vmatpush.msra.mxu0 0.0
    %4038 = vmatpush.msra.mxu0 0.0
    %4039 = vmatpush.msra.mxu0 0.0
    %4040 = vmatpush.msra.mxu0 0.0
    %4041 = vmatpush.msra.mxu0 %v3954
    %4042 = vmatpush.msra.mxu0 %v3948
    %4043 = vmatpush.msra.mxu0 %v3942
    %4044 = vmatpush.msra.mxu0 %v3936
    %4045 = vmatmul.f32.gmra.mxu0 %v3987
    %v4046 = vpop.f32.mrf.mxu0
    %v4047 = vadd.f32 0.0, %v4046
    %4048 = vdwg.mxu0
    %4049 = vmatpush.msra.mxu0 0.0
    %4050 = vmatpush.msra.mxu0 0.0
    %4051 = vmatpush.msra.mxu0 0.0
    %4052 = vmatpush.msra.mxu0 0.0
    %4053 = vmatpush.msra.mxu0 0.0
    %4054 = vmatpush.msra.mxu0 0.0
    %4055 = vmatpush.msra.mxu0 0.0
    %4056 = vmatpush.msra.mxu0 0.0
    %4057 = vmatpush.msra.mxu0 0.0
    %4058 = vmatpush.msra.mxu0 0.0
    %4059 = vmatpush.msra.mxu0 0.0
    %4060 = vmatpush.msra.mxu0 0.0
    %4061 = vmatpush.msra.mxu0 %v3955
    %4062 = vmatpush.msra.mxu0 %v3949
    %4063 = vmatpush.msra.mxu0 %v3943
    %4064 = vmatpush.msra.mxu0 %v3937
    %4065 = vmatmul.f32.gmra.mxu0 %v3987
    %v4066 = vpop.f32.mrf.mxu0
    %v4067 = vadd.f32 0.0, %v4066
    %4068 = vdwg.mxu0
    %4069 = vmatpush.msra.mxu0 0.0
    %4070 = vmatpush.msra.mxu0 0.0
    %4071 = vmatpush.msra.mxu0 0.0
    %4072 = vmatpush.msra.mxu0 0.0
    %4073 = vmatpush.msra.mxu0 0.0
    %4074 = vmatpush.msra.mxu0 0.0
    %4075 = vmatpush.msra.mxu0 0.0
    %4076 = vmatpush.msra.mxu0 0.0
    %4077 = vmatpush.msra.mxu0 0.0
    %4078 = vmatpush.msra.mxu0 0.0
    %4079 = vmatpush.msra.mxu0 0.0
    %4080 = vmatpush.msra.mxu0 0.0
    %4081 = vmatpush.msra.mxu0 %v3956
    %4082 = vmatpush.msra.mxu0 %v3950
    %4083 = vmatpush.msra.mxu0 %v3944
    %4084 = vmatpush.msra.mxu0 %v3938
    %4085 = vmatmul.f32.gmra.mxu0 %v3987
    %v4086 = vpop.f32.mrf.mxu0
    %v4087 = vadd.f32 0.0, %v4086
    %4088 = vdwg.mxu0
    %4089 = vmatpush.msra.mxu0 0.0
    %4090 = vmatpush.msra.mxu0 0.0
    %4091 = vmatpush.msra.mxu0 0.0
    %4092 = vmatpush.msra.mxu0 0.0
    %4093 = vmatpush.msra.mxu0 0.0
    %4094 = vmatpush.msra.mxu0 0.0
    %4095 = vmatpush.msra.mxu0 0.0
    %4096 = vmatpush.msra.mxu0 0.0
    %4097 = vmatpush.msra.mxu0 0.0
    %4098 = vmatpush.msra.mxu0 0.0
    %4099 = vmatpush.msra.mxu0 0.0
    %4100 = vmatpush.msra.mxu0 0.0
    %4101 = vmatpush.msra.mxu0 %v3957
    %4102 = vmatpush.msra.mxu0 %v3951
    %4103 = vmatpush.msra.mxu0 %v3945
    %4104 = vmatpush.msra.mxu0 %v3939
    %4105 = vmatmul.f32.gmra.mxu0 %v3987
    %v4106 = vpop.f32.mrf.mxu0
    %v4107 = vadd.f32 0.0, %v4106
    %4108 = vdwg.mxu0
    %4109 = vmatpush.msra.mxu0 0.0
    %4110 = vmatpush.msra.mxu0 0.0
    %4111 = vmatpush.msra.mxu0 0.0
    %4112 = vmatpush.msra.mxu0 0.0
    %4113 = vmatpush.msra.mxu0 0.0
    %4114 = vmatpush.msra.mxu0 0.0
    %4115 = vmatpush.msra.mxu0 0.0
    %4116 = vmatpush.msra.mxu0 0.0
    %4117 = vmatpush.msra.mxu0 0.0
    %4118 = vmatpush.msra.mxu0 0.0
    %4119 = vmatpush.msra.mxu0 0.0
    %4120 = vmatpush.msra.mxu0 0.0
    %4121 = vmatpush.msra.mxu0 %v3932
    %4122 = vmatpush.msra.mxu0 %v3918
    %4123 = vmatpush.msra.mxu0 %v3904
    %4124 = vmatpush.msra.mxu0 %v3890
    %4125 = vmatmul.f32.gmra.mxu0 %v3987
    %v4126 = vpop.f32.mrf.mxu0
    %v4127 = vadd.f32 0.0, %v4126
    %4128 = vdwg.mxu0
    %v4129 = vadd.f32 %v3868, %v4007
    %v4130 = vadd.f32 %v3869, %v4027
    %v4131 = vadd.f32 %v3870, %v4047
    %v4132 = vadd.f32 %v3871, %v4067
    %v4133 = vadd.f32 %v3872, %v4087
    %v4134 = vadd.f32 %v3873, %v4107
    %v4135 = vadd.f32 %v3874, %v4127
    %s4136 = scalar_lea.vmem %s1, 32
    %v4137 = vld [vmem:[%s4136] sm:$0x3]
    %4138 = vrot.lane.b32.xlu0 %v27, 67
    %v4139 = vpop.permute.xlu0 %4138
    %4140 = vrot.lane.b32.xlu0 %v28, 67
    %v4141 = vpop.permute.xlu0 %4140
    %4142 = vrot.lane.b32.xlu0 %v29, 67
    %v4143 = vpop.permute.xlu0 %4142
    %4144 = vrot.lane.b32.xlu0 %v30, 67
    %v4145 = vpop.permute.xlu0 %4144
    %4146 = vrot.lane.b32.xlu0 %v31, 67
    %v4147 = vpop.permute.xlu0 %4146
    %4148 = vrot.lane.b32.xlu0 %v32, 67
    %v4149 = vpop.permute.xlu0 %4148
    %4150 = vrot.lane.b32.xlu0 %v33, 67
    %v4151 = vpop.permute.xlu0 %4150
    %4152 = vrot.lane.b32.xlu0 %v34, 67
    %v4153 = vpop.permute.xlu0 %4152
    %4154 = vrot.lane.b32.xlu0 %v35, 67
    %v4155 = vpop.permute.xlu0 %4154
    %4156 = vrot.lane.b32.xlu0 %v36, 67
    %v4157 = vpop.permute.xlu0 %4156
    %4158 = vrot.lane.b32.xlu0 %v37, 67
    %v4159 = vpop.permute.xlu0 %4158
    %4160 = vrot.lane.b32.xlu0 %v38, 67
    %v4161 = vpop.permute.xlu0 %4160
    %4162 = vrot.lane.b32.xlu0 %v39, 67
    %v4163 = vpop.permute.xlu0 %4162
    %4164 = vrot.lane.b32.xlu0 %v40, 67
    %v4165 = vpop.permute.xlu0 %4164
    %4166 = vrot.lane.b32.xlu0 %v41, 67
    %v4167 = vpop.permute.xlu0 %4166
    %4168 = vrot.lane.b32.xlu0 %v42, 67
    %v4169 = vpop.permute.xlu0 %4168
    %4170 = vrot.lane.b32.xlu0 %v43, 67
    %v4171 = vpop.permute.xlu0 %4170
    %4172 = vrot.lane.b32.xlu0 %v44, 67
    %v4173 = vpop.permute.xlu0 %4172
    %4174 = vrot.lane.b32.xlu0 %v45, 67
    %v4175 = vpop.permute.xlu0 %4174
    %4176 = vrot.lane.b32.xlu0 %v46, 67
    %v4177 = vpop.permute.xlu0 %4176
    %4178 = vrot.lane.b32.xlu0 %v47, 67
    %v4179 = vpop.permute.xlu0 %4178
    %4180 = vrot.lane.b32.xlu0 %v48, 67
    %v4181 = vpop.permute.xlu0 %4180
    %4182 = vrot.lane.b32.xlu0 %v49, 67
    %v4183 = vpop.permute.xlu0 %4182
    %4184 = vrot.lane.b32.xlu0 %v50, 67
    %v4185 = vpop.permute.xlu0 %4184
    %4186 = vrot.lane.b32.xlu0 %v51, 67
    %v4187 = vpop.permute.xlu0 %4186
    %4188 = vrot.lane.b32.xlu0 %v52, 67
    %v4189 = vpop.permute.xlu0 %4188
    %4190 = vrot.lane.b32.xlu0 %v53, 67
    %v4191 = vpop.permute.xlu0 %4190
    %4192 = vrot.lane.b32.xlu0 %v54, 67
    %v4193 = vpop.permute.xlu0 %4192
    %vm4194 = vcmask 547840
    %v4195 = vsel %vm4194, %v4139, %v4141
    %v4196 = vsel %vm4194, %v4141, %v4143
    %v4197 = vsel %vm4194, %v4143, %v4145
    %v4198 = vsel %vm4194, %v4145, %v4147
    %v4199 = vsel %vm4194, %v4147, %v4149
    %v4200 = vsel %vm4194, %v4149, %v4151
    %v4201 = vsel %vm4194, %v4153, %v4155
    %v4202 = vsel %vm4194, %v4155, %v4157
    %v4203 = vsel %vm4194, %v4157, %v4159
    %v4204 = vsel %vm4194, %v4159, %v4161
    %v4205 = vsel %vm4194, %v4161, %v4163
    %v4206 = vsel %vm4194, %v4163, %v4165
    %v4207 = vsel %vm4194, %v4167, %v4169
    %v4208 = vsel %vm4194, %v4169, %v4171
    %v4209 = vsel %vm4194, %v4171, %v4173
    %v4210 = vsel %vm4194, %v4173, %v4175
    %v4211 = vsel %vm4194, %v4175, %v4177
    %v4212 = vsel %vm4194, %v4177, %v4179
    %v4213 = vsel %vm4194, %v4181, %v4183
    %v4214 = vsel %vm4194, %v4183, %v4185
    %v4215 = vsel %vm4194, %v4185, %v4187
    %v4216 = vsel %vm4194, %v4187, %v4189
    %v4217 = vsel %vm4194, %v4189, %v4191
    %v4218 = vsel %vm4194, %v4191, %v4193
    %v4248 = vsel %vm195, %v4137, 0
    %4250 = vmatpush.msra.mxu0 0.0
    %4251 = vmatpush.msra.mxu0 0.0
    %4252 = vmatpush.msra.mxu0 0.0
    %4253 = vmatpush.msra.mxu0 0.0
    %4254 = vmatpush.msra.mxu0 0.0
    %4255 = vmatpush.msra.mxu0 0.0
    %4256 = vmatpush.msra.mxu0 0.0
    %4257 = vmatpush.msra.mxu0 0.0
    %4258 = vmatpush.msra.mxu0 0.0
    %4259 = vmatpush.msra.mxu0 0.0
    %4260 = vmatpush.msra.mxu0 0.0
    %4261 = vmatpush.msra.mxu0 0.0
    %4262 = vmatpush.msra.mxu0 %v4213
    %4263 = vmatpush.msra.mxu0 %v4207
    %4264 = vmatpush.msra.mxu0 %v4201
    %4265 = vmatpush.msra.mxu0 %v4195
    %4266 = vmatmul.f32.gmra.mxu0 %v4248
    %v4267 = vpop.f32.mrf.mxu0
    %v4268 = vadd.f32 0.0, %v4267
    %4269 = vdwg.mxu0
    %4270 = vmatpush.msra.mxu0 0.0
    %4271 = vmatpush.msra.mxu0 0.0
    %4272 = vmatpush.msra.mxu0 0.0
    %4273 = vmatpush.msra.mxu0 0.0
    %4274 = vmatpush.msra.mxu0 0.0
    %4275 = vmatpush.msra.mxu0 0.0
    %4276 = vmatpush.msra.mxu0 0.0
    %4277 = vmatpush.msra.mxu0 0.0
    %4278 = vmatpush.msra.mxu0 0.0
    %4279 = vmatpush.msra.mxu0 0.0
    %4280 = vmatpush.msra.mxu0 0.0
    %4281 = vmatpush.msra.mxu0 0.0
    %4282 = vmatpush.msra.mxu0 %v4214
    %4283 = vmatpush.msra.mxu0 %v4208
    %4284 = vmatpush.msra.mxu0 %v4202
    %4285 = vmatpush.msra.mxu0 %v4196
    %4286 = vmatmul.f32.gmra.mxu0 %v4248
    %v4287 = vpop.f32.mrf.mxu0
    %v4288 = vadd.f32 0.0, %v4287
    %4289 = vdwg.mxu0
    %4290 = vmatpush.msra.mxu0 0.0
    %4291 = vmatpush.msra.mxu0 0.0
    %4292 = vmatpush.msra.mxu0 0.0
    %4293 = vmatpush.msra.mxu0 0.0
    %4294 = vmatpush.msra.mxu0 0.0
    %4295 = vmatpush.msra.mxu0 0.0
    %4296 = vmatpush.msra.mxu0 0.0
    %4297 = vmatpush.msra.mxu0 0.0
    %4298 = vmatpush.msra.mxu0 0.0
    %4299 = vmatpush.msra.mxu0 0.0
    %4300 = vmatpush.msra.mxu0 0.0
    %4301 = vmatpush.msra.mxu0 0.0
    %4302 = vmatpush.msra.mxu0 %v4215
    %4303 = vmatpush.msra.mxu0 %v4209
    %4304 = vmatpush.msra.mxu0 %v4203
    %4305 = vmatpush.msra.mxu0 %v4197
    %4306 = vmatmul.f32.gmra.mxu0 %v4248
    %v4307 = vpop.f32.mrf.mxu0
    %v4308 = vadd.f32 0.0, %v4307
    %4309 = vdwg.mxu0
    %4310 = vmatpush.msra.mxu0 0.0
    %4311 = vmatpush.msra.mxu0 0.0
    %4312 = vmatpush.msra.mxu0 0.0
    %4313 = vmatpush.msra.mxu0 0.0
    %4314 = vmatpush.msra.mxu0 0.0
    %4315 = vmatpush.msra.mxu0 0.0
    %4316 = vmatpush.msra.mxu0 0.0
    %4317 = vmatpush.msra.mxu0 0.0
    %4318 = vmatpush.msra.mxu0 0.0
    %4319 = vmatpush.msra.mxu0 0.0
    %4320 = vmatpush.msra.mxu0 0.0
    %4321 = vmatpush.msra.mxu0 0.0
    %4322 = vmatpush.msra.mxu0 %v4216
    %4323 = vmatpush.msra.mxu0 %v4210
    %4324 = vmatpush.msra.mxu0 %v4204
    %4325 = vmatpush.msra.mxu0 %v4198
    %4326 = vmatmul.f32.gmra.mxu0 %v4248
    %v4327 = vpop.f32.mrf.mxu0
    %v4328 = vadd.f32 0.0, %v4327
    %4329 = vdwg.mxu0
    %4330 = vmatpush.msra.mxu0 0.0
    %4331 = vmatpush.msra.mxu0 0.0
    %4332 = vmatpush.msra.mxu0 0.0
    %4333 = vmatpush.msra.mxu0 0.0
    %4334 = vmatpush.msra.mxu0 0.0
    %4335 = vmatpush.msra.mxu0 0.0
    %4336 = vmatpush.msra.mxu0 0.0
    %4337 = vmatpush.msra.mxu0 0.0
    %4338 = vmatpush.msra.mxu0 0.0
    %4339 = vmatpush.msra.mxu0 0.0
    %4340 = vmatpush.msra.mxu0 0.0
    %4341 = vmatpush.msra.mxu0 0.0
    %4342 = vmatpush.msra.mxu0 %v4217
    %4343 = vmatpush.msra.mxu0 %v4211
    %4344 = vmatpush.msra.mxu0 %v4205
    %4345 = vmatpush.msra.mxu0 %v4199
    %4346 = vmatmul.f32.gmra.mxu0 %v4248
    %v4347 = vpop.f32.mrf.mxu0
    %v4348 = vadd.f32 0.0, %v4347
    %4349 = vdwg.mxu0
    %4350 = vmatpush.msra.mxu0 0.0
    %4351 = vmatpush.msra.mxu0 0.0
    %4352 = vmatpush.msra.mxu0 0.0
    %4353 = vmatpush.msra.mxu0 0.0
    %4354 = vmatpush.msra.mxu0 0.0
    %4355 = vmatpush.msra.mxu0 0.0
    %4356 = vmatpush.msra.mxu0 0.0
    %4357 = vmatpush.msra.mxu0 0.0
    %4358 = vmatpush.msra.mxu0 0.0
    %4359 = vmatpush.msra.mxu0 0.0
    %4360 = vmatpush.msra.mxu0 0.0
    %4361 = vmatpush.msra.mxu0 0.0
    %4362 = vmatpush.msra.mxu0 %v4218
    %4363 = vmatpush.msra.mxu0 %v4212
    %4364 = vmatpush.msra.mxu0 %v4206
    %4365 = vmatpush.msra.mxu0 %v4200
    %4366 = vmatmul.f32.gmra.mxu0 %v4248
    %v4367 = vpop.f32.mrf.mxu0
    %v4368 = vadd.f32 0.0, %v4367
    %4369 = vdwg.mxu0
    %4370 = vmatpush.msra.mxu0 0.0
    %4371 = vmatpush.msra.mxu0 0.0
    %4372 = vmatpush.msra.mxu0 0.0
    %4373 = vmatpush.msra.mxu0 0.0
    %4374 = vmatpush.msra.mxu0 0.0
    %4375 = vmatpush.msra.mxu0 0.0
    %4376 = vmatpush.msra.mxu0 0.0
    %4377 = vmatpush.msra.mxu0 0.0
    %4378 = vmatpush.msra.mxu0 0.0
    %4379 = vmatpush.msra.mxu0 0.0
    %4380 = vmatpush.msra.mxu0 0.0
    %4381 = vmatpush.msra.mxu0 0.0
    %4382 = vmatpush.msra.mxu0 %v4193
    %4383 = vmatpush.msra.mxu0 %v4179
    %4384 = vmatpush.msra.mxu0 %v4165
    %4385 = vmatpush.msra.mxu0 %v4151
    %4386 = vmatmul.f32.gmra.mxu0 %v4248
    %v4387 = vpop.f32.mrf.mxu0
    %v4388 = vadd.f32 0.0, %v4387
    %4389 = vdwg.mxu0
    %v4390 = vadd.f32 %v4129, %v4268
    %v4391 = vadd.f32 %v4130, %v4288
    %v4392 = vadd.f32 %v4131, %v4308
    %v4393 = vadd.f32 %v4132, %v4328
    %v4394 = vadd.f32 %v4133, %v4348
    %v4395 = vadd.f32 %v4134, %v4368
    %v4396 = vadd.f32 %v4135, %v4388
    %s4397 = scalar_lea.vmem %s1, 34
    %v4398 = vld [vmem:[%s4397] sm:$0x3]
    %4399 = vrot.lane.b32.xlu0 %v27, 66
    %v4400 = vpop.permute.xlu0 %4399
    %4401 = vrot.lane.b32.xlu0 %v28, 66
    %v4402 = vpop.permute.xlu0 %4401
    %4403 = vrot.lane.b32.xlu0 %v29, 66
    %v4404 = vpop.permute.xlu0 %4403
    %4405 = vrot.lane.b32.xlu0 %v30, 66
    %v4406 = vpop.permute.xlu0 %4405
    %4407 = vrot.lane.b32.xlu0 %v31, 66
    %v4408 = vpop.permute.xlu0 %4407
    %4409 = vrot.lane.b32.xlu0 %v32, 66
    %v4410 = vpop.permute.xlu0 %4409
    %4411 = vrot.lane.b32.xlu0 %v33, 66
    %v4412 = vpop.permute.xlu0 %4411
    %4413 = vrot.lane.b32.xlu0 %v34, 66
    %v4414 = vpop.permute.xlu0 %4413
    %4415 = vrot.lane.b32.xlu0 %v35, 66
    %v4416 = vpop.permute.xlu0 %4415
    %4417 = vrot.lane.b32.xlu0 %v36, 66
    %v4418 = vpop.permute.xlu0 %4417
    %4419 = vrot.lane.b32.xlu0 %v37, 66
    %v4420 = vpop.permute.xlu0 %4419
    %4421 = vrot.lane.b32.xlu0 %v38, 66
    %v4422 = vpop.permute.xlu0 %4421
    %4423 = vrot.lane.b32.xlu0 %v39, 66
    %v4424 = vpop.permute.xlu0 %4423
    %4425 = vrot.lane.b32.xlu0 %v40, 66
    %v4426 = vpop.permute.xlu0 %4425
    %4427 = vrot.lane.b32.xlu0 %v41, 66
    %v4428 = vpop.permute.xlu0 %4427
    %4429 = vrot.lane.b32.xlu0 %v42, 66
    %v4430 = vpop.permute.xlu0 %4429
    %4431 = vrot.lane.b32.xlu0 %v43, 66
    %v4432 = vpop.permute.xlu0 %4431
    %4433 = vrot.lane.b32.xlu0 %v44, 66
    %v4434 = vpop.permute.xlu0 %4433
    %4435 = vrot.lane.b32.xlu0 %v45, 66
    %v4436 = vpop.permute.xlu0 %4435
    %4437 = vrot.lane.b32.xlu0 %v46, 66
    %v4438 = vpop.permute.xlu0 %4437
    %4439 = vrot.lane.b32.xlu0 %v47, 66
    %v4440 = vpop.permute.xlu0 %4439
    %4441 = vrot.lane.b32.xlu0 %v48, 66
    %v4442 = vpop.permute.xlu0 %4441
    %4443 = vrot.lane.b32.xlu0 %v49, 66
    %v4444 = vpop.permute.xlu0 %4443
    %4445 = vrot.lane.b32.xlu0 %v50, 66
    %v4446 = vpop.permute.xlu0 %4445
    %4447 = vrot.lane.b32.xlu0 %v51, 66
    %v4448 = vpop.permute.xlu0 %4447
    %4449 = vrot.lane.b32.xlu0 %v52, 66
    %v4450 = vpop.permute.xlu0 %4449
    %4451 = vrot.lane.b32.xlu0 %v53, 66
    %v4452 = vpop.permute.xlu0 %4451
    %4453 = vrot.lane.b32.xlu0 %v54, 66
    %v4454 = vpop.permute.xlu0 %4453
    %vm4455 = vcmask 539648
    %v4456 = vsel %vm4455, %v4400, %v4402
    %v4457 = vsel %vm4455, %v4402, %v4404
    %v4458 = vsel %vm4455, %v4404, %v4406
    %v4459 = vsel %vm4455, %v4406, %v4408
    %v4460 = vsel %vm4455, %v4408, %v4410
    %v4461 = vsel %vm4455, %v4410, %v4412
    %v4462 = vsel %vm4455, %v4414, %v4416
    %v4463 = vsel %vm4455, %v4416, %v4418
    %v4464 = vsel %vm4455, %v4418, %v4420
    %v4465 = vsel %vm4455, %v4420, %v4422
    %v4466 = vsel %vm4455, %v4422, %v4424
    %v4467 = vsel %vm4455, %v4424, %v4426
    %v4468 = vsel %vm4455, %v4428, %v4430
    %v4469 = vsel %vm4455, %v4430, %v4432
    %v4470 = vsel %vm4455, %v4432, %v4434
    %v4471 = vsel %vm4455, %v4434, %v4436
    %v4472 = vsel %vm4455, %v4436, %v4438
    %v4473 = vsel %vm4455, %v4438, %v4440
    %v4474 = vsel %vm4455, %v4442, %v4444
    %v4475 = vsel %vm4455, %v4444, %v4446
    %v4476 = vsel %vm4455, %v4446, %v4448
    %v4477 = vsel %vm4455, %v4448, %v4450
    %v4478 = vsel %vm4455, %v4450, %v4452
    %v4479 = vsel %vm4455, %v4452, %v4454
    %v4509 = vsel %vm195, %v4398, 0
    %4511 = vmatpush.msra.mxu0 0.0
    %4512 = vmatpush.msra.mxu0 0.0
    %4513 = vmatpush.msra.mxu0 0.0
    %4514 = vmatpush.msra.mxu0 0.0
    %4515 = vmatpush.msra.mxu0 0.0
    %4516 = vmatpush.msra.mxu0 0.0
    %4517 = vmatpush.msra.mxu0 0.0
    %4518 = vmatpush.msra.mxu0 0.0
    %4519 = vmatpush.msra.mxu0 0.0
    %4520 = vmatpush.msra.mxu0 0.0
    %4521 = vmatpush.msra.mxu0 0.0
    %4522 = vmatpush.msra.mxu0 0.0
    %4523 = vmatpush.msra.mxu0 %v4474
    %4524 = vmatpush.msra.mxu0 %v4468
    %4525 = vmatpush.msra.mxu0 %v4462
    %4526 = vmatpush.msra.mxu0 %v4456
    %4527 = vmatmul.f32.gmra.mxu0 %v4509
    %v4528 = vpop.f32.mrf.mxu0
    %v4529 = vadd.f32 0.0, %v4528
    %4530 = vdwg.mxu0
    %4531 = vmatpush.msra.mxu0 0.0
    %4532 = vmatpush.msra.mxu0 0.0
    %4533 = vmatpush.msra.mxu0 0.0
    %4534 = vmatpush.msra.mxu0 0.0
    %4535 = vmatpush.msra.mxu0 0.0
    %4536 = vmatpush.msra.mxu0 0.0
    %4537 = vmatpush.msra.mxu0 0.0
    %4538 = vmatpush.msra.mxu0 0.0
    %4539 = vmatpush.msra.mxu0 0.0
    %4540 = vmatpush.msra.mxu0 0.0
    %4541 = vmatpush.msra.mxu0 0.0
    %4542 = vmatpush.msra.mxu0 0.0
    %4543 = vmatpush.msra.mxu0 %v4475
    %4544 = vmatpush.msra.mxu0 %v4469
    %4545 = vmatpush.msra.mxu0 %v4463
    %4546 = vmatpush.msra.mxu0 %v4457
    %4547 = vmatmul.f32.gmra.mxu0 %v4509
    %v4548 = vpop.f32.mrf.mxu0
    %v4549 = vadd.f32 0.0, %v4548
    %4550 = vdwg.mxu0
    %4551 = vmatpush.msra.mxu0 0.0
    %4552 = vmatpush.msra.mxu0 0.0
    %4553 = vmatpush.msra.mxu0 0.0
    %4554 = vmatpush.msra.mxu0 0.0
    %4555 = vmatpush.msra.mxu0 0.0
    %4556 = vmatpush.msra.mxu0 0.0
    %4557 = vmatpush.msra.mxu0 0.0
    %4558 = vmatpush.msra.mxu0 0.0
    %4559 = vmatpush.msra.mxu0 0.0
    %4560 = vmatpush.msra.mxu0 0.0
    %4561 = vmatpush.msra.mxu0 0.0
    %4562 = vmatpush.msra.mxu0 0.0
    %4563 = vmatpush.msra.mxu0 %v4476
    %4564 = vmatpush.msra.mxu0 %v4470
    %4565 = vmatpush.msra.mxu0 %v4464
    %4566 = vmatpush.msra.mxu0 %v4458
    %4567 = vmatmul.f32.gmra.mxu0 %v4509
    %v4568 = vpop.f32.mrf.mxu0
    %v4569 = vadd.f32 0.0, %v4568
    %4570 = vdwg.mxu0
    %4571 = vmatpush.msra.mxu0 0.0
    %4572 = vmatpush.msra.mxu0 0.0
    %4573 = vmatpush.msra.mxu0 0.0
    %4574 = vmatpush.msra.mxu0 0.0
    %4575 = vmatpush.msra.mxu0 0.0
    %4576 = vmatpush.msra.mxu0 0.0
    %4577 = vmatpush.msra.mxu0 0.0
    %4578 = vmatpush.msra.mxu0 0.0
    %4579 = vmatpush.msra.mxu0 0.0
    %4580 = vmatpush.msra.mxu0 0.0
    %4581 = vmatpush.msra.mxu0 0.0
    %4582 = vmatpush.msra.mxu0 0.0
    %4583 = vmatpush.msra.mxu0 %v4477
    %4584 = vmatpush.msra.mxu0 %v4471
    %4585 = vmatpush.msra.mxu0 %v4465
    %4586 = vmatpush.msra.mxu0 %v4459
    %4587 = vmatmul.f32.gmra.mxu0 %v4509
    %v4588 = vpop.f32.mrf.mxu0
    %v4589 = vadd.f32 0.0, %v4588
    %4590 = vdwg.mxu0
    %4591 = vmatpush.msra.mxu0 0.0
    %4592 = vmatpush.msra.mxu0 0.0
    %4593 = vmatpush.msra.mxu0 0.0
    %4594 = vmatpush.msra.mxu0 0.0
    %4595 = vmatpush.msra.mxu0 0.0
    %4596 = vmatpush.msra.mxu0 0.0
    %4597 = vmatpush.msra.mxu0 0.0
    %4598 = vmatpush.msra.mxu0 0.0
    %4599 = vmatpush.msra.mxu0 0.0
    %4600 = vmatpush.msra.mxu0 0.0
    %4601 = vmatpush.msra.mxu0 0.0
    %4602 = vmatpush.msra.mxu0 0.0
    %4603 = vmatpush.msra.mxu0 %v4478
    %4604 = vmatpush.msra.mxu0 %v4472
    %4605 = vmatpush.msra.mxu0 %v4466
    %4606 = vmatpush.msra.mxu0 %v4460
    %4607 = vmatmul.f32.gmra.mxu0 %v4509
    %v4608 = vpop.f32.mrf.mxu0
    %v4609 = vadd.f32 0.0, %v4608
    %4610 = vdwg.mxu0
    %4611 = vmatpush.msra.mxu0 0.0
    %4612 = vmatpush.msra.mxu0 0.0
    %4613 = vmatpush.msra.mxu0 0.0
    %4614 = vmatpush.msra.mxu0 0.0
    %4615 = vmatpush.msra.mxu0 0.0
    %4616 = vmatpush.msra.mxu0 0.0
    %4617 = vmatpush.msra.mxu0 0.0
    %4618 = vmatpush.msra.mxu0 0.0
    %4619 = vmatpush.msra.mxu0 0.0
    %4620 = vmatpush.msra.mxu0 0.0
    %4621 = vmatpush.msra.mxu0 0.0
    %4622 = vmatpush.msra.mxu0 0.0
    %4623 = vmatpush.msra.mxu0 %v4479
    %4624 = vmatpush.msra.mxu0 %v4473
    %4625 = vmatpush.msra.mxu0 %v4467
    %4626 = vmatpush.msra.mxu0 %v4461
    %4627 = vmatmul.f32.gmra.mxu0 %v4509
    %v4628 = vpop.f32.mrf.mxu0
    %v4629 = vadd.f32 0.0, %v4628
    %4630 = vdwg.mxu0
    %4631 = vmatpush.msra.mxu0 0.0
    %4632 = vmatpush.msra.mxu0 0.0
    %4633 = vmatpush.msra.mxu0 0.0
    %4634 = vmatpush.msra.mxu0 0.0
    %4635 = vmatpush.msra.mxu0 0.0
    %4636 = vmatpush.msra.mxu0 0.0
    %4637 = vmatpush.msra.mxu0 0.0
    %4638 = vmatpush.msra.mxu0 0.0
    %4639 = vmatpush.msra.mxu0 0.0
    %4640 = vmatpush.msra.mxu0 0.0
    %4641 = vmatpush.msra.mxu0 0.0
    %4642 = vmatpush.msra.mxu0 0.0
    %4643 = vmatpush.msra.mxu0 %v4454
    %4644 = vmatpush.msra.mxu0 %v4440
    %4645 = vmatpush.msra.mxu0 %v4426
    %4646 = vmatpush.msra.mxu0 %v4412
    %4647 = vmatmul.f32.gmra.mxu0 %v4509
    %v4648 = vpop.f32.mrf.mxu0
    %v4649 = vadd.f32 0.0, %v4648
    %4650 = vdwg.mxu0
    %v4651 = vadd.f32 %v4390, %v4529
    %v4652 = vadd.f32 %v4391, %v4549
    %v4653 = vadd.f32 %v4392, %v4569
    %v4654 = vadd.f32 %v4393, %v4589
    %v4655 = vadd.f32 %v4394, %v4609
    %v4656 = vadd.f32 %v4395, %v4629
    %v4657 = vadd.f32 %v4396, %v4649
    %s4658 = scalar_lea.vmem %s1, 36
    %v4659 = vld [vmem:[%s4658] sm:$0x3]
    %4660 = vrot.lane.b32.xlu0 %v27, 65
    %v4661 = vpop.permute.xlu0 %4660
    %4662 = vrot.lane.b32.xlu0 %v28, 65
    %v4663 = vpop.permute.xlu0 %4662
    %4664 = vrot.lane.b32.xlu0 %v29, 65
    %v4665 = vpop.permute.xlu0 %4664
    %4666 = vrot.lane.b32.xlu0 %v30, 65
    %v4667 = vpop.permute.xlu0 %4666
    %4668 = vrot.lane.b32.xlu0 %v31, 65
    %v4669 = vpop.permute.xlu0 %4668
    %4670 = vrot.lane.b32.xlu0 %v32, 65
    %v4671 = vpop.permute.xlu0 %4670
    %4672 = vrot.lane.b32.xlu0 %v33, 65
    %v4673 = vpop.permute.xlu0 %4672
    %4674 = vrot.lane.b32.xlu0 %v34, 65
    %v4675 = vpop.permute.xlu0 %4674
    %4676 = vrot.lane.b32.xlu0 %v35, 65
    %v4677 = vpop.permute.xlu0 %4676
    %4678 = vrot.lane.b32.xlu0 %v36, 65
    %v4679 = vpop.permute.xlu0 %4678
    %4680 = vrot.lane.b32.xlu0 %v37, 65
    %v4681 = vpop.permute.xlu0 %4680
    %4682 = vrot.lane.b32.xlu0 %v38, 65
    %v4683 = vpop.permute.xlu0 %4682
    %4684 = vrot.lane.b32.xlu0 %v39, 65
    %v4685 = vpop.permute.xlu0 %4684
    %4686 = vrot.lane.b32.xlu0 %v40, 65
    %v4687 = vpop.permute.xlu0 %4686
    %4688 = vrot.lane.b32.xlu0 %v41, 65
    %v4689 = vpop.permute.xlu0 %4688
    %4690 = vrot.lane.b32.xlu0 %v42, 65
    %v4691 = vpop.permute.xlu0 %4690
    %4692 = vrot.lane.b32.xlu0 %v43, 65
    %v4693 = vpop.permute.xlu0 %4692
    %4694 = vrot.lane.b32.xlu0 %v44, 65
    %v4695 = vpop.permute.xlu0 %4694
    %4696 = vrot.lane.b32.xlu0 %v45, 65
    %v4697 = vpop.permute.xlu0 %4696
    %4698 = vrot.lane.b32.xlu0 %v46, 65
    %v4699 = vpop.permute.xlu0 %4698
    %4700 = vrot.lane.b32.xlu0 %v47, 65
    %v4701 = vpop.permute.xlu0 %4700
    %4702 = vrot.lane.b32.xlu0 %v48, 65
    %v4703 = vpop.permute.xlu0 %4702
    %4704 = vrot.lane.b32.xlu0 %v49, 65
    %v4705 = vpop.permute.xlu0 %4704
    %4706 = vrot.lane.b32.xlu0 %v50, 65
    %v4707 = vpop.permute.xlu0 %4706
    %4708 = vrot.lane.b32.xlu0 %v51, 65
    %v4709 = vpop.permute.xlu0 %4708
    %4710 = vrot.lane.b32.xlu0 %v52, 65
    %v4711 = vpop.permute.xlu0 %4710
    %4712 = vrot.lane.b32.xlu0 %v53, 65
    %v4713 = vpop.permute.xlu0 %4712
    %4714 = vrot.lane.b32.xlu0 %v54, 65
    %v4715 = vpop.permute.xlu0 %4714
    %vm4716 = vcmask 531456
    %v4717 = vsel %vm4716, %v4661, %v4663
    %v4718 = vsel %vm4716, %v4663, %v4665
    %v4719 = vsel %vm4716, %v4665, %v4667
    %v4720 = vsel %vm4716, %v4667, %v4669
    %v4721 = vsel %vm4716, %v4669, %v4671
    %v4722 = vsel %vm4716, %v4671, %v4673
    %v4723 = vsel %vm4716, %v4675, %v4677
    %v4724 = vsel %vm4716, %v4677, %v4679
    %v4725 = vsel %vm4716, %v4679, %v4681
    %v4726 = vsel %vm4716, %v4681, %v4683
    %v4727 = vsel %vm4716, %v4683, %v4685
    %v4728 = vsel %vm4716, %v4685, %v4687
    %v4729 = vsel %vm4716, %v4689, %v4691
    %v4730 = vsel %vm4716, %v4691, %v4693
    %v4731 = vsel %vm4716, %v4693, %v4695
    %v4732 = vsel %vm4716, %v4695, %v4697
    %v4733 = vsel %vm4716, %v4697, %v4699
    %v4734 = vsel %vm4716, %v4699, %v4701
    %v4735 = vsel %vm4716, %v4703, %v4705
    %v4736 = vsel %vm4716, %v4705, %v4707
    %v4737 = vsel %vm4716, %v4707, %v4709
    %v4738 = vsel %vm4716, %v4709, %v4711
    %v4739 = vsel %vm4716, %v4711, %v4713
    %v4740 = vsel %vm4716, %v4713, %v4715
    %v4770 = vsel %vm195, %v4659, 0
    %4772 = vmatpush.msra.mxu0 0.0
    %4773 = vmatpush.msra.mxu0 0.0
    %4774 = vmatpush.msra.mxu0 0.0
    %4775 = vmatpush.msra.mxu0 0.0
    %4776 = vmatpush.msra.mxu0 0.0
    %4777 = vmatpush.msra.mxu0 0.0
    %4778 = vmatpush.msra.mxu0 0.0
    %4779 = vmatpush.msra.mxu0 0.0
    %4780 = vmatpush.msra.mxu0 0.0
    %4781 = vmatpush.msra.mxu0 0.0
    %4782 = vmatpush.msra.mxu0 0.0
    %4783 = vmatpush.msra.mxu0 0.0
    %4784 = vmatpush.msra.mxu0 %v4735
    %4785 = vmatpush.msra.mxu0 %v4729
    %4786 = vmatpush.msra.mxu0 %v4723
    %4787 = vmatpush.msra.mxu0 %v4717
    %4788 = vmatmul.f32.gmra.mxu0 %v4770
    %v4789 = vpop.f32.mrf.mxu0
    %v4790 = vadd.f32 0.0, %v4789
    %4791 = vdwg.mxu0
    %4792 = vmatpush.msra.mxu0 0.0
    %4793 = vmatpush.msra.mxu0 0.0
    %4794 = vmatpush.msra.mxu0 0.0
    %4795 = vmatpush.msra.mxu0 0.0
    %4796 = vmatpush.msra.mxu0 0.0
    %4797 = vmatpush.msra.mxu0 0.0
    %4798 = vmatpush.msra.mxu0 0.0
    %4799 = vmatpush.msra.mxu0 0.0
    %4800 = vmatpush.msra.mxu0 0.0
    %4801 = vmatpush.msra.mxu0 0.0
    %4802 = vmatpush.msra.mxu0 0.0
    %4803 = vmatpush.msra.mxu0 0.0
    %4804 = vmatpush.msra.mxu0 %v4736
    %4805 = vmatpush.msra.mxu0 %v4730
    %4806 = vmatpush.msra.mxu0 %v4724
    %4807 = vmatpush.msra.mxu0 %v4718
    %4808 = vmatmul.f32.gmra.mxu0 %v4770
    %v4809 = vpop.f32.mrf.mxu0
    %v4810 = vadd.f32 0.0, %v4809
    %4811 = vdwg.mxu0
    %4812 = vmatpush.msra.mxu0 0.0
    %4813 = vmatpush.msra.mxu0 0.0
    %4814 = vmatpush.msra.mxu0 0.0
    %4815 = vmatpush.msra.mxu0 0.0
    %4816 = vmatpush.msra.mxu0 0.0
    %4817 = vmatpush.msra.mxu0 0.0
    %4818 = vmatpush.msra.mxu0 0.0
    %4819 = vmatpush.msra.mxu0 0.0
    %4820 = vmatpush.msra.mxu0 0.0
    %4821 = vmatpush.msra.mxu0 0.0
    %4822 = vmatpush.msra.mxu0 0.0
    %4823 = vmatpush.msra.mxu0 0.0
    %4824 = vmatpush.msra.mxu0 %v4737
    %4825 = vmatpush.msra.mxu0 %v4731
    %4826 = vmatpush.msra.mxu0 %v4725
    %4827 = vmatpush.msra.mxu0 %v4719
    %4828 = vmatmul.f32.gmra.mxu0 %v4770
    %v4829 = vpop.f32.mrf.mxu0
    %v4830 = vadd.f32 0.0, %v4829
    %4831 = vdwg.mxu0
    %4832 = vmatpush.msra.mxu0 0.0
    %4833 = vmatpush.msra.mxu0 0.0
    %4834 = vmatpush.msra.mxu0 0.0
    %4835 = vmatpush.msra.mxu0 0.0
    %4836 = vmatpush.msra.mxu0 0.0
    %4837 = vmatpush.msra.mxu0 0.0
    %4838 = vmatpush.msra.mxu0 0.0
    %4839 = vmatpush.msra.mxu0 0.0
    %4840 = vmatpush.msra.mxu0 0.0
    %4841 = vmatpush.msra.mxu0 0.0
    %4842 = vmatpush.msra.mxu0 0.0
    %4843 = vmatpush.msra.mxu0 0.0
    %4844 = vmatpush.msra.mxu0 %v4738
    %4845 = vmatpush.msra.mxu0 %v4732
    %4846 = vmatpush.msra.mxu0 %v4726
    %4847 = vmatpush.msra.mxu0 %v4720
    %4848 = vmatmul.f32.gmra.mxu0 %v4770
    %v4849 = vpop.f32.mrf.mxu0
    %v4850 = vadd.f32 0.0, %v4849
    %4851 = vdwg.mxu0
    %4852 = vmatpush.msra.mxu0 0.0
    %4853 = vmatpush.msra.mxu0 0.0
    %4854 = vmatpush.msra.mxu0 0.0
    %4855 = vmatpush.msra.mxu0 0.0
    %4856 = vmatpush.msra.mxu0 0.0
    %4857 = vmatpush.msra.mxu0 0.0
    %4858 = vmatpush.msra.mxu0 0.0
    %4859 = vmatpush.msra.mxu0 0.0
    %4860 = vmatpush.msra.mxu0 0.0
    %4861 = vmatpush.msra.mxu0 0.0
    %4862 = vmatpush.msra.mxu0 0.0
    %4863 = vmatpush.msra.mxu0 0.0
    %4864 = vmatpush.msra.mxu0 %v4739
    %4865 = vmatpush.msra.mxu0 %v4733
    %4866 = vmatpush.msra.mxu0 %v4727
    %4867 = vmatpush.msra.mxu0 %v4721
    %4868 = vmatmul.f32.gmra.mxu0 %v4770
    %v4869 = vpop.f32.mrf.mxu0
    %v4870 = vadd.f32 0.0, %v4869
    %4871 = vdwg.mxu0
    %4872 = vmatpush.msra.mxu0 0.0
    %4873 = vmatpush.msra.mxu0 0.0
    %4874 = vmatpush.msra.mxu0 0.0
    %4875 = vmatpush.msra.mxu0 0.0
    %4876 = vmatpush.msra.mxu0 0.0
    %4877 = vmatpush.msra.mxu0 0.0
    %4878 = vmatpush.msra.mxu0 0.0
    %4879 = vmatpush.msra.mxu0 0.0
    %4880 = vmatpush.msra.mxu0 0.0
    %4881 = vmatpush.msra.mxu0 0.0
    %4882 = vmatpush.msra.mxu0 0.0
    %4883 = vmatpush.msra.mxu0 0.0
    %4884 = vmatpush.msra.mxu0 %v4740
    %4885 = vmatpush.msra.mxu0 %v4734
    %4886 = vmatpush.msra.mxu0 %v4728
    %4887 = vmatpush.msra.mxu0 %v4722
    %4888 = vmatmul.f32.gmra.mxu0 %v4770
    %v4889 = vpop.f32.mrf.mxu0
    %v4890 = vadd.f32 0.0, %v4889
    %4891 = vdwg.mxu0
    %4892 = vmatpush.msra.mxu0 0.0
    %4893 = vmatpush.msra.mxu0 0.0
    %4894 = vmatpush.msra.mxu0 0.0
    %4895 = vmatpush.msra.mxu0 0.0
    %4896 = vmatpush.msra.mxu0 0.0
    %4897 = vmatpush.msra.mxu0 0.0
    %4898 = vmatpush.msra.mxu0 0.0
    %4899 = vmatpush.msra.mxu0 0.0
    %4900 = vmatpush.msra.mxu0 0.0
    %4901 = vmatpush.msra.mxu0 0.0
    %4902 = vmatpush.msra.mxu0 0.0
    %4903 = vmatpush.msra.mxu0 0.0
    %4904 = vmatpush.msra.mxu0 %v4715
    %4905 = vmatpush.msra.mxu0 %v4701
    %4906 = vmatpush.msra.mxu0 %v4687
    %4907 = vmatpush.msra.mxu0 %v4673
    %4908 = vmatmul.f32.gmra.mxu0 %v4770
    %v4909 = vpop.f32.mrf.mxu0
    %v4910 = vadd.f32 0.0, %v4909
    %4911 = vdwg.mxu0
    %v4912 = vadd.f32 %v4651, %v4790
    %v4913 = vadd.f32 %v4652, %v4810
    %v4914 = vadd.f32 %v4653, %v4830
    %v4915 = vadd.f32 %v4654, %v4850
    %v4916 = vadd.f32 %v4655, %v4870
    %v4917 = vadd.f32 %v4656, %v4890
    %v4918 = vadd.f32 %v4657, %v4910
    %s4919 = scalar_lea.vmem %s1, 38
    %v4920 = vld [vmem:[%s4919] sm:$0x3]
    %4921 = vrot.lane.b32.xlu0 %v27, 64
    %v4922 = vpop.permute.xlu0 %4921
    %4923 = vrot.lane.b32.xlu0 %v28, 64
    %v4924 = vpop.permute.xlu0 %4923
    %4925 = vrot.lane.b32.xlu0 %v29, 64
    %v4926 = vpop.permute.xlu0 %4925
    %4927 = vrot.lane.b32.xlu0 %v30, 64
    %v4928 = vpop.permute.xlu0 %4927
    %4929 = vrot.lane.b32.xlu0 %v31, 64
    %v4930 = vpop.permute.xlu0 %4929
    %4931 = vrot.lane.b32.xlu0 %v32, 64
    %v4932 = vpop.permute.xlu0 %4931
    %4933 = vrot.lane.b32.xlu0 %v33, 64
    %v4934 = vpop.permute.xlu0 %4933
    %4935 = vrot.lane.b32.xlu0 %v34, 64
    %v4936 = vpop.permute.xlu0 %4935
    %4937 = vrot.lane.b32.xlu0 %v35, 64
    %v4938 = vpop.permute.xlu0 %4937
    %4939 = vrot.lane.b32.xlu0 %v36, 64
    %v4940 = vpop.permute.xlu0 %4939
    %4941 = vrot.lane.b32.xlu0 %v37, 64
    %v4942 = vpop.permute.xlu0 %4941
    %4943 = vrot.lane.b32.xlu0 %v38, 64
    %v4944 = vpop.permute.xlu0 %4943
    %4945 = vrot.lane.b32.xlu0 %v39, 64
    %v4946 = vpop.permute.xlu0 %4945
    %4947 = vrot.lane.b32.xlu0 %v40, 64
    %v4948 = vpop.permute.xlu0 %4947
    %4949 = vrot.lane.b32.xlu0 %v41, 64
    %v4950 = vpop.permute.xlu0 %4949
    %4951 = vrot.lane.b32.xlu0 %v42, 64
    %v4952 = vpop.permute.xlu0 %4951
    %4953 = vrot.lane.b32.xlu0 %v43, 64
    %v4954 = vpop.permute.xlu0 %4953
    %4955 = vrot.lane.b32.xlu0 %v44, 64
    %v4956 = vpop.permute.xlu0 %4955
    %4957 = vrot.lane.b32.xlu0 %v45, 64
    %v4958 = vpop.permute.xlu0 %4957
    %4959 = vrot.lane.b32.xlu0 %v46, 64
    %v4960 = vpop.permute.xlu0 %4959
    %4961 = vrot.lane.b32.xlu0 %v47, 64
    %v4962 = vpop.permute.xlu0 %4961
    %4963 = vrot.lane.b32.xlu0 %v48, 64
    %v4964 = vpop.permute.xlu0 %4963
    %4965 = vrot.lane.b32.xlu0 %v49, 64
    %v4966 = vpop.permute.xlu0 %4965
    %4967 = vrot.lane.b32.xlu0 %v50, 64
    %v4968 = vpop.permute.xlu0 %4967
    %4969 = vrot.lane.b32.xlu0 %v51, 64
    %v4970 = vpop.permute.xlu0 %4969
    %4971 = vrot.lane.b32.xlu0 %v52, 64
    %v4972 = vpop.permute.xlu0 %4971
    %4973 = vrot.lane.b32.xlu0 %v53, 64
    %v4974 = vpop.permute.xlu0 %4973
    %4975 = vrot.lane.b32.xlu0 %v54, 64
    %v4976 = vpop.permute.xlu0 %4975
    %vm4977 = vcmask 523264
    %v4978 = vsel %vm4977, %v4922, %v4924
    %v4979 = vsel %vm4977, %v4924, %v4926
    %v4980 = vsel %vm4977, %v4926, %v4928
    %v4981 = vsel %vm4977, %v4928, %v4930
    %v4982 = vsel %vm4977, %v4930, %v4932
    %v4983 = vsel %vm4977, %v4932, %v4934
    %v4984 = vsel %vm4977, %v4936, %v4938
    %v4985 = vsel %vm4977, %v4938, %v4940
    %v4986 = vsel %vm4977, %v4940, %v4942
    %v4987 = vsel %vm4977, %v4942, %v4944
    %v4988 = vsel %vm4977, %v4944, %v4946
    %v4989 = vsel %vm4977, %v4946, %v4948
    %v4990 = vsel %vm4977, %v4950, %v4952
    %v4991 = vsel %vm4977, %v4952, %v4954
    %v4992 = vsel %vm4977, %v4954, %v4956
    %v4993 = vsel %vm4977, %v4956, %v4958
    %v4994 = vsel %vm4977, %v4958, %v4960
    %v4995 = vsel %vm4977, %v4960, %v4962
    %v4996 = vsel %vm4977, %v4964, %v4966
    %v4997 = vsel %vm4977, %v4966, %v4968
    %v4998 = vsel %vm4977, %v4968, %v4970
    %v4999 = vsel %vm4977, %v4970, %v4972
    %v5000 = vsel %vm4977, %v4972, %v4974
    %v5001 = vsel %vm4977, %v4974, %v4976
    %v5031 = vsel %vm195, %v4920, 0
    %5033 = vmatpush.msra.mxu0 0.0
    %5034 = vmatpush.msra.mxu0 0.0
    %5035 = vmatpush.msra.mxu0 0.0
    %5036 = vmatpush.msra.mxu0 0.0
    %5037 = vmatpush.msra.mxu0 0.0
    %5038 = vmatpush.msra.mxu0 0.0
    %5039 = vmatpush.msra.mxu0 0.0
    %5040 = vmatpush.msra.mxu0 0.0
    %5041 = vmatpush.msra.mxu0 0.0
    %5042 = vmatpush.msra.mxu0 0.0
    %5043 = vmatpush.msra.mxu0 0.0
    %5044 = vmatpush.msra.mxu0 0.0
    %5045 = vmatpush.msra.mxu0 %v4996
    %5046 = vmatpush.msra.mxu0 %v4990
    %5047 = vmatpush.msra.mxu0 %v4984
    %5048 = vmatpush.msra.mxu0 %v4978
    %5049 = vmatmul.f32.gmra.mxu0 %v5031
    %v5050 = vpop.f32.mrf.mxu0
    %v5051 = vadd.f32 0.0, %v5050
    %5052 = vdwg.mxu0
    %5053 = vmatpush.msra.mxu0 0.0
    %5054 = vmatpush.msra.mxu0 0.0
    %5055 = vmatpush.msra.mxu0 0.0
    %5056 = vmatpush.msra.mxu0 0.0
    %5057 = vmatpush.msra.mxu0 0.0
    %5058 = vmatpush.msra.mxu0 0.0
    %5059 = vmatpush.msra.mxu0 0.0
    %5060 = vmatpush.msra.mxu0 0.0
    %5061 = vmatpush.msra.mxu0 0.0
    %5062 = vmatpush.msra.mxu0 0.0
    %5063 = vmatpush.msra.mxu0 0.0
    %5064 = vmatpush.msra.mxu0 0.0
    %5065 = vmatpush.msra.mxu0 %v4997
    %5066 = vmatpush.msra.mxu0 %v4991
    %5067 = vmatpush.msra.mxu0 %v4985
    %5068 = vmatpush.msra.mxu0 %v4979
    %5069 = vmatmul.f32.gmra.mxu0 %v5031
    %v5070 = vpop.f32.mrf.mxu0
    %v5071 = vadd.f32 0.0, %v5070
    %5072 = vdwg.mxu0
    %5073 = vmatpush.msra.mxu0 0.0
    %5074 = vmatpush.msra.mxu0 0.0
    %5075 = vmatpush.msra.mxu0 0.0
    %5076 = vmatpush.msra.mxu0 0.0
    %5077 = vmatpush.msra.mxu0 0.0
    %5078 = vmatpush.msra.mxu0 0.0
    %5079 = vmatpush.msra.mxu0 0.0
    %5080 = vmatpush.msra.mxu0 0.0
    %5081 = vmatpush.msra.mxu0 0.0
    %5082 = vmatpush.msra.mxu0 0.0
    %5083 = vmatpush.msra.mxu0 0.0
    %5084 = vmatpush.msra.mxu0 0.0
    %5085 = vmatpush.msra.mxu0 %v4998
    %5086 = vmatpush.msra.mxu0 %v4992
    %5087 = vmatpush.msra.mxu0 %v4986
    %5088 = vmatpush.msra.mxu0 %v4980
    %5089 = vmatmul.f32.gmra.mxu0 %v5031
    %v5090 = vpop.f32.mrf.mxu0
    %v5091 = vadd.f32 0.0, %v5090
    %5092 = vdwg.mxu0
    %5093 = vmatpush.msra.mxu0 0.0
    %5094 = vmatpush.msra.mxu0 0.0
    %5095 = vmatpush.msra.mxu0 0.0
    %5096 = vmatpush.msra.mxu0 0.0
    %5097 = vmatpush.msra.mxu0 0.0
    %5098 = vmatpush.msra.mxu0 0.0
    %5099 = vmatpush.msra.mxu0 0.0
    %5100 = vmatpush.msra.mxu0 0.0
    %5101 = vmatpush.msra.mxu0 0.0
    %5102 = vmatpush.msra.mxu0 0.0
    %5103 = vmatpush.msra.mxu0 0.0
    %5104 = vmatpush.msra.mxu0 0.0
    %5105 = vmatpush.msra.mxu0 %v4999
    %5106 = vmatpush.msra.mxu0 %v4993
    %5107 = vmatpush.msra.mxu0 %v4987
    %5108 = vmatpush.msra.mxu0 %v4981
    %5109 = vmatmul.f32.gmra.mxu0 %v5031
    %v5110 = vpop.f32.mrf.mxu0
    %v5111 = vadd.f32 0.0, %v5110
    %5112 = vdwg.mxu0
    %5113 = vmatpush.msra.mxu0 0.0
    %5114 = vmatpush.msra.mxu0 0.0
    %5115 = vmatpush.msra.mxu0 0.0
    %5116 = vmatpush.msra.mxu0 0.0
    %5117 = vmatpush.msra.mxu0 0.0
    %5118 = vmatpush.msra.mxu0 0.0
    %5119 = vmatpush.msra.mxu0 0.0
    %5120 = vmatpush.msra.mxu0 0.0
    %5121 = vmatpush.msra.mxu0 0.0
    %5122 = vmatpush.msra.mxu0 0.0
    %5123 = vmatpush.msra.mxu0 0.0
    %5124 = vmatpush.msra.mxu0 0.0
    %5125 = vmatpush.msra.mxu0 %v5000
    %5126 = vmatpush.msra.mxu0 %v4994
    %5127 = vmatpush.msra.mxu0 %v4988
    %5128 = vmatpush.msra.mxu0 %v4982
    %5129 = vmatmul.f32.gmra.mxu0 %v5031
    %v5130 = vpop.f32.mrf.mxu0
    %v5131 = vadd.f32 0.0, %v5130
    %5132 = vdwg.mxu0
    %5133 = vmatpush.msra.mxu0 0.0
    %5134 = vmatpush.msra.mxu0 0.0
    %5135 = vmatpush.msra.mxu0 0.0
    %5136 = vmatpush.msra.mxu0 0.0
    %5137 = vmatpush.msra.mxu0 0.0
    %5138 = vmatpush.msra.mxu0 0.0
    %5139 = vmatpush.msra.mxu0 0.0
    %5140 = vmatpush.msra.mxu0 0.0
    %5141 = vmatpush.msra.mxu0 0.0
    %5142 = vmatpush.msra.mxu0 0.0
    %5143 = vmatpush.msra.mxu0 0.0
    %5144 = vmatpush.msra.mxu0 0.0
    %5145 = vmatpush.msra.mxu0 %v5001
    %5146 = vmatpush.msra.mxu0 %v4995
    %5147 = vmatpush.msra.mxu0 %v4989
    %5148 = vmatpush.msra.mxu0 %v4983
    %5149 = vmatmul.f32.gmra.mxu0 %v5031
    %v5150 = vpop.f32.mrf.mxu0
    %v5151 = vadd.f32 0.0, %v5150
    %5152 = vdwg.mxu0
    %5153 = vmatpush.msra.mxu0 0.0
    %5154 = vmatpush.msra.mxu0 0.0
    %5155 = vmatpush.msra.mxu0 0.0
    %5156 = vmatpush.msra.mxu0 0.0
    %5157 = vmatpush.msra.mxu0 0.0
    %5158 = vmatpush.msra.mxu0 0.0
    %5159 = vmatpush.msra.mxu0 0.0
    %5160 = vmatpush.msra.mxu0 0.0
    %5161 = vmatpush.msra.mxu0 0.0
    %5162 = vmatpush.msra.mxu0 0.0
    %5163 = vmatpush.msra.mxu0 0.0
    %5164 = vmatpush.msra.mxu0 0.0
    %5165 = vmatpush.msra.mxu0 %v4976
    %5166 = vmatpush.msra.mxu0 %v4962
    %5167 = vmatpush.msra.mxu0 %v4948
    %5168 = vmatpush.msra.mxu0 %v4934
    %5169 = vmatmul.f32.gmra.mxu0 %v5031
    %v5170 = vpop.f32.mrf.mxu0
    %v5171 = vadd.f32 0.0, %v5170
    %5172 = vdwg.mxu0
    %v5173 = vadd.f32 %v4912, %v5051
    %v5174 = vadd.f32 %v4913, %v5071
    %v5175 = vadd.f32 %v4914, %v5091
    %v5176 = vadd.f32 %v4915, %v5111
    %v5177 = vadd.f32 %v4916, %v5131
    %v5178 = vadd.f32 %v4917, %v5151
    %v5179 = vadd.f32 %v4918, %v5171
    %s5180 = scalar_lea.vmem %s1, 40
    %v5181 = vld [vmem:[%s5180] sm:$0x3]
    %5182 = vrot.lane.b32.xlu0 %v27, 48
    %v5183 = vpop.permute.xlu0 %5182
    %5184 = vrot.lane.b32.xlu0 %v28, 48
    %v5185 = vpop.permute.xlu0 %5184
    %5186 = vrot.lane.b32.xlu0 %v29, 48
    %v5187 = vpop.permute.xlu0 %5186
    %5188 = vrot.lane.b32.xlu0 %v30, 48
    %v5189 = vpop.permute.xlu0 %5188
    %5190 = vrot.lane.b32.xlu0 %v31, 48
    %v5191 = vpop.permute.xlu0 %5190
    %5192 = vrot.lane.b32.xlu0 %v32, 48
    %v5193 = vpop.permute.xlu0 %5192
    %5194 = vrot.lane.b32.xlu0 %v33, 48
    %v5195 = vpop.permute.xlu0 %5194
    %5196 = vrot.lane.b32.xlu0 %v34, 48
    %v5197 = vpop.permute.xlu0 %5196
    %5198 = vrot.lane.b32.xlu0 %v35, 48
    %v5199 = vpop.permute.xlu0 %5198
    %5200 = vrot.lane.b32.xlu0 %v36, 48
    %v5201 = vpop.permute.xlu0 %5200
    %5202 = vrot.lane.b32.xlu0 %v37, 48
    %v5203 = vpop.permute.xlu0 %5202
    %5204 = vrot.lane.b32.xlu0 %v38, 48
    %v5205 = vpop.permute.xlu0 %5204
    %5206 = vrot.lane.b32.xlu0 %v39, 48
    %v5207 = vpop.permute.xlu0 %5206
    %5208 = vrot.lane.b32.xlu0 %v40, 48
    %v5209 = vpop.permute.xlu0 %5208
    %5210 = vrot.lane.b32.xlu0 %v41, 48
    %v5211 = vpop.permute.xlu0 %5210
    %5212 = vrot.lane.b32.xlu0 %v42, 48
    %v5213 = vpop.permute.xlu0 %5212
    %5214 = vrot.lane.b32.xlu0 %v43, 48
    %v5215 = vpop.permute.xlu0 %5214
    %5216 = vrot.lane.b32.xlu0 %v44, 48
    %v5217 = vpop.permute.xlu0 %5216
    %5218 = vrot.lane.b32.xlu0 %v45, 48
    %v5219 = vpop.permute.xlu0 %5218
    %5220 = vrot.lane.b32.xlu0 %v46, 48
    %v5221 = vpop.permute.xlu0 %5220
    %5222 = vrot.lane.b32.xlu0 %v47, 48
    %v5223 = vpop.permute.xlu0 %5222
    %5224 = vrot.lane.b32.xlu0 %v48, 48
    %v5225 = vpop.permute.xlu0 %5224
    %5226 = vrot.lane.b32.xlu0 %v49, 48
    %v5227 = vpop.permute.xlu0 %5226
    %5228 = vrot.lane.b32.xlu0 %v50, 48
    %v5229 = vpop.permute.xlu0 %5228
    %5230 = vrot.lane.b32.xlu0 %v51, 48
    %v5231 = vpop.permute.xlu0 %5230
    %5232 = vrot.lane.b32.xlu0 %v52, 48
    %v5233 = vpop.permute.xlu0 %5232
    %5234 = vrot.lane.b32.xlu0 %v53, 48
    %v5235 = vpop.permute.xlu0 %5234
    %5236 = vrot.lane.b32.xlu0 %v54, 48
    %v5237 = vpop.permute.xlu0 %5236
    %vm5238 = vcmask 392192
    %v5239 = vsel %vm5238, %v5183, %v5185
    %v5240 = vsel %vm5238, %v5185, %v5187
    %v5241 = vsel %vm5238, %v5187, %v5189
    %v5242 = vsel %vm5238, %v5189, %v5191
    %v5243 = vsel %vm5238, %v5191, %v5193
    %v5244 = vsel %vm5238, %v5193, %v5195
    %v5245 = vsel %vm5238, %v5197, %v5199
    %v5246 = vsel %vm5238, %v5199, %v5201
    %v5247 = vsel %vm5238, %v5201, %v5203
    %v5248 = vsel %vm5238, %v5203, %v5205
    %v5249 = vsel %vm5238, %v5205, %v5207
    %v5250 = vsel %vm5238, %v5207, %v5209
    %v5251 = vsel %vm5238, %v5211, %v5213
    %v5252 = vsel %vm5238, %v5213, %v5215
    %v5253 = vsel %vm5238, %v5215, %v5217
    %v5254 = vsel %vm5238, %v5217, %v5219
    %v5255 = vsel %vm5238, %v5219, %v5221
    %v5256 = vsel %vm5238, %v5221, %v5223
    %v5257 = vsel %vm5238, %v5225, %v5227
    %v5258 = vsel %vm5238, %v5227, %v5229
    %v5259 = vsel %vm5238, %v5229, %v5231
    %v5260 = vsel %vm5238, %v5231, %v5233
    %v5261 = vsel %vm5238, %v5233, %v5235
    %v5262 = vsel %vm5238, %v5235, %v5237
    %v5292 = vsel %vm195, %v5181, 0
    %5294 = vmatpush.msra.mxu0 0.0
    %5295 = vmatpush.msra.mxu0 0.0
    %5296 = vmatpush.msra.mxu0 0.0
    %5297 = vmatpush.msra.mxu0 0.0
    %5298 = vmatpush.msra.mxu0 0.0
    %5299 = vmatpush.msra.mxu0 0.0
    %5300 = vmatpush.msra.mxu0 0.0
    %5301 = vmatpush.msra.mxu0 0.0
    %5302 = vmatpush.msra.mxu0 0.0
    %5303 = vmatpush.msra.mxu0 0.0
    %5304 = vmatpush.msra.mxu0 0.0
    %5305 = vmatpush.msra.mxu0 0.0
    %5306 = vmatpush.msra.mxu0 %v5257
    %5307 = vmatpush.msra.mxu0 %v5251
    %5308 = vmatpush.msra.mxu0 %v5245
    %5309 = vmatpush.msra.mxu0 %v5239
    %5310 = vmatmul.f32.gmra.mxu0 %v5292
    %v5311 = vpop.f32.mrf.mxu0
    %v5312 = vadd.f32 0.0, %v5311
    %5313 = vdwg.mxu0
    %5314 = vmatpush.msra.mxu0 0.0
    %5315 = vmatpush.msra.mxu0 0.0
    %5316 = vmatpush.msra.mxu0 0.0
    %5317 = vmatpush.msra.mxu0 0.0
    %5318 = vmatpush.msra.mxu0 0.0
    %5319 = vmatpush.msra.mxu0 0.0
    %5320 = vmatpush.msra.mxu0 0.0
    %5321 = vmatpush.msra.mxu0 0.0
    %5322 = vmatpush.msra.mxu0 0.0
    %5323 = vmatpush.msra.mxu0 0.0
    %5324 = vmatpush.msra.mxu0 0.0
    %5325 = vmatpush.msra.mxu0 0.0
    %5326 = vmatpush.msra.mxu0 %v5258
    %5327 = vmatpush.msra.mxu0 %v5252
    %5328 = vmatpush.msra.mxu0 %v5246
    %5329 = vmatpush.msra.mxu0 %v5240
    %5330 = vmatmul.f32.gmra.mxu0 %v5292
    %v5331 = vpop.f32.mrf.mxu0
    %v5332 = vadd.f32 0.0, %v5331
    %5333 = vdwg.mxu0
    %5334 = vmatpush.msra.mxu0 0.0
    %5335 = vmatpush.msra.mxu0 0.0
    %5336 = vmatpush.msra.mxu0 0.0
    %5337 = vmatpush.msra.mxu0 0.0
    %5338 = vmatpush.msra.mxu0 0.0
    %5339 = vmatpush.msra.mxu0 0.0
    %5340 = vmatpush.msra.mxu0 0.0
    %5341 = vmatpush.msra.mxu0 0.0
    %5342 = vmatpush.msra.mxu0 0.0
    %5343 = vmatpush.msra.mxu0 0.0
    %5344 = vmatpush.msra.mxu0 0.0
    %5345 = vmatpush.msra.mxu0 0.0
    %5346 = vmatpush.msra.mxu0 %v5259
    %5347 = vmatpush.msra.mxu0 %v5253
    %5348 = vmatpush.msra.mxu0 %v5247
    %5349 = vmatpush.msra.mxu0 %v5241
    %5350 = vmatmul.f32.gmra.mxu0 %v5292
    %v5351 = vpop.f32.mrf.mxu0
    %v5352 = vadd.f32 0.0, %v5351
    %5353 = vdwg.mxu0
    %5354 = vmatpush.msra.mxu0 0.0
    %5355 = vmatpush.msra.mxu0 0.0
    %5356 = vmatpush.msra.mxu0 0.0
    %5357 = vmatpush.msra.mxu0 0.0
    %5358 = vmatpush.msra.mxu0 0.0
    %5359 = vmatpush.msra.mxu0 0.0
    %5360 = vmatpush.msra.mxu0 0.0
    %5361 = vmatpush.msra.mxu0 0.0
    %5362 = vmatpush.msra.mxu0 0.0
    %5363 = vmatpush.msra.mxu0 0.0
    %5364 = vmatpush.msra.mxu0 0.0
    %5365 = vmatpush.msra.mxu0 0.0
    %5366 = vmatpush.msra.mxu0 %v5260
    %5367 = vmatpush.msra.mxu0 %v5254
    %5368 = vmatpush.msra.mxu0 %v5248
    %5369 = vmatpush.msra.mxu0 %v5242
    %5370 = vmatmul.f32.gmra.mxu0 %v5292
    %v5371 = vpop.f32.mrf.mxu0
    %v5372 = vadd.f32 0.0, %v5371
    %5373 = vdwg.mxu0
    %5374 = vmatpush.msra.mxu0 0.0
    %5375 = vmatpush.msra.mxu0 0.0
    %5376 = vmatpush.msra.mxu0 0.0
    %5377 = vmatpush.msra.mxu0 0.0
    %5378 = vmatpush.msra.mxu0 0.0
    %5379 = vmatpush.msra.mxu0 0.0
    %5380 = vmatpush.msra.mxu0 0.0
    %5381 = vmatpush.msra.mxu0 0.0
    %5382 = vmatpush.msra.mxu0 0.0
    %5383 = vmatpush.msra.mxu0 0.0
    %5384 = vmatpush.msra.mxu0 0.0
    %5385 = vmatpush.msra.mxu0 0.0
    %5386 = vmatpush.msra.mxu0 %v5261
    %5387 = vmatpush.msra.mxu0 %v5255
    %5388 = vmatpush.msra.mxu0 %v5249
    %5389 = vmatpush.msra.mxu0 %v5243
    %5390 = vmatmul.f32.gmra.mxu0 %v5292
    %v5391 = vpop.f32.mrf.mxu0
    %v5392 = vadd.f32 0.0, %v5391
    %5393 = vdwg.mxu0
    %5394 = vmatpush.msra.mxu0 0.0
    %5395 = vmatpush.msra.mxu0 0.0
    %5396 = vmatpush.msra.mxu0 0.0
    %5397 = vmatpush.msra.mxu0 0.0
    %5398 = vmatpush.msra.mxu0 0.0
    %5399 = vmatpush.msra.mxu0 0.0
    %5400 = vmatpush.msra.mxu0 0.0
    %5401 = vmatpush.msra.mxu0 0.0
    %5402 = vmatpush.msra.mxu0 0.0
    %5403 = vmatpush.msra.mxu0 0.0
    %5404 = vmatpush.msra.mxu0 0.0
    %5405 = vmatpush.msra.mxu0 0.0
    %5406 = vmatpush.msra.mxu0 %v5262
    %5407 = vmatpush.msra.mxu0 %v5256
    %5408 = vmatpush.msra.mxu0 %v5250
    %5409 = vmatpush.msra.mxu0 %v5244
    %5410 = vmatmul.f32.gmra.mxu0 %v5292
    %v5411 = vpop.f32.mrf.mxu0
    %v5412 = vadd.f32 0.0, %v5411
    %5413 = vdwg.mxu0
    %5414 = vmatpush.msra.mxu0 0.0
    %5415 = vmatpush.msra.mxu0 0.0
    %5416 = vmatpush.msra.mxu0 0.0
    %5417 = vmatpush.msra.mxu0 0.0
    %5418 = vmatpush.msra.mxu0 0.0
    %5419 = vmatpush.msra.mxu0 0.0
    %5420 = vmatpush.msra.mxu0 0.0
    %5421 = vmatpush.msra.mxu0 0.0
    %5422 = vmatpush.msra.mxu0 0.0
    %5423 = vmatpush.msra.mxu0 0.0
    %5424 = vmatpush.msra.mxu0 0.0
    %5425 = vmatpush.msra.mxu0 0.0
    %5426 = vmatpush.msra.mxu0 %v5237
    %5427 = vmatpush.msra.mxu0 %v5223
    %5428 = vmatpush.msra.mxu0 %v5209
    %5429 = vmatpush.msra.mxu0 %v5195
    %5430 = vmatmul.f32.gmra.mxu0 %v5292
    %v5431 = vpop.f32.mrf.mxu0
    %v5432 = vadd.f32 0.0, %v5431
    %5433 = vdwg.mxu0
    %v5434 = vadd.f32 %v5173, %v5312
    %v5435 = vadd.f32 %v5174, %v5332
    %v5436 = vadd.f32 %v5175, %v5352
    %v5437 = vadd.f32 %v5176, %v5372
    %v5438 = vadd.f32 %v5177, %v5392
    %v5439 = vadd.f32 %v5178, %v5412
    %v5440 = vadd.f32 %v5179, %v5432
    %s5441 = scalar_lea.vmem %s1, 42
    %v5442 = vld [vmem:[%s5441] sm:$0x3]
    %5443 = vrot.lane.b32.xlu0 %v27, 47
    %v5444 = vpop.permute.xlu0 %5443
    %5445 = vrot.lane.b32.xlu0 %v28, 47
    %v5446 = vpop.permute.xlu0 %5445
    %5447 = vrot.lane.b32.xlu0 %v29, 47
    %v5448 = vpop.permute.xlu0 %5447
    %5449 = vrot.lane.b32.xlu0 %v30, 47
    %v5450 = vpop.permute.xlu0 %5449
    %5451 = vrot.lane.b32.xlu0 %v31, 47
    %v5452 = vpop.permute.xlu0 %5451
    %5453 = vrot.lane.b32.xlu0 %v32, 47
    %v5454 = vpop.permute.xlu0 %5453
    %5455 = vrot.lane.b32.xlu0 %v33, 47
    %v5456 = vpop.permute.xlu0 %5455
    %5457 = vrot.lane.b32.xlu0 %v34, 47
    %v5458 = vpop.permute.xlu0 %5457
    %5459 = vrot.lane.b32.xlu0 %v35, 47
    %v5460 = vpop.permute.xlu0 %5459
    %5461 = vrot.lane.b32.xlu0 %v36, 47
    %v5462 = vpop.permute.xlu0 %5461
    %5463 = vrot.lane.b32.xlu0 %v37, 47
    %v5464 = vpop.permute.xlu0 %5463
    %5465 = vrot.lane.b32.xlu0 %v38, 47
    %v5466 = vpop.permute.xlu0 %5465
    %5467 = vrot.lane.b32.xlu0 %v39, 47
    %v5468 = vpop.permute.xlu0 %5467
    %5469 = vrot.lane.b32.xlu0 %v40, 47
    %v5470 = vpop.permute.xlu0 %5469
    %5471 = vrot.lane.b32.xlu0 %v41, 47
    %v5472 = vpop.permute.xlu0 %5471
    %5473 = vrot.lane.b32.xlu0 %v42, 47
    %v5474 = vpop.permute.xlu0 %5473
    %5475 = vrot.lane.b32.xlu0 %v43, 47
    %v5476 = vpop.permute.xlu0 %5475
    %5477 = vrot.lane.b32.xlu0 %v44, 47
    %v5478 = vpop.permute.xlu0 %5477
    %5479 = vrot.lane.b32.xlu0 %v45, 47
    %v5480 = vpop.permute.xlu0 %5479
    %5481 = vrot.lane.b32.xlu0 %v46, 47
    %v5482 = vpop.permute.xlu0 %5481
    %5483 = vrot.lane.b32.xlu0 %v47, 47
    %v5484 = vpop.permute.xlu0 %5483
    %5485 = vrot.lane.b32.xlu0 %v48, 47
    %v5486 = vpop.permute.xlu0 %5485
    %5487 = vrot.lane.b32.xlu0 %v49, 47
    %v5488 = vpop.permute.xlu0 %5487
    %5489 = vrot.lane.b32.xlu0 %v50, 47
    %v5490 = vpop.permute.xlu0 %5489
    %5491 = vrot.lane.b32.xlu0 %v51, 47
    %v5492 = vpop.permute.xlu0 %5491
    %5493 = vrot.lane.b32.xlu0 %v52, 47
    %v5494 = vpop.permute.xlu0 %5493
    %5495 = vrot.lane.b32.xlu0 %v53, 47
    %v5496 = vpop.permute.xlu0 %5495
    %5497 = vrot.lane.b32.xlu0 %v54, 47
    %v5498 = vpop.permute.xlu0 %5497
    %vm5499 = vcmask 384000
    %v5500 = vsel %vm5499, %v5444, %v5446
    %v5501 = vsel %vm5499, %v5446, %v5448
    %v5502 = vsel %vm5499, %v5448, %v5450
    %v5503 = vsel %vm5499, %v5450, %v5452
    %v5504 = vsel %vm5499, %v5452, %v5454
    %v5505 = vsel %vm5499, %v5454, %v5456
    %v5506 = vsel %vm5499, %v5458, %v5460
    %v5507 = vsel %vm5499, %v5460, %v5462
    %v5508 = vsel %vm5499, %v5462, %v5464
    %v5509 = vsel %vm5499, %v5464, %v5466
    %v5510 = vsel %vm5499, %v5466, %v5468
    %v5511 = vsel %vm5499, %v5468, %v5470
    %v5512 = vsel %vm5499, %v5472, %v5474
    %v5513 = vsel %vm5499, %v5474, %v5476
    %v5514 = vsel %vm5499, %v5476, %v5478
    %v5515 = vsel %vm5499, %v5478, %v5480
    %v5516 = vsel %vm5499, %v5480, %v5482
    %v5517 = vsel %vm5499, %v5482, %v5484
    %v5518 = vsel %vm5499, %v5486, %v5488
    %v5519 = vsel %vm5499, %v5488, %v5490
    %v5520 = vsel %vm5499, %v5490, %v5492
    %v5521 = vsel %vm5499, %v5492, %v5494
    %v5522 = vsel %vm5499, %v5494, %v5496
    %v5523 = vsel %vm5499, %v5496, %v5498
    %v5553 = vsel %vm195, %v5442, 0
    %5555 = vmatpush.msra.mxu0 0.0
    %5556 = vmatpush.msra.mxu0 0.0
    %5557 = vmatpush.msra.mxu0 0.0
    %5558 = vmatpush.msra.mxu0 0.0
    %5559 = vmatpush.msra.mxu0 0.0
    %5560 = vmatpush.msra.mxu0 0.0
    %5561 = vmatpush.msra.mxu0 0.0
    %5562 = vmatpush.msra.mxu0 0.0
    %5563 = vmatpush.msra.mxu0 0.0
    %5564 = vmatpush.msra.mxu0 0.0
    %5565 = vmatpush.msra.mxu0 0.0
    %5566 = vmatpush.msra.mxu0 0.0
    %5567 = vmatpush.msra.mxu0 %v5518
    %5568 = vmatpush.msra.mxu0 %v5512
    %5569 = vmatpush.msra.mxu0 %v5506
    %5570 = vmatpush.msra.mxu0 %v5500
    %5571 = vmatmul.f32.gmra.mxu0 %v5553
    %v5572 = vpop.f32.mrf.mxu0
    %v5573 = vadd.f32 0.0, %v5572
    %5574 = vdwg.mxu0
    %5575 = vmatpush.msra.mxu0 0.0
    %5576 = vmatpush.msra.mxu0 0.0
    %5577 = vmatpush.msra.mxu0 0.0
    %5578 = vmatpush.msra.mxu0 0.0
    %5579 = vmatpush.msra.mxu0 0.0
    %5580 = vmatpush.msra.mxu0 0.0
    %5581 = vmatpush.msra.mxu0 0.0
    %5582 = vmatpush.msra.mxu0 0.0
    %5583 = vmatpush.msra.mxu0 0.0
    %5584 = vmatpush.msra.mxu0 0.0
    %5585 = vmatpush.msra.mxu0 0.0
    %5586 = vmatpush.msra.mxu0 0.0
    %5587 = vmatpush.msra.mxu0 %v5519
    %5588 = vmatpush.msra.mxu0 %v5513
    %5589 = vmatpush.msra.mxu0 %v5507
    %5590 = vmatpush.msra.mxu0 %v5501
    %5591 = vmatmul.f32.gmra.mxu0 %v5553
    %v5592 = vpop.f32.mrf.mxu0
    %v5593 = vadd.f32 0.0, %v5592
    %5594 = vdwg.mxu0
    %5595 = vmatpush.msra.mxu0 0.0
    %5596 = vmatpush.msra.mxu0 0.0
    %5597 = vmatpush.msra.mxu0 0.0
    %5598 = vmatpush.msra.mxu0 0.0
    %5599 = vmatpush.msra.mxu0 0.0
    %5600 = vmatpush.msra.mxu0 0.0
    %5601 = vmatpush.msra.mxu0 0.0
    %5602 = vmatpush.msra.mxu0 0.0
    %5603 = vmatpush.msra.mxu0 0.0
    %5604 = vmatpush.msra.mxu0 0.0
    %5605 = vmatpush.msra.mxu0 0.0
    %5606 = vmatpush.msra.mxu0 0.0
    %5607 = vmatpush.msra.mxu0 %v5520
    %5608 = vmatpush.msra.mxu0 %v5514
    %5609 = vmatpush.msra.mxu0 %v5508
    %5610 = vmatpush.msra.mxu0 %v5502
    %5611 = vmatmul.f32.gmra.mxu0 %v5553
    %v5612 = vpop.f32.mrf.mxu0
    %v5613 = vadd.f32 0.0, %v5612
    %5614 = vdwg.mxu0
    %5615 = vmatpush.msra.mxu0 0.0
    %5616 = vmatpush.msra.mxu0 0.0
    %5617 = vmatpush.msra.mxu0 0.0
    %5618 = vmatpush.msra.mxu0 0.0
    %5619 = vmatpush.msra.mxu0 0.0
    %5620 = vmatpush.msra.mxu0 0.0
    %5621 = vmatpush.msra.mxu0 0.0
    %5622 = vmatpush.msra.mxu0 0.0
    %5623 = vmatpush.msra.mxu0 0.0
    %5624 = vmatpush.msra.mxu0 0.0
    %5625 = vmatpush.msra.mxu0 0.0
    %5626 = vmatpush.msra.mxu0 0.0
    %5627 = vmatpush.msra.mxu0 %v5521
    %5628 = vmatpush.msra.mxu0 %v5515
    %5629 = vmatpush.msra.mxu0 %v5509
    %5630 = vmatpush.msra.mxu0 %v5503
    %5631 = vmatmul.f32.gmra.mxu0 %v5553
    %v5632 = vpop.f32.mrf.mxu0
    %v5633 = vadd.f32 0.0, %v5632
    %5634 = vdwg.mxu0
    %5635 = vmatpush.msra.mxu0 0.0
    %5636 = vmatpush.msra.mxu0 0.0
    %5637 = vmatpush.msra.mxu0 0.0
    %5638 = vmatpush.msra.mxu0 0.0
    %5639 = vmatpush.msra.mxu0 0.0
    %5640 = vmatpush.msra.mxu0 0.0
    %5641 = vmatpush.msra.mxu0 0.0
    %5642 = vmatpush.msra.mxu0 0.0
    %5643 = vmatpush.msra.mxu0 0.0
    %5644 = vmatpush.msra.mxu0 0.0
    %5645 = vmatpush.msra.mxu0 0.0
    %5646 = vmatpush.msra.mxu0 0.0
    %5647 = vmatpush.msra.mxu0 %v5522
    %5648 = vmatpush.msra.mxu0 %v5516
    %5649 = vmatpush.msra.mxu0 %v5510
    %5650 = vmatpush.msra.mxu0 %v5504
    %5651 = vmatmul.f32.gmra.mxu0 %v5553
    %v5652 = vpop.f32.mrf.mxu0
    %v5653 = vadd.f32 0.0, %v5652
    %5654 = vdwg.mxu0
    %5655 = vmatpush.msra.mxu0 0.0
    %5656 = vmatpush.msra.mxu0 0.0
    %5657 = vmatpush.msra.mxu0 0.0
    %5658 = vmatpush.msra.mxu0 0.0
    %5659 = vmatpush.msra.mxu0 0.0
    %5660 = vmatpush.msra.mxu0 0.0
    %5661 = vmatpush.msra.mxu0 0.0
    %5662 = vmatpush.msra.mxu0 0.0
    %5663 = vmatpush.msra.mxu0 0.0
    %5664 = vmatpush.msra.mxu0 0.0
    %5665 = vmatpush.msra.mxu0 0.0
    %5666 = vmatpush.msra.mxu0 0.0
    %5667 = vmatpush.msra.mxu0 %v5523
    %5668 = vmatpush.msra.mxu0 %v5517
    %5669 = vmatpush.msra.mxu0 %v5511
    %5670 = vmatpush.msra.mxu0 %v5505
    %5671 = vmatmul.f32.gmra.mxu0 %v5553
    %v5672 = vpop.f32.mrf.mxu0
    %v5673 = vadd.f32 0.0, %v5672
    %5674 = vdwg.mxu0
    %5675 = vmatpush.msra.mxu0 0.0
    %5676 = vmatpush.msra.mxu0 0.0
    %5677 = vmatpush.msra.mxu0 0.0
    %5678 = vmatpush.msra.mxu0 0.0
    %5679 = vmatpush.msra.mxu0 0.0
    %5680 = vmatpush.msra.mxu0 0.0
    %5681 = vmatpush.msra.mxu0 0.0
    %5682 = vmatpush.msra.mxu0 0.0
    %5683 = vmatpush.msra.mxu0 0.0
    %5684 = vmatpush.msra.mxu0 0.0
    %5685 = vmatpush.msra.mxu0 0.0
    %5686 = vmatpush.msra.mxu0 0.0
    %5687 = vmatpush.msra.mxu0 %v5498
    %5688 = vmatpush.msra.mxu0 %v5484
    %5689 = vmatpush.msra.mxu0 %v5470
    %5690 = vmatpush.msra.mxu0 %v5456
    %5691 = vmatmul.f32.gmra.mxu0 %v5553
    %v5692 = vpop.f32.mrf.mxu0
    %v5693 = vadd.f32 0.0, %v5692
    %5694 = vdwg.mxu0
    %v5695 = vadd.f32 %v5434, %v5573
    %v5696 = vadd.f32 %v5435, %v5593
    %v5697 = vadd.f32 %v5436, %v5613
    %v5698 = vadd.f32 %v5437, %v5633
    %v5699 = vadd.f32 %v5438, %v5653
    %v5700 = vadd.f32 %v5439, %v5673
    %v5701 = vadd.f32 %v5440, %v5693
    %s5702 = scalar_lea.vmem %s1, 44
    %v5703 = vld [vmem:[%s5702] sm:$0x3]
    %5704 = vrot.lane.b32.xlu0 %v27, 46
    %v5705 = vpop.permute.xlu0 %5704
    %5706 = vrot.lane.b32.xlu0 %v28, 46
    %v5707 = vpop.permute.xlu0 %5706
    %5708 = vrot.lane.b32.xlu0 %v29, 46
    %v5709 = vpop.permute.xlu0 %5708
    %5710 = vrot.lane.b32.xlu0 %v30, 46
    %v5711 = vpop.permute.xlu0 %5710
    %5712 = vrot.lane.b32.xlu0 %v31, 46
    %v5713 = vpop.permute.xlu0 %5712
    %5714 = vrot.lane.b32.xlu0 %v32, 46
    %v5715 = vpop.permute.xlu0 %5714
    %5716 = vrot.lane.b32.xlu0 %v33, 46
    %v5717 = vpop.permute.xlu0 %5716
    %5718 = vrot.lane.b32.xlu0 %v34, 46
    %v5719 = vpop.permute.xlu0 %5718
    %5720 = vrot.lane.b32.xlu0 %v35, 46
    %v5721 = vpop.permute.xlu0 %5720
    %5722 = vrot.lane.b32.xlu0 %v36, 46
    %v5723 = vpop.permute.xlu0 %5722
    %5724 = vrot.lane.b32.xlu0 %v37, 46
    %v5725 = vpop.permute.xlu0 %5724
    %5726 = vrot.lane.b32.xlu0 %v38, 46
    %v5727 = vpop.permute.xlu0 %5726
    %5728 = vrot.lane.b32.xlu0 %v39, 46
    %v5729 = vpop.permute.xlu0 %5728
    %5730 = vrot.lane.b32.xlu0 %v40, 46
    %v5731 = vpop.permute.xlu0 %5730
    %5732 = vrot.lane.b32.xlu0 %v41, 46
    %v5733 = vpop.permute.xlu0 %5732
    %5734 = vrot.lane.b32.xlu0 %v42, 46
    %v5735 = vpop.permute.xlu0 %5734
    %5736 = vrot.lane.b32.xlu0 %v43, 46
    %v5737 = vpop.permute.xlu0 %5736
    %5738 = vrot.lane.b32.xlu0 %v44, 46
    %v5739 = vpop.permute.xlu0 %5738
    %5740 = vrot.lane.b32.xlu0 %v45, 46
    %v5741 = vpop.permute.xlu0 %5740
    %5742 = vrot.lane.b32.xlu0 %v46, 46
    %v5743 = vpop.permute.xlu0 %5742
    %5744 = vrot.lane.b32.xlu0 %v47, 46
    %v5745 = vpop.permute.xlu0 %5744
    %5746 = vrot.lane.b32.xlu0 %v48, 46
    %v5747 = vpop.permute.xlu0 %5746
    %5748 = vrot.lane.b32.xlu0 %v49, 46
    %v5749 = vpop.permute.xlu0 %5748
    %5750 = vrot.lane.b32.xlu0 %v50, 46
    %v5751 = vpop.permute.xlu0 %5750
    %5752 = vrot.lane.b32.xlu0 %v51, 46
    %v5753 = vpop.permute.xlu0 %5752
    %5754 = vrot.lane.b32.xlu0 %v52, 46
    %v5755 = vpop.permute.xlu0 %5754
    %5756 = vrot.lane.b32.xlu0 %v53, 46
    %v5757 = vpop.permute.xlu0 %5756
    %5758 = vrot.lane.b32.xlu0 %v54, 46
    %v5759 = vpop.permute.xlu0 %5758
    %vm5760 = vcmask 375808
    %v5761 = vsel %vm5760, %v5705, %v5707
    %v5762 = vsel %vm5760, %v5707, %v5709
    %v5763 = vsel %vm5760, %v5709, %v5711
    %v5764 = vsel %vm5760, %v5711, %v5713
    %v5765 = vsel %vm5760, %v5713, %v5715
    %v5766 = vsel %vm5760, %v5715, %v5717
    %v5767 = vsel %vm5760, %v5719, %v5721
    %v5768 = vsel %vm5760, %v5721, %v5723
    %v5769 = vsel %vm5760, %v5723, %v5725
    %v5770 = vsel %vm5760, %v5725, %v5727
    %v5771 = vsel %vm5760, %v5727, %v5729
    %v5772 = vsel %vm5760, %v5729, %v5731
    %v5773 = vsel %vm5760, %v5733, %v5735
    %v5774 = vsel %vm5760, %v5735, %v5737
    %v5775 = vsel %vm5760, %v5737, %v5739
    %v5776 = vsel %vm5760, %v5739, %v5741
    %v5777 = vsel %vm5760, %v5741, %v5743
    %v5778 = vsel %vm5760, %v5743, %v5745
    %v5779 = vsel %vm5760, %v5747, %v5749
    %v5780 = vsel %vm5760, %v5749, %v5751
    %v5781 = vsel %vm5760, %v5751, %v5753
    %v5782 = vsel %vm5760, %v5753, %v5755
    %v5783 = vsel %vm5760, %v5755, %v5757
    %v5784 = vsel %vm5760, %v5757, %v5759
    %v5814 = vsel %vm195, %v5703, 0
    %5816 = vmatpush.msra.mxu0 0.0
    %5817 = vmatpush.msra.mxu0 0.0
    %5818 = vmatpush.msra.mxu0 0.0
    %5819 = vmatpush.msra.mxu0 0.0
    %5820 = vmatpush.msra.mxu0 0.0
    %5821 = vmatpush.msra.mxu0 0.0
    %5822 = vmatpush.msra.mxu0 0.0
    %5823 = vmatpush.msra.mxu0 0.0
    %5824 = vmatpush.msra.mxu0 0.0
    %5825 = vmatpush.msra.mxu0 0.0
    %5826 = vmatpush.msra.mxu0 0.0
    %5827 = vmatpush.msra.mxu0 0.0
    %5828 = vmatpush.msra.mxu0 %v5779
    %5829 = vmatpush.msra.mxu0 %v5773
    %5830 = vmatpush.msra.mxu0 %v5767
    %5831 = vmatpush.msra.mxu0 %v5761
    %5832 = vmatmul.f32.gmra.mxu0 %v5814
    %v5833 = vpop.f32.mrf.mxu0
    %v5834 = vadd.f32 0.0, %v5833
    %5835 = vdwg.mxu0
    %5836 = vmatpush.msra.mxu0 0.0
    %5837 = vmatpush.msra.mxu0 0.0
    %5838 = vmatpush.msra.mxu0 0.0
    %5839 = vmatpush.msra.mxu0 0.0
    %5840 = vmatpush.msra.mxu0 0.0
    %5841 = vmatpush.msra.mxu0 0.0
    %5842 = vmatpush.msra.mxu0 0.0
    %5843 = vmatpush.msra.mxu0 0.0
    %5844 = vmatpush.msra.mxu0 0.0
    %5845 = vmatpush.msra.mxu0 0.0
    %5846 = vmatpush.msra.mxu0 0.0
    %5847 = vmatpush.msra.mxu0 0.0
    %5848 = vmatpush.msra.mxu0 %v5780
    %5849 = vmatpush.msra.mxu0 %v5774
    %5850 = vmatpush.msra.mxu0 %v5768
    %5851 = vmatpush.msra.mxu0 %v5762
    %5852 = vmatmul.f32.gmra.mxu0 %v5814
    %v5853 = vpop.f32.mrf.mxu0
    %v5854 = vadd.f32 0.0, %v5853
    %5855 = vdwg.mxu0
    %5856 = vmatpush.msra.mxu0 0.0
    %5857 = vmatpush.msra.mxu0 0.0
    %5858 = vmatpush.msra.mxu0 0.0
    %5859 = vmatpush.msra.mxu0 0.0
    %5860 = vmatpush.msra.mxu0 0.0
    %5861 = vmatpush.msra.mxu0 0.0
    %5862 = vmatpush.msra.mxu0 0.0
    %5863 = vmatpush.msra.mxu0 0.0
    %5864 = vmatpush.msra.mxu0 0.0
    %5865 = vmatpush.msra.mxu0 0.0
    %5866 = vmatpush.msra.mxu0 0.0
    %5867 = vmatpush.msra.mxu0 0.0
    %5868 = vmatpush.msra.mxu0 %v5781
    %5869 = vmatpush.msra.mxu0 %v5775
    %5870 = vmatpush.msra.mxu0 %v5769
    %5871 = vmatpush.msra.mxu0 %v5763
    %5872 = vmatmul.f32.gmra.mxu0 %v5814
    %v5873 = vpop.f32.mrf.mxu0
    %v5874 = vadd.f32 0.0, %v5873
    %5875 = vdwg.mxu0
    %5876 = vmatpush.msra.mxu0 0.0
    %5877 = vmatpush.msra.mxu0 0.0
    %5878 = vmatpush.msra.mxu0 0.0
    %5879 = vmatpush.msra.mxu0 0.0
    %5880 = vmatpush.msra.mxu0 0.0
    %5881 = vmatpush.msra.mxu0 0.0
    %5882 = vmatpush.msra.mxu0 0.0
    %5883 = vmatpush.msra.mxu0 0.0
    %5884 = vmatpush.msra.mxu0 0.0
    %5885 = vmatpush.msra.mxu0 0.0
    %5886 = vmatpush.msra.mxu0 0.0
    %5887 = vmatpush.msra.mxu0 0.0
    %5888 = vmatpush.msra.mxu0 %v5782
    %5889 = vmatpush.msra.mxu0 %v5776
    %5890 = vmatpush.msra.mxu0 %v5770
    %5891 = vmatpush.msra.mxu0 %v5764
    %5892 = vmatmul.f32.gmra.mxu0 %v5814
    %v5893 = vpop.f32.mrf.mxu0
    %v5894 = vadd.f32 0.0, %v5893
    %5895 = vdwg.mxu0
    %5896 = vmatpush.msra.mxu0 0.0
    %5897 = vmatpush.msra.mxu0 0.0
    %5898 = vmatpush.msra.mxu0 0.0
    %5899 = vmatpush.msra.mxu0 0.0
    %5900 = vmatpush.msra.mxu0 0.0
    %5901 = vmatpush.msra.mxu0 0.0
    %5902 = vmatpush.msra.mxu0 0.0
    %5903 = vmatpush.msra.mxu0 0.0
    %5904 = vmatpush.msra.mxu0 0.0
    %5905 = vmatpush.msra.mxu0 0.0
    %5906 = vmatpush.msra.mxu0 0.0
    %5907 = vmatpush.msra.mxu0 0.0
    %5908 = vmatpush.msra.mxu0 %v5783
    %5909 = vmatpush.msra.mxu0 %v5777
    %5910 = vmatpush.msra.mxu0 %v5771
    %5911 = vmatpush.msra.mxu0 %v5765
    %5912 = vmatmul.f32.gmra.mxu0 %v5814
    %v5913 = vpop.f32.mrf.mxu0
    %v5914 = vadd.f32 0.0, %v5913
    %5915 = vdwg.mxu0
    %5916 = vmatpush.msra.mxu0 0.0
    %5917 = vmatpush.msra.mxu0 0.0
    %5918 = vmatpush.msra.mxu0 0.0
    %5919 = vmatpush.msra.mxu0 0.0
    %5920 = vmatpush.msra.mxu0 0.0
    %5921 = vmatpush.msra.mxu0 0.0
    %5922 = vmatpush.msra.mxu0 0.0
    %5923 = vmatpush.msra.mxu0 0.0
    %5924 = vmatpush.msra.mxu0 0.0
    %5925 = vmatpush.msra.mxu0 0.0
    %5926 = vmatpush.msra.mxu0 0.0
    %5927 = vmatpush.msra.mxu0 0.0
    %5928 = vmatpush.msra.mxu0 %v5784
    %5929 = vmatpush.msra.mxu0 %v5778
    %5930 = vmatpush.msra.mxu0 %v5772
    %5931 = vmatpush.msra.mxu0 %v5766
    %5932 = vmatmul.f32.gmra.mxu0 %v5814
    %v5933 = vpop.f32.mrf.mxu0
    %v5934 = vadd.f32 0.0, %v5933
    %5935 = vdwg.mxu0
    %5936 = vmatpush.msra.mxu0 0.0
    %5937 = vmatpush.msra.mxu0 0.0
    %5938 = vmatpush.msra.mxu0 0.0
    %5939 = vmatpush.msra.mxu0 0.0
    %5940 = vmatpush.msra.mxu0 0.0
    %5941 = vmatpush.msra.mxu0 0.0
    %5942 = vmatpush.msra.mxu0 0.0
    %5943 = vmatpush.msra.mxu0 0.0
    %5944 = vmatpush.msra.mxu0 0.0
    %5945 = vmatpush.msra.mxu0 0.0
    %5946 = vmatpush.msra.mxu0 0.0
    %5947 = vmatpush.msra.mxu0 0.0
    %5948 = vmatpush.msra.mxu0 %v5759
    %5949 = vmatpush.msra.mxu0 %v5745
    %5950 = vmatpush.msra.mxu0 %v5731
    %5951 = vmatpush.msra.mxu0 %v5717
    %5952 = vmatmul.f32.gmra.mxu0 %v5814
    %v5953 = vpop.f32.mrf.mxu0
    %v5954 = vadd.f32 0.0, %v5953
    %5955 = vdwg.mxu0
    %v5956 = vadd.f32 %v5695, %v5834
    %v5957 = vadd.f32 %v5696, %v5854
    %v5958 = vadd.f32 %v5697, %v5874
    %v5959 = vadd.f32 %v5698, %v5894
    %v5960 = vadd.f32 %v5699, %v5914
    %v5961 = vadd.f32 %v5700, %v5934
    %v5962 = vadd.f32 %v5701, %v5954
    %s5963 = scalar_lea.vmem %s1, 46
    %v5964 = vld [vmem:[%s5963] sm:$0x3]
    %5965 = vrot.lane.b32.xlu0 %v27, 45
    %v5966 = vpop.permute.xlu0 %5965
    %5967 = vrot.lane.b32.xlu0 %v28, 45
    %v5968 = vpop.permute.xlu0 %5967
    %5969 = vrot.lane.b32.xlu0 %v29, 45
    %v5970 = vpop.permute.xlu0 %5969
    %5971 = vrot.lane.b32.xlu0 %v30, 45
    %v5972 = vpop.permute.xlu0 %5971
    %5973 = vrot.lane.b32.xlu0 %v31, 45
    %v5974 = vpop.permute.xlu0 %5973
    %5975 = vrot.lane.b32.xlu0 %v32, 45
    %v5976 = vpop.permute.xlu0 %5975
    %5977 = vrot.lane.b32.xlu0 %v33, 45
    %v5978 = vpop.permute.xlu0 %5977
    %5979 = vrot.lane.b32.xlu0 %v34, 45
    %v5980 = vpop.permute.xlu0 %5979
    %5981 = vrot.lane.b32.xlu0 %v35, 45
    %v5982 = vpop.permute.xlu0 %5981
    %5983 = vrot.lane.b32.xlu0 %v36, 45
    %v5984 = vpop.permute.xlu0 %5983
    %5985 = vrot.lane.b32.xlu0 %v37, 45
    %v5986 = vpop.permute.xlu0 %5985
    %5987 = vrot.lane.b32.xlu0 %v38, 45
    %v5988 = vpop.permute.xlu0 %5987
    %5989 = vrot.lane.b32.xlu0 %v39, 45
    %v5990 = vpop.permute.xlu0 %5989
    %5991 = vrot.lane.b32.xlu0 %v40, 45
    %v5992 = vpop.permute.xlu0 %5991
    %5993 = vrot.lane.b32.xlu0 %v41, 45
    %v5994 = vpop.permute.xlu0 %5993
    %5995 = vrot.lane.b32.xlu0 %v42, 45
    %v5996 = vpop.permute.xlu0 %5995
    %5997 = vrot.lane.b32.xlu0 %v43, 45
    %v5998 = vpop.permute.xlu0 %5997
    %5999 = vrot.lane.b32.xlu0 %v44, 45
    %v6000 = vpop.permute.xlu0 %5999
    %6001 = vrot.lane.b32.xlu0 %v45, 45
    %v6002 = vpop.permute.xlu0 %6001
    %6003 = vrot.lane.b32.xlu0 %v46, 45
    %v6004 = vpop.permute.xlu0 %6003
    %6005 = vrot.lane.b32.xlu0 %v47, 45
    %v6006 = vpop.permute.xlu0 %6005
    %6007 = vrot.lane.b32.xlu0 %v48, 45
    %v6008 = vpop.permute.xlu0 %6007
    %6009 = vrot.lane.b32.xlu0 %v49, 45
    %v6010 = vpop.permute.xlu0 %6009
    %6011 = vrot.lane.b32.xlu0 %v50, 45
    %v6012 = vpop.permute.xlu0 %6011
    %6013 = vrot.lane.b32.xlu0 %v51, 45
    %v6014 = vpop.permute.xlu0 %6013
    %6015 = vrot.lane.b32.xlu0 %v52, 45
    %v6016 = vpop.permute.xlu0 %6015
    %6017 = vrot.lane.b32.xlu0 %v53, 45
    %v6018 = vpop.permute.xlu0 %6017
    %6019 = vrot.lane.b32.xlu0 %v54, 45
    %v6020 = vpop.permute.xlu0 %6019
    %vm6021 = vcmask 367616
    %v6022 = vsel %vm6021, %v5966, %v5968
    %v6023 = vsel %vm6021, %v5968, %v5970
    %v6024 = vsel %vm6021, %v5970, %v5972
    %v6025 = vsel %vm6021, %v5972, %v5974
    %v6026 = vsel %vm6021, %v5974, %v5976
    %v6027 = vsel %vm6021, %v5976, %v5978
    %v6028 = vsel %vm6021, %v5980, %v5982
    %v6029 = vsel %vm6021, %v5982, %v5984
    %v6030 = vsel %vm6021, %v5984, %v5986
    %v6031 = vsel %vm6021, %v5986, %v5988
    %v6032 = vsel %vm6021, %v5988, %v5990
    %v6033 = vsel %vm6021, %v5990, %v5992
    %v6034 = vsel %vm6021, %v5994, %v5996
    %v6035 = vsel %vm6021, %v5996, %v5998
    %v6036 = vsel %vm6021, %v5998, %v6000
    %v6037 = vsel %vm6021, %v6000, %v6002
    %v6038 = vsel %vm6021, %v6002, %v6004
    %v6039 = vsel %vm6021, %v6004, %v6006
    %v6040 = vsel %vm6021, %v6008, %v6010
    %v6041 = vsel %vm6021, %v6010, %v6012
    %v6042 = vsel %vm6021, %v6012, %v6014
    %v6043 = vsel %vm6021, %v6014, %v6016
    %v6044 = vsel %vm6021, %v6016, %v6018
    %v6045 = vsel %vm6021, %v6018, %v6020
    %v6075 = vsel %vm195, %v5964, 0
    %6077 = vmatpush.msra.mxu0 0.0
    %6078 = vmatpush.msra.mxu0 0.0
    %6079 = vmatpush.msra.mxu0 0.0
    %6080 = vmatpush.msra.mxu0 0.0
    %6081 = vmatpush.msra.mxu0 0.0
    %6082 = vmatpush.msra.mxu0 0.0
    %6083 = vmatpush.msra.mxu0 0.0
    %6084 = vmatpush.msra.mxu0 0.0
    %6085 = vmatpush.msra.mxu0 0.0
    %6086 = vmatpush.msra.mxu0 0.0
    %6087 = vmatpush.msra.mxu0 0.0
    %6088 = vmatpush.msra.mxu0 0.0
    %6089 = vmatpush.msra.mxu0 %v6040
    %6090 = vmatpush.msra.mxu0 %v6034
    %6091 = vmatpush.msra.mxu0 %v6028
    %6092 = vmatpush.msra.mxu0 %v6022
    %6093 = vmatmul.f32.gmra.mxu0 %v6075
    %v6094 = vpop.f32.mrf.mxu0
    %v6095 = vadd.f32 0.0, %v6094
    %6096 = vdwg.mxu0
    %6097 = vmatpush.msra.mxu0 0.0
    %6098 = vmatpush.msra.mxu0 0.0
    %6099 = vmatpush.msra.mxu0 0.0
    %6100 = vmatpush.msra.mxu0 0.0
    %6101 = vmatpush.msra.mxu0 0.0
    %6102 = vmatpush.msra.mxu0 0.0
    %6103 = vmatpush.msra.mxu0 0.0
    %6104 = vmatpush.msra.mxu0 0.0
    %6105 = vmatpush.msra.mxu0 0.0
    %6106 = vmatpush.msra.mxu0 0.0
    %6107 = vmatpush.msra.mxu0 0.0
    %6108 = vmatpush.msra.mxu0 0.0
    %6109 = vmatpush.msra.mxu0 %v6041
    %6110 = vmatpush.msra.mxu0 %v6035
    %6111 = vmatpush.msra.mxu0 %v6029
    %6112 = vmatpush.msra.mxu0 %v6023
    %6113 = vmatmul.f32.gmra.mxu0 %v6075
    %v6114 = vpop.f32.mrf.mxu0
    %v6115 = vadd.f32 0.0, %v6114
    %6116 = vdwg.mxu0
    %6117 = vmatpush.msra.mxu0 0.0
    %6118 = vmatpush.msra.mxu0 0.0
    %6119 = vmatpush.msra.mxu0 0.0
    %6120 = vmatpush.msra.mxu0 0.0
    %6121 = vmatpush.msra.mxu0 0.0
    %6122 = vmatpush.msra.mxu0 0.0
    %6123 = vmatpush.msra.mxu0 0.0
    %6124 = vmatpush.msra.mxu0 0.0
    %6125 = vmatpush.msra.mxu0 0.0
    %6126 = vmatpush.msra.mxu0 0.0
    %6127 = vmatpush.msra.mxu0 0.0
    %6128 = vmatpush.msra.mxu0 0.0
    %6129 = vmatpush.msra.mxu0 %v6042
    %6130 = vmatpush.msra.mxu0 %v6036
    %6131 = vmatpush.msra.mxu0 %v6030
    %6132 = vmatpush.msra.mxu0 %v6024
    %6133 = vmatmul.f32.gmra.mxu0 %v6075
    %v6134 = vpop.f32.mrf.mxu0
    %v6135 = vadd.f32 0.0, %v6134
    %6136 = vdwg.mxu0
    %6137 = vmatpush.msra.mxu0 0.0
    %6138 = vmatpush.msra.mxu0 0.0
    %6139 = vmatpush.msra.mxu0 0.0
    %6140 = vmatpush.msra.mxu0 0.0
    %6141 = vmatpush.msra.mxu0 0.0
    %6142 = vmatpush.msra.mxu0 0.0
    %6143 = vmatpush.msra.mxu0 0.0
    %6144 = vmatpush.msra.mxu0 0.0
    %6145 = vmatpush.msra.mxu0 0.0
    %6146 = vmatpush.msra.mxu0 0.0
    %6147 = vmatpush.msra.mxu0 0.0
    %6148 = vmatpush.msra.mxu0 0.0
    %6149 = vmatpush.msra.mxu0 %v6043
    %6150 = vmatpush.msra.mxu0 %v6037
    %6151 = vmatpush.msra.mxu0 %v6031
    %6152 = vmatpush.msra.mxu0 %v6025
    %6153 = vmatmul.f32.gmra.mxu0 %v6075
    %v6154 = vpop.f32.mrf.mxu0
    %v6155 = vadd.f32 0.0, %v6154
    %6156 = vdwg.mxu0
    %6157 = vmatpush.msra.mxu0 0.0
    %6158 = vmatpush.msra.mxu0 0.0
    %6159 = vmatpush.msra.mxu0 0.0
    %6160 = vmatpush.msra.mxu0 0.0
    %6161 = vmatpush.msra.mxu0 0.0
    %6162 = vmatpush.msra.mxu0 0.0
    %6163 = vmatpush.msra.mxu0 0.0
    %6164 = vmatpush.msra.mxu0 0.0
    %6165 = vmatpush.msra.mxu0 0.0
    %6166 = vmatpush.msra.mxu0 0.0
    %6167 = vmatpush.msra.mxu0 0.0
    %6168 = vmatpush.msra.mxu0 0.0
    %6169 = vmatpush.msra.mxu0 %v6044
    %6170 = vmatpush.msra.mxu0 %v6038
    %6171 = vmatpush.msra.mxu0 %v6032
    %6172 = vmatpush.msra.mxu0 %v6026
    %6173 = vmatmul.f32.gmra.mxu0 %v6075
    %v6174 = vpop.f32.mrf.mxu0
    %v6175 = vadd.f32 0.0, %v6174
    %6176 = vdwg.mxu0
    %6177 = vmatpush.msra.mxu0 0.0
    %6178 = vmatpush.msra.mxu0 0.0
    %6179 = vmatpush.msra.mxu0 0.0
    %6180 = vmatpush.msra.mxu0 0.0
    %6181 = vmatpush.msra.mxu0 0.0
    %6182 = vmatpush.msra.mxu0 0.0
    %6183 = vmatpush.msra.mxu0 0.0
    %6184 = vmatpush.msra.mxu0 0.0
    %6185 = vmatpush.msra.mxu0 0.0
    %6186 = vmatpush.msra.mxu0 0.0
    %6187 = vmatpush.msra.mxu0 0.0
    %6188 = vmatpush.msra.mxu0 0.0
    %6189 = vmatpush.msra.mxu0 %v6045
    %6190 = vmatpush.msra.mxu0 %v6039
    %6191 = vmatpush.msra.mxu0 %v6033
    %6192 = vmatpush.msra.mxu0 %v6027
    %6193 = vmatmul.f32.gmra.mxu0 %v6075
    %v6194 = vpop.f32.mrf.mxu0
    %v6195 = vadd.f32 0.0, %v6194
    %6196 = vdwg.mxu0
    %6197 = vmatpush.msra.mxu0 0.0
    %6198 = vmatpush.msra.mxu0 0.0
    %6199 = vmatpush.msra.mxu0 0.0
    %6200 = vmatpush.msra.mxu0 0.0
    %6201 = vmatpush.msra.mxu0 0.0
    %6202 = vmatpush.msra.mxu0 0.0
    %6203 = vmatpush.msra.mxu0 0.0
    %6204 = vmatpush.msra.mxu0 0.0
    %6205 = vmatpush.msra.mxu0 0.0
    %6206 = vmatpush.msra.mxu0 0.0
    %6207 = vmatpush.msra.mxu0 0.0
    %6208 = vmatpush.msra.mxu0 0.0
    %6209 = vmatpush.msra.mxu0 %v6020
    %6210 = vmatpush.msra.mxu0 %v6006
    %6211 = vmatpush.msra.mxu0 %v5992
    %6212 = vmatpush.msra.mxu0 %v5978
    %6213 = vmatmul.f32.gmra.mxu0 %v6075
    %v6214 = vpop.f32.mrf.mxu0
    %v6215 = vadd.f32 0.0, %v6214
    %6216 = vdwg.mxu0
    %v6217 = vadd.f32 %v5956, %v6095
    %v6218 = vadd.f32 %v5957, %v6115
    %v6219 = vadd.f32 %v5958, %v6135
    %v6220 = vadd.f32 %v5959, %v6155
    %v6221 = vadd.f32 %v5960, %v6175
    %v6222 = vadd.f32 %v5961, %v6195
    %v6223 = vadd.f32 %v5962, %v6215
    %s6224 = scalar_lea.vmem %s1, 48
    %v6225 = vld [vmem:[%s6224] sm:$0x3]
    %6226 = vrot.lane.b32.xlu0 %v27, 44
    %v6227 = vpop.permute.xlu0 %6226
    %6228 = vrot.lane.b32.xlu0 %v28, 44
    %v6229 = vpop.permute.xlu0 %6228
    %6230 = vrot.lane.b32.xlu0 %v29, 44
    %v6231 = vpop.permute.xlu0 %6230
    %6232 = vrot.lane.b32.xlu0 %v30, 44
    %v6233 = vpop.permute.xlu0 %6232
    %6234 = vrot.lane.b32.xlu0 %v31, 44
    %v6235 = vpop.permute.xlu0 %6234
    %6236 = vrot.lane.b32.xlu0 %v32, 44
    %v6237 = vpop.permute.xlu0 %6236
    %6238 = vrot.lane.b32.xlu0 %v33, 44
    %v6239 = vpop.permute.xlu0 %6238
    %6240 = vrot.lane.b32.xlu0 %v34, 44
    %v6241 = vpop.permute.xlu0 %6240
    %6242 = vrot.lane.b32.xlu0 %v35, 44
    %v6243 = vpop.permute.xlu0 %6242
    %6244 = vrot.lane.b32.xlu0 %v36, 44
    %v6245 = vpop.permute.xlu0 %6244
    %6246 = vrot.lane.b32.xlu0 %v37, 44
    %v6247 = vpop.permute.xlu0 %6246
    %6248 = vrot.lane.b32.xlu0 %v38, 44
    %v6249 = vpop.permute.xlu0 %6248
    %6250 = vrot.lane.b32.xlu0 %v39, 44
    %v6251 = vpop.permute.xlu0 %6250
    %6252 = vrot.lane.b32.xlu0 %v40, 44
    %v6253 = vpop.permute.xlu0 %6252
    %6254 = vrot.lane.b32.xlu0 %v41, 44
    %v6255 = vpop.permute.xlu0 %6254
    %6256 = vrot.lane.b32.xlu0 %v42, 44
    %v6257 = vpop.permute.xlu0 %6256
    %6258 = vrot.lane.b32.xlu0 %v43, 44
    %v6259 = vpop.permute.xlu0 %6258
    %6260 = vrot.lane.b32.xlu0 %v44, 44
    %v6261 = vpop.permute.xlu0 %6260
    %6262 = vrot.lane.b32.xlu0 %v45, 44
    %v6263 = vpop.permute.xlu0 %6262
    %6264 = vrot.lane.b32.xlu0 %v46, 44
    %v6265 = vpop.permute.xlu0 %6264
    %6266 = vrot.lane.b32.xlu0 %v47, 44
    %v6267 = vpop.permute.xlu0 %6266
    %6268 = vrot.lane.b32.xlu0 %v48, 44
    %v6269 = vpop.permute.xlu0 %6268
    %6270 = vrot.lane.b32.xlu0 %v49, 44
    %v6271 = vpop.permute.xlu0 %6270
    %6272 = vrot.lane.b32.xlu0 %v50, 44
    %v6273 = vpop.permute.xlu0 %6272
    %6274 = vrot.lane.b32.xlu0 %v51, 44
    %v6275 = vpop.permute.xlu0 %6274
    %6276 = vrot.lane.b32.xlu0 %v52, 44
    %v6277 = vpop.permute.xlu0 %6276
    %6278 = vrot.lane.b32.xlu0 %v53, 44
    %v6279 = vpop.permute.xlu0 %6278
    %6280 = vrot.lane.b32.xlu0 %v54, 44
    %v6281 = vpop.permute.xlu0 %6280
    %vm6282 = vcmask 359424
    %v6283 = vsel %vm6282, %v6227, %v6229
    %v6284 = vsel %vm6282, %v6229, %v6231
    %v6285 = vsel %vm6282, %v6231, %v6233
    %v6286 = vsel %vm6282, %v6233, %v6235
    %v6287 = vsel %vm6282, %v6235, %v6237
    %v6288 = vsel %vm6282, %v6237, %v6239
    %v6289 = vsel %vm6282, %v6241, %v6243
    %v6290 = vsel %vm6282, %v6243, %v6245
    %v6291 = vsel %vm6282, %v6245, %v6247
    %v6292 = vsel %vm6282, %v6247, %v6249
    %v6293 = vsel %vm6282, %v6249, %v6251
    %v6294 = vsel %vm6282, %v6251, %v6253
    %v6295 = vsel %vm6282, %v6255, %v6257
    %v6296 = vsel %vm6282, %v6257, %v6259
    %v6297 = vsel %vm6282, %v6259, %v6261
    %v6298 = vsel %vm6282, %v6261, %v6263
    %v6299 = vsel %vm6282, %v6263, %v6265
    %v6300 = vsel %vm6282, %v6265, %v6267
    %v6301 = vsel %vm6282, %v6269, %v6271
    %v6302 = vsel %vm6282, %v6271, %v6273
    %v6303 = vsel %vm6282, %v6273, %v6275
    %v6304 = vsel %vm6282, %v6275, %v6277
    %v6305 = vsel %vm6282, %v6277, %v6279
    %v6306 = vsel %vm6282, %v6279, %v6281
    %v6336 = vsel %vm195, %v6225, 0
    %6338 = vmatpush.msra.mxu0 0.0
    %6339 = vmatpush.msra.mxu0 0.0
    %6340 = vmatpush.msra.mxu0 0.0
    %6341 = vmatpush.msra.mxu0 0.0
    %6342 = vmatpush.msra.mxu0 0.0
    %6343 = vmatpush.msra.mxu0 0.0
    %6344 = vmatpush.msra.mxu0 0.0
    %6345 = vmatpush.msra.mxu0 0.0
    %6346 = vmatpush.msra.mxu0 0.0
    %6347 = vmatpush.msra.mxu0 0.0
    %6348 = vmatpush.msra.mxu0 0.0
    %6349 = vmatpush.msra.mxu0 0.0
    %6350 = vmatpush.msra.mxu0 %v6301
    %6351 = vmatpush.msra.mxu0 %v6295
    %6352 = vmatpush.msra.mxu0 %v6289
    %6353 = vmatpush.msra.mxu0 %v6283
    %6354 = vmatmul.f32.gmra.mxu0 %v6336
    %v6355 = vpop.f32.mrf.mxu0
    %v6356 = vadd.f32 0.0, %v6355
    %6357 = vdwg.mxu0
    %6358 = vmatpush.msra.mxu0 0.0
    %6359 = vmatpush.msra.mxu0 0.0
    %6360 = vmatpush.msra.mxu0 0.0
    %6361 = vmatpush.msra.mxu0 0.0
    %6362 = vmatpush.msra.mxu0 0.0
    %6363 = vmatpush.msra.mxu0 0.0
    %6364 = vmatpush.msra.mxu0 0.0
    %6365 = vmatpush.msra.mxu0 0.0
    %6366 = vmatpush.msra.mxu0 0.0
    %6367 = vmatpush.msra.mxu0 0.0
    %6368 = vmatpush.msra.mxu0 0.0
    %6369 = vmatpush.msra.mxu0 0.0
    %6370 = vmatpush.msra.mxu0 %v6302
    %6371 = vmatpush.msra.mxu0 %v6296
    %6372 = vmatpush.msra.mxu0 %v6290
    %6373 = vmatpush.msra.mxu0 %v6284
    %6374 = vmatmul.f32.gmra.mxu0 %v6336
    %v6375 = vpop.f32.mrf.mxu0
    %v6376 = vadd.f32 0.0, %v6375
    %6377 = vdwg.mxu0
    %6378 = vmatpush.msra.mxu0 0.0
    %6379 = vmatpush.msra.mxu0 0.0
    %6380 = vmatpush.msra.mxu0 0.0
    %6381 = vmatpush.msra.mxu0 0.0
    %6382 = vmatpush.msra.mxu0 0.0
    %6383 = vmatpush.msra.mxu0 0.0
    %6384 = vmatpush.msra.mxu0 0.0
    %6385 = vmatpush.msra.mxu0 0.0
    %6386 = vmatpush.msra.mxu0 0.0
    %6387 = vmatpush.msra.mxu0 0.0
    %6388 = vmatpush.msra.mxu0 0.0
    %6389 = vmatpush.msra.mxu0 0.0
    %6390 = vmatpush.msra.mxu0 %v6303
    %6391 = vmatpush.msra.mxu0 %v6297
    %6392 = vmatpush.msra.mxu0 %v6291
    %6393 = vmatpush.msra.mxu0 %v6285
    %6394 = vmatmul.f32.gmra.mxu0 %v6336
    %v6395 = vpop.f32.mrf.mxu0
    %v6396 = vadd.f32 0.0, %v6395
    %6397 = vdwg.mxu0
    %6398 = vmatpush.msra.mxu0 0.0
    %6399 = vmatpush.msra.mxu0 0.0
    %6400 = vmatpush.msra.mxu0 0.0
    %6401 = vmatpush.msra.mxu0 0.0
    %6402 = vmatpush.msra.mxu0 0.0
    %6403 = vmatpush.msra.mxu0 0.0
    %6404 = vmatpush.msra.mxu0 0.0
    %6405 = vmatpush.msra.mxu0 0.0
    %6406 = vmatpush.msra.mxu0 0.0
    %6407 = vmatpush.msra.mxu0 0.0
    %6408 = vmatpush.msra.mxu0 0.0
    %6409 = vmatpush.msra.mxu0 0.0
    %6410 = vmatpush.msra.mxu0 %v6304
    %6411 = vmatpush.msra.mxu0 %v6298
    %6412 = vmatpush.msra.mxu0 %v6292
    %6413 = vmatpush.msra.mxu0 %v6286
    %6414 = vmatmul.f32.gmra.mxu0 %v6336
    %v6415 = vpop.f32.mrf.mxu0
    %v6416 = vadd.f32 0.0, %v6415
    %6417 = vdwg.mxu0
    %6418 = vmatpush.msra.mxu0 0.0
    %6419 = vmatpush.msra.mxu0 0.0
    %6420 = vmatpush.msra.mxu0 0.0
    %6421 = vmatpush.msra.mxu0 0.0
    %6422 = vmatpush.msra.mxu0 0.0
    %6423 = vmatpush.msra.mxu0 0.0
    %6424 = vmatpush.msra.mxu0 0.0
    %6425 = vmatpush.msra.mxu0 0.0
    %6426 = vmatpush.msra.mxu0 0.0
    %6427 = vmatpush.msra.mxu0 0.0
    %6428 = vmatpush.msra.mxu0 0.0
    %6429 = vmatpush.msra.mxu0 0.0
    %6430 = vmatpush.msra.mxu0 %v6305
    %6431 = vmatpush.msra.mxu0 %v6299
    %6432 = vmatpush.msra.mxu0 %v6293
    %6433 = vmatpush.msra.mxu0 %v6287
    %6434 = vmatmul.f32.gmra.mxu0 %v6336
    %v6435 = vpop.f32.mrf.mxu0
    %v6436 = vadd.f32 0.0, %v6435
    %6437 = vdwg.mxu0
    %6438 = vmatpush.msra.mxu0 0.0
    %6439 = vmatpush.msra.mxu0 0.0
    %6440 = vmatpush.msra.mxu0 0.0
    %6441 = vmatpush.msra.mxu0 0.0
    %6442 = vmatpush.msra.mxu0 0.0
    %6443 = vmatpush.msra.mxu0 0.0
    %6444 = vmatpush.msra.mxu0 0.0
    %6445 = vmatpush.msra.mxu0 0.0
    %6446 = vmatpush.msra.mxu0 0.0
    %6447 = vmatpush.msra.mxu0 0.0
    %6448 = vmatpush.msra.mxu0 0.0
    %6449 = vmatpush.msra.mxu0 0.0
    %6450 = vmatpush.msra.mxu0 %v6306
    %6451 = vmatpush.msra.mxu0 %v6300
    %6452 = vmatpush.msra.mxu0 %v6294
    %6453 = vmatpush.msra.mxu0 %v6288
    %6454 = vmatmul.f32.gmra.mxu0 %v6336
    %v6455 = vpop.f32.mrf.mxu0
    %v6456 = vadd.f32 0.0, %v6455
    %6457 = vdwg.mxu0
    %6458 = vmatpush.msra.mxu0 0.0
    %6459 = vmatpush.msra.mxu0 0.0
    %6460 = vmatpush.msra.mxu0 0.0
    %6461 = vmatpush.msra.mxu0 0.0
    %6462 = vmatpush.msra.mxu0 0.0
    %6463 = vmatpush.msra.mxu0 0.0
    %6464 = vmatpush.msra.mxu0 0.0
    %6465 = vmatpush.msra.mxu0 0.0
    %6466 = vmatpush.msra.mxu0 0.0
    %6467 = vmatpush.msra.mxu0 0.0
    %6468 = vmatpush.msra.mxu0 0.0
    %6469 = vmatpush.msra.mxu0 0.0
    %6470 = vmatpush.msra.mxu0 %v6281
    %6471 = vmatpush.msra.mxu0 %v6267
    %6472 = vmatpush.msra.mxu0 %v6253
    %6473 = vmatpush.msra.mxu0 %v6239
    %6474 = vmatmul.f32.gmra.mxu0 %v6336
    %v6475 = vpop.f32.mrf.mxu0
    %v6476 = vadd.f32 0.0, %v6475
    %6477 = vdwg.mxu0
    %v6478 = vadd.f32 %v6217, %v6356
    %v6479 = vadd.f32 %v6218, %v6376
    %v6480 = vadd.f32 %v6219, %v6396
    %v6481 = vadd.f32 %v6220, %v6416
    %v6482 = vadd.f32 %v6221, %v6436
    %v6483 = vadd.f32 %v6222, %v6456
    %v6484 = vadd.f32 %v6223, %v6476
    %v6485 = vlaneseq
    %v6486 = vshrl.u32 %v6485, 7
    %vm6487 = vcmp.eq.s32.totalorder %v6486, 0
    %s6488 = sld [smem:[#allocation2]]
    %s6489 = sld [smem:[#allocation2 + $0x1]]
    %v6490 = vstv %s6488
    %v6491 = vstv %s6489
    %v6492 = vsel %vm6487, %v6490, %v6491
    %v6493 = vadd.f32 %v6478, %v6492
    %v6494 = vadd.f32 %v6479, %v6492
    %v6495 = vadd.f32 %v6480, %v6492
    %v6496 = vadd.f32 %v6481, %v6492
    %v6497 = vadd.f32 %v6482, %v6492
    %v6498 = vadd.f32 %v6483, %v6492
    %v6499 = vadd.f32 %v6484, %v6492
    %vm6500 = vcmp.gt.f32.partialorder %v6493, 20.0
    %vm6501 = vcmp.gt.f32.partialorder %v6494, 20.0
    %vm6502 = vcmp.gt.f32.partialorder %v6495, 20.0
    %vm6503 = vcmp.gt.f32.partialorder %v6496, 20.0
    %vm6504 = vcmp.gt.f32.partialorder %v6497, 20.0
    %vm6505 = vcmp.gt.f32.partialorder %v6498, 20.0
    %vm6506 = vcmp.gt.f32.partialorder %v6499, 20.0
    %v6507 = vmin.f32 %v6493, 20.0
    %v6508 = vmin.f32 %v6494, 20.0
    %v6509 = vmin.f32 %v6495, 20.0
    %v6510 = vmin.f32 %v6496, 20.0
    %v6511 = vmin.f32 %v6497, 20.0
    %v6512 = vmin.f32 %v6498, 20.0
    %v6513 = vmin.f32 %v6499, 20.0
    %v6514 = vmul.f32 %v6507, 1.442695
    %v6515 = vpow.pop %v6514
    %v6516 = vmul.f32 %v6508, 1.442695
    %v6517 = vpow.pop %v6516
    %v6518 = vmul.f32 %v6509, 1.442695
    %v6519 = vpow.pop %v6518
    %v6520 = vmul.f32 %v6510, 1.442695
    %v6521 = vpow.pop %v6520
    %v6522 = vmul.f32 %v6511, 1.442695
    %v6523 = vpow.pop %v6522
    %v6524 = vmul.f32 %v6512, 1.442695
    %v6525 = vpow.pop %v6524
    %v6526 = vmul.f32 %v6513, 1.442695
    %v6527 = vpow.pop %v6526
    %v6528 = vadd.f32 %v6515, 1.0
    %v6529 = vlog2.pop %v6528
    %v6530 = vmul.f32 %v6529, 0.6931472
    %v6531 = vmul.f32 -0.5, %v6515
    %v6532 = vadd.f32 %v6531, 1.0
    %v6533 = vmul.f32 %v6532, %v6515
    %v6534 = vand.u32 2147483647, %v6515
    %vm6535 = vcmp.lt.f32.partialorder %v6534, 0.0004427343
    %v6536 = vsel %vm6535, %v6533, %v6530
    %v6537 = vadd.f32 %v6517, 1.0
    %v6538 = vlog2.pop %v6537
    %v6539 = vmul.f32 %v6538, 0.6931472
    %v6540 = vmul.f32 -0.5, %v6517
    %v6541 = vadd.f32 %v6540, 1.0
    %v6542 = vmul.f32 %v6541, %v6517
    %v6543 = vand.u32 2147483647, %v6517
    %vm6544 = vcmp.lt.f32.partialorder %v6543, 0.0004427343
    %v6545 = vsel %vm6544, %v6542, %v6539
    %v6546 = vadd.f32 %v6519, 1.0
    %v6547 = vlog2.pop %v6546
    %v6548 = vmul.f32 %v6547, 0.6931472
    %v6549 = vmul.f32 -0.5, %v6519
    %v6550 = vadd.f32 %v6549, 1.0
    %v6551 = vmul.f32 %v6550, %v6519
    %v6552 = vand.u32 2147483647, %v6519
    %vm6553 = vcmp.lt.f32.partialorder %v6552, 0.0004427343
    %v6554 = vsel %vm6553, %v6551, %v6548
    %v6555 = vadd.f32 %v6521, 1.0
    %v6556 = vlog2.pop %v6555
    %v6557 = vmul.f32 %v6556, 0.6931472
    %v6558 = vmul.f32 -0.5, %v6521
    %v6559 = vadd.f32 %v6558, 1.0
    %v6560 = vmul.f32 %v6559, %v6521
    %v6561 = vand.u32 2147483647, %v6521
    %vm6562 = vcmp.lt.f32.partialorder %v6561, 0.0004427343
    %v6563 = vsel %vm6562, %v6560, %v6557
    %v6564 = vadd.f32 %v6523, 1.0
    %v6565 = vlog2.pop %v6564
    %v6566 = vmul.f32 %v6565, 0.6931472
    %v6567 = vmul.f32 -0.5, %v6523
    %v6568 = vadd.f32 %v6567, 1.0
    %v6569 = vmul.f32 %v6568, %v6523
    %v6570 = vand.u32 2147483647, %v6523
    %vm6571 = vcmp.lt.f32.partialorder %v6570, 0.0004427343
    %v6572 = vsel %vm6571, %v6569, %v6566
    %v6573 = vadd.f32 %v6525, 1.0
    %v6574 = vlog2.pop %v6573
    %v6575 = vmul.f32 %v6574, 0.6931472
    %v6576 = vmul.f32 -0.5, %v6525
    %v6577 = vadd.f32 %v6576, 1.0
    %v6578 = vmul.f32 %v6577, %v6525
    %v6579 = vand.u32 2147483647, %v6525
    %vm6580 = vcmp.lt.f32.partialorder %v6579, 0.0004427343
    %v6581 = vsel %vm6580, %v6578, %v6575
    %v6582 = vadd.f32 %v6527, 1.0
    %v6583 = vlog2.pop %v6582
    %v6584 = vmul.f32 %v6583, 0.6931472
    %v6585 = vmul.f32 -0.5, %v6527
    %v6586 = vadd.f32 %v6585, 1.0
    %v6587 = vmul.f32 %v6586, %v6527
    %v6588 = vand.u32 2147483647, %v6527
    %vm6589 = vcmp.lt.f32.partialorder %v6588, 0.0004427343
    %v6590 = vsel %vm6589, %v6587, %v6584
    %v6591 = vsel %vm6500, %v6493, %v6536
    %v6592 = vsel %vm6501, %v6494, %v6545
    %v6593 = vsel %vm6502, %v6495, %v6554
    %v6594 = vsel %vm6503, %v6496, %v6563
    %v6595 = vsel %vm6504, %v6497, %v6572
    %v6596 = vsel %vm6505, %v6498, %v6581
    %v6597 = vsel %vm6506, %v6499, %v6590
    %v6605 = vrot.slane %v6592, 6
    %v6606 = vrot.slane %v6593, 4
    %v6607 = vrot.slane %v6594, 2
    %v6608 = vrot.slane %v6596, 6
    %v6609 = vrot.slane %v6597, 4
    %vm6610 = vcmask 1041408
    %v6611 = vsel %vm6610, %v6591, %v6605
    %vm6612 = vcmask 1045508
    %v6613 = vsel %vm6612, %v6606, %v6607
    %vm6614 = vcmask 1043456
    %v6615 = vsel %vm6614, %v6611, %v6613
    %v6616 = vsel %vm6610, %v6595, %v6608
    %v6617 = vsel %vm6614, %v6616, %v6609
    %6620 = vst [vmem:[%s3] sm:$0xff] %v6615
    %vm6621 = vcmask 1043458
    %vm6622 = vmor %vm6621, %vm6610
    %vm6623 = vcmask 259076
    %vm6624 = vmor %vm6623, %vm6622
    %6625 = vst.msk [vmem:[%s3 + $0x8] sm:$0x3f] %vm6624, %v6617
    // Predicated region
    $region18: #{simplenet_forward.1} parent=1 // pred_check
      _
    $region19: #{simplenet_forward.1} parent=1 // pred_check_branch
      %6627 = sbr.rel (0) target = $region21
    $region20: #{simplenet_forward.1} parent=1 // pred_region
      _
    $region21: #{simplenet_forward.1} parent=1 // pred_fallthru
      _
    // Predicated region
    $region22: #{simplenet_forward.1} parent=1 // pred_check
      _
    $region23: #{simplenet_forward.1} parent=1 // pred_check_branch
      %6629 = sbr.rel (0) target = $region25
    $region24: #{simplenet_forward.1} parent=1 // pred_region
      _
    $region25: #{simplenet_forward.1} parent=1 // pred_fallthru
      _
    %6630 = vsyncpa [#allocation3], 1

</llo_original>
